<compile_context>
chip_gen: v7x
topology: tpu7x:2x2x1
jax: 0.10.0
libtpu: 0.0.40
codegen_flags: <defaults>
</compile_context>

<pallas_src>
import functools
import math

import jax
import jax.numpy as jnp
from jax.experimental import pallas as pl
from jax.experimental.pallas import tpu as pltpu


# ----------------------------- in-kernel helpers -----------------------------

def _layernorm(x, g, b, eps=1e-5):
    mu = jnp.mean(x, axis=-1, keepdims=True)
    var = jnp.mean(jnp.square(x - mu), axis=-1, keepdims=True)
    return (x - mu) * jax.lax.rsqrt(var + eps) * g + b


def _softmax(x):
    m = jnp.max(x, axis=-1, keepdims=True)
    e = jnp.exp(x - m)
    s = jnp.sum(e, axis=-1, keepdims=True)
    return e * pl.reciprocal(s, approx=True)


# ----------------------------- fused ViT kernel -----------------------------

def _vit_block_kernel(T, Tp, heads, d_head, num_blocks,
                      patches_ref, w_emb_ref, cls_ref, pos_ref,
                      ln1g_ref, ln1b_ref, wqkv_ref, bqkv_ref, wo_ref, bo_ref,
                      ln2g_ref, ln2b_ref, w1_ref, b1_ref, w2_ref, b2_ref,
                      normg_ref, normb_ref, wcls_ref,
                      o_ref, x_ref):
    """Grid = (batch, encoder_block). Processes one encoder block of one batch."""
    D = heads * d_head
    blk = pl.program_id(1)
    bf16 = jnp.bfloat16
    scale = 1.0 / math.sqrt(d_head)

    # ---- prologue (blk == 0): patch embed + cls + sinusoidal pos ----
    @pl.when(blk == 0)
    def _():
        emb = jnp.dot(patches_ref[...], w_emb_ref[...],
                      preferred_element_type=jnp.float32)              # (P, D)
        x0 = jnp.concatenate(
            [cls_ref[...], emb, jnp.zeros((Tp - T, D), jnp.float32)], axis=0)
        x_ref[...] = x0 + pos_ref[...]                                 # (Tp, D)
        # dropout: identity (eval mode)

    # ---- encoder block `blk` (this block's weights streamed via BlockSpecs) ----
    x = x_ref[...]                                                     # (Tp, D) f32

    # --- multi-head self-attention (pre-norm) ---
    h = _layernorm(x, ln1g_ref[...], ln1b_ref[...])
    qkv = jnp.dot(h.astype(bf16), wqkv_ref[...],
                  preferred_element_type=jnp.float32) + bqkv_ref[...]  # (Tp, 128)
    # cast once per block; fold attention scale into q
    q = (qkv[:, 0:D] * scale).astype(bf16)
    k = qkv[:, D:2 * D].astype(bf16)
    v = qkv[:, 2 * D:3 * D].astype(bf16)
    wo = wo_ref[...]                                                   # (D, D) bf16

    # key mask: -1e30 on padded key positions T..Tp-1 (finite, avoids NaN)
    key_ok = jax.lax.broadcasted_iota(jnp.int32, (1, Tp), 1) < T
    mask = jnp.where(key_ok, 0.0, -1e30).astype(jnp.float32)           # (1, Tp)

    acc = jnp.zeros((Tp, D), jnp.float32)
    for hh in range(heads):                                            # static (8)
        sl = slice(hh * d_head, (hh + 1) * d_head)
        # q @ k^T without materializing a transpose (contract last dims of both)
        s = jax.lax.dot_general(q[:, sl], k[:, sl],
                                (((1,), (1,)), ((), ())),
                                preferred_element_type=jnp.float32)    # (Tp, Tp)
        p = _softmax(s + mask)
        oh = jnp.dot(p.astype(bf16), v[:, sl],
                     preferred_element_type=jnp.float32)               # (Tp, dh)
        # project through this head's slice of W_o and accumulate (no lane concat)
        acc = acc + jnp.dot(oh.astype(bf16), wo[sl, :],
                            preferred_element_type=jnp.float32)        # (Tp, D)
    x = x + acc + bo_ref[...]

    # --- MLP (pre-norm, ReLU) ---
    h2 = _layernorm(x, ln2g_ref[...], ln2b_ref[...])
    hid = jnp.dot(h2.astype(bf16), w1_ref[...],
                  preferred_element_type=jnp.float32) + b1_ref[...]
    hid = jnp.maximum(hid, 0.0)
    mlp = jnp.dot(hid.astype(bf16), w2_ref[...],
                  preferred_element_type=jnp.float32) + b2_ref[...]
    x = x + mlp
    x_ref[...] = x                                                     # persist

    # ---- epilogue (last block): final LayerNorm + classifier on cls token ----
    @pl.when(blk == num_blocks - 1)
    def _():
        hc = _layernorm(x[0:1, :], normg_ref[...], normb_ref[...])     # (1, D)
        z = jnp.dot(hc.astype(bf16), wcls_ref[...],
                    preferred_element_type=jnp.float32)                # (1, Cpad)
        # lane-dense, sublane-aligned output tile (row 0 holds the logits)
        o_ref[...] = jnp.concatenate(
            [z, jnp.zeros((o_ref.shape[0] - 1, z.shape[1]), jnp.float32)], axis=0)


# ----------------------------- model glue -----------------------------

def sincos_pos(max_context, d):
    pos = jnp.arange(max_context, dtype=jnp.float32)[:, None]
    i = jnp.arange(d // 2, dtype=jnp.float32)[None, :]
    angle = pos / jnp.power(10000.0, 2.0 * i / d)
    pe = jnp.zeros((max_context, d), dtype=jnp.float32)
    pe = pe.at[:, 0::2].set(jnp.sin(angle))
    pe = pe.at[:, 1::2].set(jnp.cos(angle))
    return pe


def init_params(key, *, channels, patch_size, heads, d_head, num_blocks,
                exp_factor, classes, max_context):
    d = heads * d_head
    std = 0.02
    n_keys = 5 + num_blocks * 6
    keys = iter(jax.random.split(key, n_keys))

    params = {}
    params['w_emb'] = std * jax.random.normal(
        next(keys), (channels * patch_size * patch_size, d), jnp.float32)
    # matches torch.nn.Parameter(torch.randn(d)) -> std = 1.0
    params['cls'] = jax.random.normal(next(keys), (d,), jnp.float32)
    params['pos'] = sincos_pos(max_context, d)

    blocks = []
    for _ in range(num_blocks):
        bp = {
            'ln1_g': jnp.ones((1, d), jnp.float32),
            'ln1_b': jnp.zeros((1, d), jnp.float32),
            'wqkv': std * jax.random.normal(next(keys), (d, 3 * d), jnp.float32),
            'bqkv': jnp.zeros((1, 3 * d), jnp.float32),
            'wo': std * jax.random.normal(next(keys), (d, d), jnp.float32),
            'bo': jnp.zeros((1, d), jnp.float32),
            'ln2_g': jnp.ones((1, d), jnp.float32),
            'ln2_b': jnp.zeros((1, d), jnp.float32),
            'w1': std * jax.random.normal(next(keys), (d, exp_factor * d), jnp.float32),
            'b1': jnp.zeros((1, exp_factor * d), jnp.float32),
            'w2': std * jax.random.normal(next(keys), (exp_factor * d, d), jnp.float32),
            'b2': jnp.zeros((1, d), jnp.float32),
        }
        next(keys), next(keys)   # burn two keys; keeps key count simple
        blocks.append(bp)
    params['blocks'] = blocks

    params['norm_g'] = jnp.ones((1, d), jnp.float32)
    params['norm_b'] = jnp.zeros((1, d), jnp.float32)
    params['w_cls'] = std * jax.random.normal(next(keys), (d, classes), jnp.float32)
    return params


def extract_patches(x, patch_size):
    """NCHW -> (B*P, C*ps*ps), patch order row-major over (H/ps, W/ps)."""
    B, C, H, W = x.shape
    hp, wp = H // patch_size, W // patch_size
    p = x.reshape(B, C, hp, patch_size, wp, patch_size)
    p = p.transpose(0, 2, 4, 1, 3, 5)              # (B, hp, wp, C, ps, ps)
    return p.reshape(B * hp * wp, C * patch_size * patch_size)


def vit_forward(x, params, *, patch_size, heads, d_head, classes):
    B, C, H, W = x.shape
    D = heads * d_head
    P = (H // patch_size) * (W // patch_size)
    T = P + 1
    Tp = ((T + 7) // 8) * 8                     # sublane-aligned context
    num_blocks = len(params['blocks'])
    bf16 = jnp.bfloat16

    K = C * patch_size * patch_size
    Kp = ((K + 127) // 128) * 128               # lane-dense patch features
    Qp = ((3 * D + 127) // 128) * 128           # lane-dense qkv output
    Cp = ((classes + 127) // 128) * 128         # lane-dense classifier output
    assert P % 8 == 0, "patch count per image must be sublane-aligned"

    patches = extract_patches(x, patch_size)    # (B*P, K)
    patches_p = jnp.zeros((B * P, Kp), bf16).at[:, :K].set(patches.astype(bf16))
    w_emb_p = jnp.zeros((Kp, D), bf16).at[:K, :].set(params['w_emb'].astype(bf16))

    pos_p = jnp.zeros((Tp, D), jnp.float32).at[:T, :].set(params['pos'][:T, :])

    def stack(name, dt=jnp.float32):
        return jnp.stack([bp[name].astype(dt) for bp in params['blocks']], axis=0)

    ln1g, ln1b = stack('ln1_g'), stack('ln1_b')                 # (nb, 1, D)
    wqkv_p = jnp.zeros((num_blocks, D, Qp), bf16).at[:, :, :3 * D].set(
        stack('wqkv', bf16))
    bqkv_p = jnp.zeros((num_blocks, 1, Qp), jnp.float32).at[:, :, :3 * D].set(
        stack('bqkv'))
    wo, bo = stack('wo', bf16), stack('bo')
    ln2g, ln2b = stack('ln2_g'), stack('ln2_b')
    w1, b1 = stack('w1', bf16), stack('b1')
    w2, b2 = stack('w2', bf16), stack('b2')

    w_cls_p = jnp.zeros((D, Cp), bf16).at[:, :classes].set(
        params['w_cls'].astype(bf16))

    cls = params['cls'].reshape(1, D)
    inputs = [patches_p, w_emb_p, cls, pos_p,
              ln1g, ln1b, wqkv_p, bqkv_p, wo, bo, ln2g, ln2b,
              w1, b1, w2, b2, params['norm_g'], params['norm_b'], w_cls_p]

    def const_spec(a):       # full block, constant over the grid
        return pl.BlockSpec(a.shape, lambda b, k: (0, 0))

    def perblock_spec(a):    # (nb, r, c) -> (r, c) block of the current encoder block
        return pl.BlockSpec((None,) + a.shape[1:], lambda b, k: (k, 0, 0))

    in_specs = [
        pl.BlockSpec((P, Kp), lambda b, k: (b, 0)),   # this batch's patches
        const_spec(w_emb_p),
        const_spec(cls),
        const_spec(pos_p),
        perblock_spec(ln1g), perblock_spec(ln1b),
        perblock_spec(wqkv_p), perblock_spec(bqkv_p),
        perblock_spec(wo), perblock_spec(bo),
        perblock_spec(ln2g), perblock_spec(ln2b),
        perblock_spec(w1), perblock_spec(b1),
        perblock_spec(w2), perblock_spec(b2),
        const_spec(params['norm_g']), const_spec(params['norm_b']),
        const_spec(w_cls_p),
    ]

    out = pl.pallas_call(
        functools.partial(_vit_block_kernel, T, Tp, heads, d_head, num_blocks),
        out_shape=jax.ShapeDtypeStruct((B, 8, Cp), jnp.float32),
        grid=(B, num_blocks),
        in_specs=in_specs,
        out_specs=pl.BlockSpec((None, 8, Cp), lambda b, k: (b, 0, 0)),
        scratch_shapes=[pltpu.VMEM((Tp, D), jnp.float32)],   # activation, persistent
        compiler_params=pltpu.CompilerParams(
            dimension_semantics=("parallel", "arbitrary")),
    )(*inputs)
    return out[:, 0, :classes]


# ----------------------------- pure-JAX reference (f32) -----------------------------

def ref_block(x, p, heads, d_head):
    D = heads * d_head
    scale = 1.0 / math.sqrt(d_head)
    mu = jnp.mean(x, axis=-1, keepdims=True)
    var = jnp.mean(jnp.square(x - mu), axis=-1, keepdims=True)
    h = (x - mu) * jax.lax.rsqrt(var + 1e-5) * p['ln1_g'] + p['ln1_b']
    qkv = h @ p['wqkv'] + p['bqkv']
    q, k, v = qkv[..., :D], qkv[..., D:2 * D], qkv[..., 2 * D:]
    B, T, _ = x.shape
    q = q.reshape(B, T, heads, d_head).transpose(0, 2, 1, 3)
    k = k.reshape(B, T, heads, d_head).transpose(0, 2, 1, 3)
    v = v.reshape(B, T, heads, d_head).transpose(0, 2, 1, 3)
    s = jnp.einsum('bhqd,bhkd->bhqk', q, k) * scale
    pmat = jax.nn.softmax(s, axis=-1)
    o = jnp.einsum('bhqk,bhkd->bhqd', pmat, v).transpose(0, 2, 1, 3).reshape(B, T, D)
    x = x + o @ p['wo'] + p['bo']
    mu = jnp.mean(x, axis=-1, keepdims=True)
    var = jnp.mean(jnp.square(x - mu), axis=-1, keepdims=True)
    h2 = (x - mu) * jax.lax.rsqrt(var + 1e-5) * p['ln2_g'] + p['ln2_b']
    mlp = jnp.maximum(h2 @ p['w1'] + p['b1'], 0.0) @ p['w2'] + p['b2']
    return x + mlp


def ref_forward(x, params, *, patch_size, heads, d_head):
    B, C, H, W = x.shape
    d = heads * d_head
    P = (H // patch_size) * (W // patch_size)
    T = P + 1
    patches = extract_patches(x, patch_size)
    X = (patches @ params['w_emb']).reshape(B, P, d)
    cls = jnp.broadcast_to(params['cls'][None, None, :], (B, 1, d))
    X = jnp.concatenate([cls, X], axis=1) + params['pos'][:T, :][None]
    Y = X
    for bp in params['blocks']:
        Y = ref_block(Y, bp, heads, d_head)
    y0 = Y[:, 0, :]
    mu = jnp.mean(y0, axis=-1, keepdims=True)
    var = jnp.mean(jnp.square(y0 - mu), axis=-1, keepdims=True)
    y0n = (y0 - mu) * jax.lax.rsqrt(var + 1e-5) * params['norm_g'] + params['norm_b']
    return y0n @ params['w_cls']


# ----------------------------- main -----------------------------

if __name__ == "__main__":
    # small-shape config consistent with the module defaults
    channels, patch_size = 3, 4
    heads, d_head = 8, 4                       # d = 32
    num_blocks, exp_factor, classes = 6, 1, 10
    B, res = 2, 16                             # -> 16 patches, context = 17
    max_res = 32
    max_context = (max_res // patch_size) ** 2 + 1

    key = jax.random.PRNGKey(0)
    kp, kx = jax.random.split(key)
    params = init_params(kp, channels=channels, patch_size=patch_size,
                         heads=heads, d_head=d_head, num_blocks=num_blocks,
                         exp_factor=exp_factor, classes=classes,
                         max_context=max_context)
    x = jax.random.normal(kx, (B, channels, res, res), jnp.float32)

    z = vit_forward(x, params, patch_size=patch_size, heads=heads,
                    d_head=d_head, classes=classes)
    z = jax.block_until_ready(z)

    z_ref = ref_forward(x, params, patch_size=patch_size, heads=heads,
                        d_head=d_head)
    assert z.shape == (B, classes)
    # bf16 matmul operands (f32 accumulation) vs f32 reference
    assert jnp.allclose(z, z_ref, atol=2e-2, rtol=2e-2), (z, z_ref)

    print("KERNEL_OK")
</pallas_src>

<mosaic_0001>
module attributes {stable_mosaic.version = 11 : i64} {
  func.func @_vit_block_kernel(%arg0: i32, %arg1: i32, %arg2: memref<16x128xbf16, #tpu.memory_space<vmem>>, %arg3: memref<128x32xbf16, #tpu.memory_space<vmem>>, %arg4: memref<1x32xf32, #tpu.memory_space<vmem>>, %arg5: memref<24x32xf32, #tpu.memory_space<vmem>>, %arg6: memref<1x1x32xf32, #tpu.memory_space<vmem>>, %arg7: memref<1x1x32xf32, #tpu.memory_space<vmem>>, %arg8: memref<1x32x128xbf16, #tpu.memory_space<vmem>>, %arg9: memref<1x1x128xf32, #tpu.memory_space<vmem>>, %arg10: memref<1x32x32xbf16, #tpu.memory_space<vmem>>, %arg11: memref<1x1x32xf32, #tpu.memory_space<vmem>>, %arg12: memref<1x1x32xf32, #tpu.memory_space<vmem>>, %arg13: memref<1x1x32xf32, #tpu.memory_space<vmem>>, %arg14: memref<1x32x32xbf16, #tpu.memory_space<vmem>>, %arg15: memref<1x1x32xf32, #tpu.memory_space<vmem>>, %arg16: memref<1x32x32xbf16, #tpu.memory_space<vmem>>, %arg17: memref<1x1x32xf32, #tpu.memory_space<vmem>>, %arg18: memref<1x32xf32, #tpu.memory_space<vmem>>, %arg19: memref<1x32xf32, #tpu.memory_space<vmem>>, %arg20: memref<32x128xbf16, #tpu.memory_space<vmem>>, %arg21: memref<1x8x128xf32, #tpu.memory_space<vmem>>, %arg22: memref<24x32xf32, #tpu.memory_space<vmem>>) attributes {dimension_semantics = [#tpu.dimension_semantics<parallel>, #tpu.dimension_semantics<arbitrary>], iteration_bounds = array<i64: 2, 6>, scalar_prefetch = 0 : i64, scratch_operands = 1 : i64, tpu.core_type = #tpu.core_type<tc>, window_params = [{transform_indices = @transform_0, window_bounds = array<i64: 16, 128>}, {pipeline_mode = #tpu.pipeline_mode<synchronous>, transform_indices = @transform_1, window_bounds = array<i64: 128, 32>}, {pipeline_mode = #tpu.pipeline_mode<synchronous>, transform_indices = @transform_2, window_bounds = array<i64: 1, 32>}, {pipeline_mode = #tpu.pipeline_mode<synchronous>, transform_indices = @transform_3, window_bounds = array<i64: 24, 32>}, {transform_indices = @transform_4, window_bounds = array<i64: 1, 1, 32>}, {transform_indices = @transform_5, window_bounds = array<i64: 1, 1, 32>}, {transform_indices = @transform_6, window_bounds = array<i64: 1, 32, 128>}, {transform_indices = @transform_7, window_bounds = array<i64: 1, 1, 128>}, {transform_indices = @transform_8, window_bounds = array<i64: 1, 32, 32>}, {transform_indices = @transform_9, window_bounds = array<i64: 1, 1, 32>}, {transform_indices = @transform_10, window_bounds = array<i64: 1, 1, 32>}, {transform_indices = @transform_11, window_bounds = array<i64: 1, 1, 32>}, {transform_indices = @transform_12, window_bounds = array<i64: 1, 32, 32>}, {transform_indices = @transform_13, window_bounds = array<i64: 1, 1, 32>}, {transform_indices = @transform_14, window_bounds = array<i64: 1, 32, 32>}, {transform_indices = @transform_15, window_bounds = array<i64: 1, 1, 32>}, {pipeline_mode = #tpu.pipeline_mode<synchronous>, transform_indices = @transform_16, window_bounds = array<i64: 1, 32>}, {pipeline_mode = #tpu.pipeline_mode<synchronous>, transform_indices = @transform_17, window_bounds = array<i64: 1, 32>}, {pipeline_mode = #tpu.pipeline_mode<synchronous>, transform_indices = @transform_18, window_bounds = array<i64: 32, 128>}, {transform_indices = @transform_19, window_bounds = array<i64: 1, 8, 128>}]} {
    %c0_i32 = arith.constant 0 : i32
    %0 = arith.cmpi eq, %arg1, %c0_i32 : i32
    %1 = arith.extui %0 : i1 to i32
    %c0_i32_0 = arith.constant 0 : i32
    %2 = arith.cmpi ne, %1, %c0_i32_0 : i32
    scf.if %2 {
      %c0_98 = arith.constant 0 : index
      %c0_99 = arith.constant 0 : index
      %285 = vector.load %arg2[%c0_98, %c0_99] : memref<16x128xbf16, #tpu.memory_space<vmem>>, vector<16x128xbf16>
      %c0_100 = arith.constant 0 : index
      %c0_101 = arith.constant 0 : index
      %286 = vector.load %arg3[%c0_100, %c0_101] : memref<128x32xbf16, #tpu.memory_space<vmem>>, vector<128x32xbf16>
      %cst_102 = arith.constant dense<0.000000e+00> : vector<16x32xf32>
      %287 = tpu.matmul %285, %286, %cst_102 {dimension_numbers = #tpu.dot_dimension_numbers<[1], [0], [0], [1], [0, 0, 1, 1], [], []>} : vector<16x128xbf16>, vector<128x32xbf16>, vector<16x32xf32> -> vector<16x32xf32>
      %c0_103 = arith.constant 0 : index
      %c0_104 = arith.constant 0 : index
      %288 = vector.load %arg4[%c0_103, %c0_104] : memref<1x32xf32, #tpu.memory_space<vmem>>, vector<1x32xf32>
      %cst_105 = arith.constant 0.000000e+00 : f32
      %289 = vector.broadcast %cst_105 : f32 to vector<7x32xf32>
      %290 = tpu.concatenate %288, %287, %289 in 0 : vector<1x32xf32>, vector<16x32xf32>, vector<7x32xf32> -> vector<24x32xf32>
      %c0_106 = arith.constant 0 : index
      %c0_107 = arith.constant 0 : index
      %291 = vector.load %arg5[%c0_106, %c0_107] : memref<24x32xf32, #tpu.memory_space<vmem>>, vector<24x32xf32>
      %292 = arith.addf %290, %291 : vector<24x32xf32>
      %c0_108 = arith.constant 0 : index
      %c0_109 = arith.constant 0 : index
      %293 = vector.load %arg22[%c0_108, %c0_109] : memref<24x32xf32, #tpu.memory_space<vmem>>, vector<24x32xf32>
      tpu.vector_store %arg22[%c0_108, %c0_109], %292 {strides = array<i32>} : memref<24x32xf32, #tpu.memory_space<vmem>>, vector<24x32xf32>,
    } else {
    }
    %c0 = arith.constant 0 : index
    %c0_1 = arith.constant 0 : index
    %3 = vector.load %arg22[%c0, %c0_1] : memref<24x32xf32, #tpu.memory_space<vmem>>, vector<24x32xf32>
    %c0_2 = arith.constant 0 : index
    %c0_3 = arith.constant 0 : index
    %c0_4 = arith.constant 0 : index
    %4 = vector.load %arg6[%c0_2, %c0_3, %c0_4] : memref<1x1x32xf32, #tpu.memory_space<vmem>>, vector<1x1x32xf32>
    %5 = vector.shape_cast %4 : vector<1x1x32xf32> to vector<1x32xf32>
    %c0_5 = arith.constant 0 : index
    %c0_6 = arith.constant 0 : index
    %c0_7 = arith.constant 0 : index
    %6 = vector.load %arg7[%c0_5, %c0_6, %c0_7] : memref<1x1x32xf32, #tpu.memory_space<vmem>>, vector<1x1x32xf32>
    %7 = vector.shape_cast %6 : vector<1x1x32xf32> to vector<1x32xf32>
    %cst = arith.constant dense<0.000000e+00> : vector<24xf32>
    %8 = vector.multi_reduction <add>, %3, %cst [1] : vector<24x32xf32> to vector<24xf32>
    %9 = vector.shape_cast %8 : vector<24xf32> to vector<24x1xf32>
    %cst_8 = arith.constant 3.200000e+01 : f32
    %10 = vector.broadcast %cst_8 : f32 to vector<24x1xf32>
    %11 = arith.divf %9, %10 : vector<24x1xf32>
    %12 = vector.broadcast %11 : vector<24x1xf32> to vector<24x32xf32>
    %13 = arith.subf %3, %12 : vector<24x32xf32>
    %14 = arith.mulf %13, %13 : vector<24x32xf32>
    %cst_9 = arith.constant dense<0.000000e+00> : vector<24xf32>
    %15 = vector.multi_reduction <add>, %14, %cst_9 [1] : vector<24x32xf32> to vector<24xf32>
    %16 = vector.shape_cast %15 : vector<24xf32> to vector<24x1xf32>
    %cst_10 = arith.constant 3.200000e+01 : f32
    %17 = vector.broadcast %cst_10 : f32 to vector<24x1xf32>
    %18 = arith.divf %16, %17 : vector<24x1xf32>
    %19 = vector.broadcast %11 : vector<24x1xf32> to vector<24x32xf32>
    %20 = arith.subf %3, %19 : vector<24x32xf32>
    %cst_11 = arith.constant 9.99999974E-6 : f32
    %21 = vector.broadcast %cst_11 : f32 to vector<24x1xf32>
    %22 = arith.addf %18, %21 : vector<24x1xf32>
    %23 = math.rsqrt %22 : vector<24x1xf32>
    %24 = vector.broadcast %23 : vector<24x1xf32> to vector<24x32xf32>
    %25 = arith.mulf %20, %24 : vector<24x32xf32>
    %26 = vector.broadcast %5 : vector<1x32xf32> to vector<24x32xf32>
    %27 = arith.mulf %25, %26 : vector<24x32xf32>
    %28 = vector.broadcast %7 : vector<1x32xf32> to vector<24x32xf32>
    %29 = arith.addf %27, %28 : vector<24x32xf32>
    %30 = arith.truncf %29 : vector<24x32xf32> to vector<24x32xbf16>
    %c0_12 = arith.constant 0 : index
    %c0_13 = arith.constant 0 : index
    %c0_14 = arith.constant 0 : index
    %31 = vector.load %arg8[%c0_12, %c0_13, %c0_14] : memref<1x32x128xbf16, #tpu.memory_space<vmem>>, vector<1x32x128xbf16>
    %32 = vector.shape_cast %31 : vector<1x32x128xbf16> to vector<32x128xbf16>
    %cst_15 = arith.constant dense<0.000000e+00> : vector<24x128xf32>
    %33 = tpu.matmul %30, %32, %cst_15 {dimension_numbers = #tpu.dot_dimension_numbers<[1], [0], [0], [1], [0, 0, 1, 1], [], []>} : vector<24x32xbf16>, vector<32x128xbf16>, vector<24x128xf32> -> vector<24x128xf32>
    %c0_16 = arith.constant 0 : index
    %c0_17 = arith.constant 0 : index
    %c0_18 = arith.constant 0 : index
    %34 = vector.load %arg9[%c0_16, %c0_17, %c0_18] : memref<1x1x128xf32, #tpu.memory_space<vmem>>, vector<1x1x128xf32>
    %35 = vector.shape_cast %34 : vector<1x1x128xf32> to vector<1x128xf32>
    %36 = vector.broadcast %35 : vector<1x128xf32> to vector<24x128xf32>
    %37 = arith.addf %33, %36 : vector<24x128xf32>
    %38 = vector.extract_strided_slice %37 {offsets = [0, 0], sizes = [24, 32], strides = [1, 1]} : vector<24x128xf32> to vector<24x32xf32>
    %cst_19 = arith.constant 5.000000e-01 : f32
    %39 = vector.broadcast %cst_19 : f32 to vector<24x32xf32>
    %40 = arith.mulf %38, %39 : vector<24x32xf32>
    %41 = arith.truncf %40 : vector<24x32xf32> to vector<24x32xbf16>
    %42 = vector.extract_strided_slice %37 {offsets = [0, 32], sizes = [24, 32], strides = [1, 1]} : vector<24x128xf32> to vector<24x32xf32>
    %43 = arith.truncf %42 : vector<24x32xf32> to vector<24x32xbf16>
    %44 = vector.extract_strided_slice %37 {offsets = [0, 64], sizes = [24, 32], strides = [1, 1]} : vector<24x128xf32> to vector<24x32xf32>
    %45 = arith.truncf %44 : vector<24x32xf32> to vector<24x32xbf16>
    %c0_20 = arith.constant 0 : index
    %c0_21 = arith.constant 0 : index
    %c0_22 = arith.constant 0 : index
    %46 = vector.load %arg10[%c0_20, %c0_21, %c0_22] : memref<1x32x32xbf16, #tpu.memory_space<vmem>>, vector<1x32x32xbf16>
    %47 = vector.shape_cast %46 : vector<1x32x32xbf16> to vector<32x32xbf16>
    %48 = tpu.iota {dimensions = array<i32: 1>} : vector<1x24xi32>
    %c17_i32 = arith.constant 17 : i32
    %49 = vector.broadcast %c17_i32 : i32 to vector<1x24xi32>
    %50 = arith.cmpi slt, %48, %49 : vector<1x24xi32>
    %cst_23 = arith.constant 0.000000e+00 : f32
    %cst_24 = arith.constant -1.000000e+30 : f32
    %51 = vector.broadcast %cst_23 : f32 to vector<1x24xf32>
    %52 = vector.broadcast %cst_24 : f32 to vector<1x24xf32>
    %53 = arith.select %50, %51, %52 : vector<1x24xi1>, vector<1x24xf32>
    %cst_25 = arith.constant 0.000000e+00 : f32
    %54 = vector.broadcast %cst_25 : f32 to vector<24x32xf32>
    %55 = vector.extract_strided_slice %41 {offsets = [0, 0], sizes = [24, 4], strides = [1, 1]} : vector<24x32xbf16> to vector<24x4xbf16>
    %56 = vector.extract_strided_slice %43 {offsets = [0, 0], sizes = [24, 4], strides = [1, 1]} : vector<24x32xbf16> to vector<24x4xbf16>
    %cst_26 = arith.constant dense<0.000000e+00> : vector<24x24xf32>
    %57 = tpu.matmul %55, %56, %cst_26 {dimension_numbers = #tpu.dot_dimension_numbers<[1], [1], [0], [0], [0, 0, 1, 0], [], []>} : vector<24x4xbf16>, vector<24x4xbf16>, vector<24x24xf32> -> vector<24x24xf32>
    %58 = vector.broadcast %53 : vector<1x24xf32> to vector<24x24xf32>
    %59 = arith.addf %57, %58 : vector<24x24xf32>
    %cst_27 = arith.constant dense<0xFF800000> : vector<24xf32>
    %60 = vector.multi_reduction <maximumf>, %59, %cst_27 [1] : vector<24x24xf32> to vector<24xf32>
    %61 = vector.shape_cast %60 : vector<24xf32> to vector<24x1xf32>
    %62 = vector.broadcast %61 : vector<24x1xf32> to vector<24x24xf32>
    %63 = arith.subf %59, %62 : vector<24x24xf32>
    %64 = math.exp %63 : vector<24x24xf32>
    %cst_28 = arith.constant dense<0.000000e+00> : vector<24xf32>
    %65 = vector.multi_reduction <add>, %64, %cst_28 [1] : vector<24x24xf32> to vector<24xf32>
    %66 = vector.shape_cast %65 : vector<24xf32> to vector<24x1xf32>
    %67 = tpu.reciprocal %66 {approx = true} : vector<24x1xf32> -> vector<24x1xf32>
    %68 = vector.broadcast %67 : vector<24x1xf32> to vector<24x24xf32>
    %69 = arith.mulf %64, %68 : vector<24x24xf32>
    %70 = arith.truncf %69 : vector<24x24xf32> to vector<24x24xbf16>
    %71 = vector.extract_strided_slice %45 {offsets = [0, 0], sizes = [24, 4], strides = [1, 1]} : vector<24x32xbf16> to vector<24x4xbf16>
    %cst_29 = arith.constant dense<0.000000e+00> : vector<24x4xf32>
    %72 = tpu.matmul %70, %71, %cst_29 {dimension_numbers = #tpu.dot_dimension_numbers<[1], [0], [0], [1], [0, 0, 1, 1], [], []>} : vector<24x24xbf16>, vector<24x4xbf16>, vector<24x4xf32> -> vector<24x4xf32>
    %73 = arith.truncf %72 : vector<24x4xf32> to vector<24x4xbf16>
    %74 = vector.extract_strided_slice %47 {offsets = [0, 0], sizes = [4, 32], strides = [1, 1]} : vector<32x32xbf16> to vector<4x32xbf16>
    %cst_30 = arith.constant dense<0.000000e+00> : vector<24x32xf32>
    %75 = tpu.matmul %73, %74, %cst_30 {dimension_numbers = #tpu.dot_dimension_numbers<[1], [0], [0], [1], [0, 0, 1, 1], [], []>} : vector<24x4xbf16>, vector<4x32xbf16>, vector<24x32xf32> -> vector<24x32xf32>
    %76 = arith.addf %54, %75 : vector<24x32xf32>
    %77 = vector.extract_strided_slice %41 {offsets = [0, 4], sizes = [24, 4], strides = [1, 1]} : vector<24x32xbf16> to vector<24x4xbf16>
    %78 = vector.extract_strided_slice %43 {offsets = [0, 4], sizes = [24, 4], strides = [1, 1]} : vector<24x32xbf16> to vector<24x4xbf16>
    %cst_31 = arith.constant dense<0.000000e+00> : vector<24x24xf32>
    %79 = tpu.matmul %77, %78, %cst_31 {dimension_numbers = #tpu.dot_dimension_numbers<[1], [1], [0], [0], [0, 0, 1, 0], [], []>} : vector<24x4xbf16>, vector<24x4xbf16>, vector<24x24xf32> -> vector<24x24xf32>
    %80 = vector.broadcast %53 : vector<1x24xf32> to vector<24x24xf32>
    %81 = arith.addf %79, %80 : vector<24x24xf32>
    %cst_32 = arith.constant dense<0xFF800000> : vector<24xf32>
    %82 = vector.multi_reduction <maximumf>, %81, %cst_32 [1] : vector<24x24xf32> to vector<24xf32>
    %83 = vector.shape_cast %82 : vector<24xf32> to vector<24x1xf32>
    %84 = vector.broadcast %83 : vector<24x1xf32> to vector<24x24xf32>
    %85 = arith.subf %81, %84 : vector<24x24xf32>
    %86 = math.exp %85 : vector<24x24xf32>
    %cst_33 = arith.constant dense<0.000000e+00> : vector<24xf32>
    %87 = vector.multi_reduction <add>, %86, %cst_33 [1] : vector<24x24xf32> to vector<24xf32>
    %88 = vector.shape_cast %87 : vector<24xf32> to vector<24x1xf32>
    %89 = tpu.reciprocal %88 {approx = true} : vector<24x1xf32> -> vector<24x1xf32>
    %90 = vector.broadcast %89 : vector<24x1xf32> to vector<24x24xf32>
    %91 = arith.mulf %86, %90 : vector<24x24xf32>
    %92 = arith.truncf %91 : vector<24x24xf32> to vector<24x24xbf16>
    %93 = vector.extract_strided_slice %45 {offsets = [0, 4], sizes = [24, 4], strides = [1, 1]} : vector<24x32xbf16> to vector<24x4xbf16>
    %cst_34 = arith.constant dense<0.000000e+00> : vector<24x4xf32>
    %94 = tpu.matmul %92, %93, %cst_34 {dimension_numbers = #tpu.dot_dimension_numbers<[1], [0], [0], [1], [0, 0, 1, 1], [], []>} : vector<24x24xbf16>, vector<24x4xbf16>, vector<24x4xf32> -> vector<24x4xf32>
    %95 = arith.truncf %94 : vector<24x4xf32> to vector<24x4xbf16>
    %96 = vector.extract_strided_slice %47 {offsets = [4, 0], sizes = [4, 32], strides = [1, 1]} : vector<32x32xbf16> to vector<4x32xbf16>
    %cst_35 = arith.constant dense<0.000000e+00> : vector<24x32xf32>
    %97 = tpu.matmul %95, %96, %cst_35 {dimension_numbers = #tpu.dot_dimension_numbers<[1], [0], [0], [1], [0, 0, 1, 1], [], []>} : vector<24x4xbf16>, vector<4x32xbf16>, vector<24x32xf32> -> vector<24x32xf32>
    %98 = arith.addf %76, %97 : vector<24x32xf32>
    %99 = vector.extract_strided_slice %41 {offsets = [0, 8], sizes = [24, 4], strides = [1, 1]} : vector<24x32xbf16> to vector<24x4xbf16>
    %100 = vector.extract_strided_slice %43 {offsets = [0, 8], sizes = [24, 4], strides = [1, 1]} : vector<24x32xbf16> to vector<24x4xbf16>
    %cst_36 = arith.constant dense<0.000000e+00> : vector<24x24xf32>
    %101 = tpu.matmul %99, %100, %cst_36 {dimension_numbers = #tpu.dot_dimension_numbers<[1], [1], [0], [0], [0, 0, 1, 0], [], []>} : vector<24x4xbf16>, vector<24x4xbf16>, vector<24x24xf32> -> vector<24x24xf32>
    %102 = vector.broadcast %53 : vector<1x24xf32> to vector<24x24xf32>
    %103 = arith.addf %101, %102 : vector<24x24xf32>
    %cst_37 = arith.constant dense<0xFF800000> : vector<24xf32>
    %104 = vector.multi_reduction <maximumf>, %103, %cst_37 [1] : vector<24x24xf32> to vector<24xf32>
    %105 = vector.shape_cast %104 : vector<24xf32> to vector<24x1xf32>
    %106 = vector.broadcast %105 : vector<24x1xf32> to vector<24x24xf32>
    %107 = arith.subf %103, %106 : vector<24x24xf32>
    %108 = math.exp %107 : vector<24x24xf32>
    %cst_38 = arith.constant dense<0.000000e+00> : vector<24xf32>
    %109 = vector.multi_reduction <add>, %108, %cst_38 [1] : vector<24x24xf32> to vector<24xf32>
    %110 = vector.shape_cast %109 : vector<24xf32> to vector<24x1xf32>
    %111 = tpu.reciprocal %110 {approx = true} : vector<24x1xf32> -> vector<24x1xf32>
    %112 = vector.broadcast %111 : vector<24x1xf32> to vector<24x24xf32>
    %113 = arith.mulf %108, %112 : vector<24x24xf32>
    %114 = arith.truncf %113 : vector<24x24xf32> to vector<24x24xbf16>
    %115 = vector.extract_strided_slice %45 {offsets = [0, 8], sizes = [24, 4], strides = [1, 1]} : vector<24x32xbf16> to vector<24x4xbf16>
    %cst_39 = arith.constant dense<0.000000e+00> : vector<24x4xf32>
    %116 = tpu.matmul %114, %115, %cst_39 {dimension_numbers = #tpu.dot_dimension_numbers<[1], [0], [0], [1], [0, 0, 1, 1], [], []>} : vector<24x24xbf16>, vector<24x4xbf16>, vector<24x4xf32> -> vector<24x4xf32>
    %117 = arith.truncf %116 : vector<24x4xf32> to vector<24x4xbf16>
    %118 = vector.extract_strided_slice %47 {offsets = [8, 0], sizes = [4, 32], strides = [1, 1]} : vector<32x32xbf16> to vector<4x32xbf16>
    %cst_40 = arith.constant dense<0.000000e+00> : vector<24x32xf32>
    %119 = tpu.matmul %117, %118, %cst_40 {dimension_numbers = #tpu.dot_dimension_numbers<[1], [0], [0], [1], [0, 0, 1, 1], [], []>} : vector<24x4xbf16>, vector<4x32xbf16>, vector<24x32xf32> -> vector<24x32xf32>
    %120 = arith.addf %98, %119 : vector<24x32xf32>
    %121 = vector.extract_strided_slice %41 {offsets = [0, 12], sizes = [24, 4], strides = [1, 1]} : vector<24x32xbf16> to vector<24x4xbf16>
    %122 = vector.extract_strided_slice %43 {offsets = [0, 12], sizes = [24, 4], strides = [1, 1]} : vector<24x32xbf16> to vector<24x4xbf16>
    %cst_41 = arith.constant dense<0.000000e+00> : vector<24x24xf32>
    %123 = tpu.matmul %121, %122, %cst_41 {dimension_numbers = #tpu.dot_dimension_numbers<[1], [1], [0], [0], [0, 0, 1, 0], [], []>} : vector<24x4xbf16>, vector<24x4xbf16>, vector<24x24xf32> -> vector<24x24xf32>
    %124 = vector.broadcast %53 : vector<1x24xf32> to vector<24x24xf32>
    %125 = arith.addf %123, %124 : vector<24x24xf32>
    %cst_42 = arith.constant dense<0xFF800000> : vector<24xf32>
    %126 = vector.multi_reduction <maximumf>, %125, %cst_42 [1] : vector<24x24xf32> to vector<24xf32>
    %127 = vector.shape_cast %126 : vector<24xf32> to vector<24x1xf32>
    %128 = vector.broadcast %127 : vector<24x1xf32> to vector<24x24xf32>
    %129 = arith.subf %125, %128 : vector<24x24xf32>
    %130 = math.exp %129 : vector<24x24xf32>
    %cst_43 = arith.constant dense<0.000000e+00> : vector<24xf32>
    %131 = vector.multi_reduction <add>, %130, %cst_43 [1] : vector<24x24xf32> to vector<24xf32>
    %132 = vector.shape_cast %131 : vector<24xf32> to vector<24x1xf32>
    %133 = tpu.reciprocal %132 {approx = true} : vector<24x1xf32> -> vector<24x1xf32>
    %134 = vector.broadcast %133 : vector<24x1xf32> to vector<24x24xf32>
    %135 = arith.mulf %130, %134 : vector<24x24xf32>
    %136 = arith.truncf %135 : vector<24x24xf32> to vector<24x24xbf16>
    %137 = vector.extract_strided_slice %45 {offsets = [0, 12], sizes = [24, 4], strides = [1, 1]} : vector<24x32xbf16> to vector<24x4xbf16>
    %cst_44 = arith.constant dense<0.000000e+00> : vector<24x4xf32>
    %138 = tpu.matmul %136, %137, %cst_44 {dimension_numbers = #tpu.dot_dimension_numbers<[1], [0], [0], [1], [0, 0, 1, 1], [], []>} : vector<24x24xbf16>, vector<24x4xbf16>, vector<24x4xf32> -> vector<24x4xf32>
    %139 = arith.truncf %138 : vector<24x4xf32> to vector<24x4xbf16>
    %140 = vector.extract_strided_slice %47 {offsets = [12, 0], sizes = [4, 32], strides = [1, 1]} : vector<32x32xbf16> to vector<4x32xbf16>
    %cst_45 = arith.constant dense<0.000000e+00> : vector<24x32xf32>
    %141 = tpu.matmul %139, %140, %cst_45 {dimension_numbers = #tpu.dot_dimension_numbers<[1], [0], [0], [1], [0, 0, 1, 1], [], []>} : vector<24x4xbf16>, vector<4x32xbf16>, vector<24x32xf32> -> vector<24x32xf32>
    %142 = arith.addf %120, %141 : vector<24x32xf32>
    %143 = vector.extract_strided_slice %41 {offsets = [0, 16], sizes = [24, 4], strides = [1, 1]} : vector<24x32xbf16> to vector<24x4xbf16>
    %144 = vector.extract_strided_slice %43 {offsets = [0, 16], sizes = [24, 4], strides = [1, 1]} : vector<24x32xbf16> to vector<24x4xbf16>
    %cst_46 = arith.constant dense<0.000000e+00> : vector<24x24xf32>
    %145 = tpu.matmul %143, %144, %cst_46 {dimension_numbers = #tpu.dot_dimension_numbers<[1], [1], [0], [0], [0, 0, 1, 0], [], []>} : vector<24x4xbf16>, vector<24x4xbf16>, vector<24x24xf32> -> vector<24x24xf32>
    %146 = vector.broadcast %53 : vector<1x24xf32> to vector<24x24xf32>
    %147 = arith.addf %145, %146 : vector<24x24xf32>
    %cst_47 = arith.constant dense<0xFF800000> : vector<24xf32>
    %148 = vector.multi_reduction <maximumf>, %147, %cst_47 [1] : vector<24x24xf32> to vector<24xf32>
    %149 = vector.shape_cast %148 : vector<24xf32> to vector<24x1xf32>
    %150 = vector.broadcast %149 : vector<24x1xf32> to vector<24x24xf32>
    %151 = arith.subf %147, %150 : vector<24x24xf32>
    %152 = math.exp %151 : vector<24x24xf32>
    %cst_48 = arith.constant dense<0.000000e+00> : vector<24xf32>
    %153 = vector.multi_reduction <add>, %152, %cst_48 [1] : vector<24x24xf32> to vector<24xf32>
    %154 = vector.shape_cast %153 : vector<24xf32> to vector<24x1xf32>
    %155 = tpu.reciprocal %154 {approx = true} : vector<24x1xf32> -> vector<24x1xf32>
    %156 = vector.broadcast %155 : vector<24x1xf32> to vector<24x24xf32>
    %157 = arith.mulf %152, %156 : vector<24x24xf32>
    %158 = arith.truncf %157 : vector<24x24xf32> to vector<24x24xbf16>
    %159 = vector.extract_strided_slice %45 {offsets = [0, 16], sizes = [24, 4], strides = [1, 1]} : vector<24x32xbf16> to vector<24x4xbf16>
    %cst_49 = arith.constant dense<0.000000e+00> : vector<24x4xf32>
    %160 = tpu.matmul %158, %159, %cst_49 {dimension_numbers = #tpu.dot_dimension_numbers<[1], [0], [0], [1], [0, 0, 1, 1], [], []>} : vector<24x24xbf16>, vector<24x4xbf16>, vector<24x4xf32> -> vector<24x4xf32>
    %161 = arith.truncf %160 : vector<24x4xf32> to vector<24x4xbf16>
    %162 = vector.extract_strided_slice %47 {offsets = [16, 0], sizes = [4, 32], strides = [1, 1]} : vector<32x32xbf16> to vector<4x32xbf16>
    %cst_50 = arith.constant dense<0.000000e+00> : vector<24x32xf32>
    %163 = tpu.matmul %161, %162, %cst_50 {dimension_numbers = #tpu.dot_dimension_numbers<[1], [0], [0], [1], [0, 0, 1, 1], [], []>} : vector<24x4xbf16>, vector<4x32xbf16>, vector<24x32xf32> -> vector<24x32xf32>
    %164 = arith.addf %142, %163 : vector<24x32xf32>
    %165 = vector.extract_strided_slice %41 {offsets = [0, 20], sizes = [24, 4], strides = [1, 1]} : vector<24x32xbf16> to vector<24x4xbf16>
    %166 = vector.extract_strided_slice %43 {offsets = [0, 20], sizes = [24, 4], strides = [1, 1]} : vector<24x32xbf16> to vector<24x4xbf16>
    %cst_51 = arith.constant dense<0.000000e+00> : vector<24x24xf32>
    %167 = tpu.matmul %165, %166, %cst_51 {dimension_numbers = #tpu.dot_dimension_numbers<[1], [1], [0], [0], [0, 0, 1, 0], [], []>} : vector<24x4xbf16>, vector<24x4xbf16>, vector<24x24xf32> -> vector<24x24xf32>
    %168 = vector.broadcast %53 : vector<1x24xf32> to vector<24x24xf32>
    %169 = arith.addf %167, %168 : vector<24x24xf32>
    %cst_52 = arith.constant dense<0xFF800000> : vector<24xf32>
    %170 = vector.multi_reduction <maximumf>, %169, %cst_52 [1] : vector<24x24xf32> to vector<24xf32>
    %171 = vector.shape_cast %170 : vector<24xf32> to vector<24x1xf32>
    %172 = vector.broadcast %171 : vector<24x1xf32> to vector<24x24xf32>
    %173 = arith.subf %169, %172 : vector<24x24xf32>
    %174 = math.exp %173 : vector<24x24xf32>
    %cst_53 = arith.constant dense<0.000000e+00> : vector<24xf32>
    %175 = vector.multi_reduction <add>, %174, %cst_53 [1] : vector<24x24xf32> to vector<24xf32>
    %176 = vector.shape_cast %175 : vector<24xf32> to vector<24x1xf32>
    %177 = tpu.reciprocal %176 {approx = true} : vector<24x1xf32> -> vector<24x1xf32>
    %178 = vector.broadcast %177 : vector<24x1xf32> to vector<24x24xf32>
    %179 = arith.mulf %174, %178 : vector<24x24xf32>
    %180 = arith.truncf %179 : vector<24x24xf32> to vector<24x24xbf16>
    %181 = vector.extract_strided_slice %45 {offsets = [0, 20], sizes = [24, 4], strides = [1, 1]} : vector<24x32xbf16> to vector<24x4xbf16>
    %cst_54 = arith.constant dense<0.000000e+00> : vector<24x4xf32>
    %182 = tpu.matmul %180, %181, %cst_54 {dimension_numbers = #tpu.dot_dimension_numbers<[1], [0], [0], [1], [0, 0, 1, 1], [], []>} : vector<24x24xbf16>, vector<24x4xbf16>, vector<24x4xf32> -> vector<24x4xf32>
    %183 = arith.truncf %182 : vector<24x4xf32> to vector<24x4xbf16>
    %184 = vector.extract_strided_slice %47 {offsets = [20, 0], sizes = [4, 32], strides = [1, 1]} : vector<32x32xbf16> to vector<4x32xbf16>
    %cst_55 = arith.constant dense<0.000000e+00> : vector<24x32xf32>
    %185 = tpu.matmul %183, %184, %cst_55 {dimension_numbers = #tpu.dot_dimension_numbers<[1], [0], [0], [1], [0, 0, 1, 1], [], []>} : vector<24x4xbf16>, vector<4x32xbf16>, vector<24x32xf32> -> vector<24x32xf32>
    %186 = arith.addf %164, %185 : vector<24x32xf32>
    %187 = vector.extract_strided_slice %41 {offsets = [0, 24], sizes = [24, 4], strides = [1, 1]} : vector<24x32xbf16> to vector<24x4xbf16>
    %188 = vector.extract_strided_slice %43 {offsets = [0, 24], sizes = [24, 4], strides = [1, 1]} : vector<24x32xbf16> to vector<24x4xbf16>
    %cst_56 = arith.constant dense<0.000000e+00> : vector<24x24xf32>
    %189 = tpu.matmul %187, %188, %cst_56 {dimension_numbers = #tpu.dot_dimension_numbers<[1], [1], [0], [0], [0, 0, 1, 0], [], []>} : vector<24x4xbf16>, vector<24x4xbf16>, vector<24x24xf32> -> vector<24x24xf32>
    %190 = vector.broadcast %53 : vector<1x24xf32> to vector<24x24xf32>
    %191 = arith.addf %189, %190 : vector<24x24xf32>
    %cst_57 = arith.constant dense<0xFF800000> : vector<24xf32>
    %192 = vector.multi_reduction <maximumf>, %191, %cst_57 [1] : vector<24x24xf32> to vector<24xf32>
    %193 = vector.shape_cast %192 : vector<24xf32> to vector<24x1xf32>
    %194 = vector.broadcast %193 : vector<24x1xf32> to vector<24x24xf32>
    %195 = arith.subf %191, %194 : vector<24x24xf32>
    %196 = math.exp %195 : vector<24x24xf32>
    %cst_58 = arith.constant dense<0.000000e+00> : vector<24xf32>
    %197 = vector.multi_reduction <add>, %196, %cst_58 [1] : vector<24x24xf32> to vector<24xf32>
    %198 = vector.shape_cast %197 : vector<24xf32> to vector<24x1xf32>
    %199 = tpu.reciprocal %198 {approx = true} : vector<24x1xf32> -> vector<24x1xf32>
    %200 = vector.broadcast %199 : vector<24x1xf32> to vector<24x24xf32>
    %201 = arith.mulf %196, %200 : vector<24x24xf32>
    %202 = arith.truncf %201 : vector<24x24xf32> to vector<24x24xbf16>
    %203 = vector.extract_strided_slice %45 {offsets = [0, 24], sizes = [24, 4], strides = [1, 1]} : vector<24x32xbf16> to vector<24x4xbf16>
    %cst_59 = arith.constant dense<0.000000e+00> : vector<24x4xf32>
    %204 = tpu.matmul %202, %203, %cst_59 {dimension_numbers = #tpu.dot_dimension_numbers<[1], [0], [0], [1], [0, 0, 1, 1], [], []>} : vector<24x24xbf16>, vector<24x4xbf16>, vector<24x4xf32> -> vector<24x4xf32>
    %205 = arith.truncf %204 : vector<24x4xf32> to vector<24x4xbf16>
    %206 = vector.extract_strided_slice %47 {offsets = [24, 0], sizes = [4, 32], strides = [1, 1]} : vector<32x32xbf16> to vector<4x32xbf16>
    %cst_60 = arith.constant dense<0.000000e+00> : vector<24x32xf32>
    %207 = tpu.matmul %205, %206, %cst_60 {dimension_numbers = #tpu.dot_dimension_numbers<[1], [0], [0], [1], [0, 0, 1, 1], [], []>} : vector<24x4xbf16>, vector<4x32xbf16>, vector<24x32xf32> -> vector<24x32xf32>
    %208 = arith.addf %186, %207 : vector<24x32xf32>
    %209 = vector.extract_strided_slice %41 {offsets = [0, 28], sizes = [24, 4], strides = [1, 1]} : vector<24x32xbf16> to vector<24x4xbf16>
    %210 = vector.extract_strided_slice %43 {offsets = [0, 28], sizes = [24, 4], strides = [1, 1]} : vector<24x32xbf16> to vector<24x4xbf16>
    %cst_61 = arith.constant dense<0.000000e+00> : vector<24x24xf32>
    %211 = tpu.matmul %209, %210, %cst_61 {dimension_numbers = #tpu.dot_dimension_numbers<[1], [1], [0], [0], [0, 0, 1, 0], [], []>} : vector<24x4xbf16>, vector<24x4xbf16>, vector<24x24xf32> -> vector<24x24xf32>
    %212 = vector.broadcast %53 : vector<1x24xf32> to vector<24x24xf32>
    %213 = arith.addf %211, %212 : vector<24x24xf32>
    %cst_62 = arith.constant dense<0xFF800000> : vector<24xf32>
    %214 = vector.multi_reduction <maximumf>, %213, %cst_62 [1] : vector<24x24xf32> to vector<24xf32>
    %215 = vector.shape_cast %214 : vector<24xf32> to vector<24x1xf32>
    %216 = vector.broadcast %215 : vector<24x1xf32> to vector<24x24xf32>
    %217 = arith.subf %213, %216 : vector<24x24xf32>
    %218 = math.exp %217 : vector<24x24xf32>
    %cst_63 = arith.constant dense<0.000000e+00> : vector<24xf32>
    %219 = vector.multi_reduction <add>, %218, %cst_63 [1] : vector<24x24xf32> to vector<24xf32>
    %220 = vector.shape_cast %219 : vector<24xf32> to vector<24x1xf32>
    %221 = tpu.reciprocal %220 {approx = true} : vector<24x1xf32> -> vector<24x1xf32>
    %222 = vector.broadcast %221 : vector<24x1xf32> to vector<24x24xf32>
    %223 = arith.mulf %218, %222 : vector<24x24xf32>
    %224 = arith.truncf %223 : vector<24x24xf32> to vector<24x24xbf16>
    %225 = vector.extract_strided_slice %45 {offsets = [0, 28], sizes = [24, 4], strides = [1, 1]} : vector<24x32xbf16> to vector<24x4xbf16>
    %cst_64 = arith.constant dense<0.000000e+00> : vector<24x4xf32>
    %226 = tpu.matmul %224, %225, %cst_64 {dimension_numbers = #tpu.dot_dimension_numbers<[1], [0], [0], [1], [0, 0, 1, 1], [], []>} : vector<24x24xbf16>, vector<24x4xbf16>, vector<24x4xf32> -> vector<24x4xf32>
    %227 = arith.truncf %226 : vector<24x4xf32> to vector<24x4xbf16>
    %228 = vector.extract_strided_slice %47 {offsets = [28, 0], sizes = [4, 32], strides = [1, 1]} : vector<32x32xbf16> to vector<4x32xbf16>
    %cst_65 = arith.constant dense<0.000000e+00> : vector<24x32xf32>
    %229 = tpu.matmul %227, %228, %cst_65 {dimension_numbers = #tpu.dot_dimension_numbers<[1], [0], [0], [1], [0, 0, 1, 1], [], []>} : vector<24x4xbf16>, vector<4x32xbf16>, vector<24x32xf32> -> vector<24x32xf32>
    %230 = arith.addf %208, %229 : vector<24x32xf32>
    %231 = arith.addf %3, %230 : vector<24x32xf32>
    %c0_66 = arith.constant 0 : index
    %c0_67 = arith.constant 0 : index
    %c0_68 = arith.constant 0 : index
    %232 = vector.load %arg11[%c0_66, %c0_67, %c0_68] : memref<1x1x32xf32, #tpu.memory_space<vmem>>, vector<1x1x32xf32>
    %233 = vector.shape_cast %232 : vector<1x1x32xf32> to vector<1x32xf32>
    %234 = vector.broadcast %233 : vector<1x32xf32> to vector<24x32xf32>
    %235 = arith.addf %231, %234 : vector<24x32xf32>
    %c0_69 = arith.constant 0 : index
    %c0_70 = arith.constant 0 : index
    %c0_71 = arith.constant 0 : index
    %236 = vector.load %arg12[%c0_69, %c0_70, %c0_71] : memref<1x1x32xf32, #tpu.memory_space<vmem>>, vector<1x1x32xf32>
    %237 = vector.shape_cast %236 : vector<1x1x32xf32> to vector<1x32xf32>
    %c0_72 = arith.constant 0 : index
    %c0_73 = arith.constant 0 : index
    %c0_74 = arith.constant 0 : index
    %238 = vector.load %arg13[%c0_72, %c0_73, %c0_74] : memref<1x1x32xf32, #tpu.memory_space<vmem>>, vector<1x1x32xf32>
    %239 = vector.shape_cast %238 : vector<1x1x32xf32> to vector<1x32xf32>
    %cst_75 = arith.constant dense<0.000000e+00> : vector<24xf32>
    %240 = vector.multi_reduction <add>, %235, %cst_75 [1] : vector<24x32xf32> to vector<24xf32>
    %241 = vector.shape_cast %240 : vector<24xf32> to vector<24x1xf32>
    %cst_76 = arith.constant 3.200000e+01 : f32
    %242 = vector.broadcast %cst_76 : f32 to vector<24x1xf32>
    %243 = arith.divf %241, %242 : vector<24x1xf32>
    %244 = vector.broadcast %243 : vector<24x1xf32> to vector<24x32xf32>
    %245 = arith.subf %235, %244 : vector<24x32xf32>
    %246 = arith.mulf %245, %245 : vector<24x32xf32>
    %cst_77 = arith.constant dense<0.000000e+00> : vector<24xf32>
    %247 = vector.multi_reduction <add>, %246, %cst_77 [1] : vector<24x32xf32> to vector<24xf32>
    %248 = vector.shape_cast %247 : vector<24xf32> to vector<24x1xf32>
    %cst_78 = arith.constant 3.200000e+01 : f32
    %249 = vector.broadcast %cst_78 : f32 to vector<24x1xf32>
    %250 = arith.divf %248, %249 : vector<24x1xf32>
    %251 = vector.broadcast %243 : vector<24x1xf32> to vector<24x32xf32>
    %252 = arith.subf %235, %251 : vector<24x32xf32>
    %cst_79 = arith.constant 9.99999974E-6 : f32
    %253 = vector.broadcast %cst_79 : f32 to vector<24x1xf32>
    %254 = arith.addf %250, %253 : vector<24x1xf32>
    %255 = math.rsqrt %254 : vector<24x1xf32>
    %256 = vector.broadcast %255 : vector<24x1xf32> to vector<24x32xf32>
    %257 = arith.mulf %252, %256 : vector<24x32xf32>
    %258 = vector.broadcast %237 : vector<1x32xf32> to vector<24x32xf32>
    %259 = arith.mulf %257, %258 : vector<24x32xf32>
    %260 = vector.broadcast %239 : vector<1x32xf32> to vector<24x32xf32>
    %261 = arith.addf %259, %260 : vector<24x32xf32>
    %262 = arith.truncf %261 : vector<24x32xf32> to vector<24x32xbf16>
    %c0_80 = arith.constant 0 : index
    %c0_81 = arith.constant 0 : index
    %c0_82 = arith.constant 0 : index
    %263 = vector.load %arg14[%c0_80, %c0_81, %c0_82] : memref<1x32x32xbf16, #tpu.memory_space<vmem>>, vector<1x32x32xbf16>
    %264 = vector.shape_cast %263 : vector<1x32x32xbf16> to vector<32x32xbf16>
    %cst_83 = arith.constant dense<0.000000e+00> : vector<24x32xf32>
    %265 = tpu.matmul %262, %264, %cst_83 {dimension_numbers = #tpu.dot_dimension_numbers<[1], [0], [0], [1], [0, 0, 1, 1], [], []>} : vector<24x32xbf16>, vector<32x32xbf16>, vector<24x32xf32> -> vector<24x32xf32>
    %c0_84 = arith.constant 0 : index
    %c0_85 = arith.constant 0 : index
    %c0_86 = arith.constant 0 : index
    %266 = vector.load %arg15[%c0_84, %c0_85, %c0_86] : memref<1x1x32xf32, #tpu.memory_space<vmem>>, vector<1x1x32xf32>
    %267 = vector.shape_cast %266 : vector<1x1x32xf32> to vector<1x32xf32>
    %268 = vector.broadcast %267 : vector<1x32xf32> to vector<24x32xf32>
    %269 = arith.addf %265, %268 : vector<24x32xf32>
    %cst_87 = arith.constant 0.000000e+00 : f32
    %270 = vector.broadcast %cst_87 : f32 to vector<24x32xf32>
    %271 = arith.maximumf %269, %270 : vector<24x32xf32>
    %272 = arith.truncf %271 : vector<24x32xf32> to vector<24x32xbf16>
    %c0_88 = arith.constant 0 : index
    %c0_89 = arith.constant 0 : index
    %c0_90 = arith.constant 0 : index
    %273 = vector.load %arg16[%c0_88, %c0_89, %c0_90] : memref<1x32x32xbf16, #tpu.memory_space<vmem>>, vector<1x32x32xbf16>
    %274 = vector.shape_cast %273 : vector<1x32x32xbf16> to vector<32x32xbf16>
    %cst_91 = arith.constant dense<0.000000e+00> : vector<24x32xf32>
    %275 = tpu.matmul %272, %274, %cst_91 {dimension_numbers = #tpu.dot_dimension_numbers<[1], [0], [0], [1], [0, 0, 1, 1], [], []>} : vector<24x32xbf16>, vector<32x32xbf16>, vector<24x32xf32> -> vector<24x32xf32>
    %c0_92 = arith.constant 0 : index
    %c0_93 = arith.constant 0 : index
    %c0_94 = arith.constant 0 : index
    %276 = vector.load %arg17[%c0_92, %c0_93, %c0_94] : memref<1x1x32xf32, #tpu.memory_space<vmem>>, vector<1x1x32xf32>
    %277 = vector.shape_cast %276 : vector<1x1x32xf32> to vector<1x32xf32>
    %278 = vector.broadcast %277 : vector<1x32xf32> to vector<24x32xf32>
    %279 = arith.addf %275, %278 : vector<24x32xf32>
    %280 = arith.addf %235, %279 : vector<24x32xf32>
    %c0_95 = arith.constant 0 : index
    %c0_96 = arith.constant 0 : index
    %281 = vector.load %arg22[%c0_95, %c0_96] : memref<24x32xf32, #tpu.memory_space<vmem>>, vector<24x32xf32>
    tpu.vector_store %arg22[%c0_95, %c0_96], %280 {strides = array<i32>} : memref<24x32xf32, #tpu.memory_space<vmem>>, vector<24x32xf32>,
    %c5_i32 = arith.constant 5 : i32
    %282 = arith.cmpi eq, %arg1, %c5_i32 : i32
    %283 = arith.extui %282 : i1 to i32
    %c0_i32_97 = arith.constant 0 : i32
    %284 = arith.cmpi ne, %283, %c0_i32_97 : i32
    scf.if %284 {
      %285 = vector.extract_strided_slice %280 {offsets = [0, 0], sizes = [1, 32], strides = [1, 1]} : vector<24x32xf32> to vector<1x32xf32>
      %c0_98 = arith.constant 0 : index
      %c0_99 = arith.constant 0 : index
      %286 = vector.load %arg18[%c0_98, %c0_99] : memref<1x32xf32, #tpu.memory_space<vmem>>, vector<1x32xf32>
      %c0_100 = arith.constant 0 : index
      %c0_101 = arith.constant 0 : index
      %287 = vector.load %arg19[%c0_100, %c0_101] : memref<1x32xf32, #tpu.memory_space<vmem>>, vector<1x32xf32>
      %cst_102 = arith.constant dense<0.000000e+00> : vector<1xf32>
      %288 = vector.multi_reduction <add>, %285, %cst_102 [1] : vector<1x32xf32> to vector<1xf32>
      %289 = vector.shape_cast %288 : vector<1xf32> to vector<1x1xf32>
      %cst_103 = arith.constant 3.200000e+01 : f32
      %290 = vector.broadcast %cst_103 : f32 to vector<1x1xf32>
      %291 = arith.divf %289, %290 : vector<1x1xf32>
      %292 = vector.broadcast %291 : vector<1x1xf32> to vector<1x32xf32>
      %293 = arith.subf %285, %292 : vector<1x32xf32>
      %294 = arith.mulf %293, %293 : vector<1x32xf32>
      %cst_104 = arith.constant dense<0.000000e+00> : vector<1xf32>
      %295 = vector.multi_reduction <add>, %294, %cst_104 [1] : vector<1x32xf32> to vector<1xf32>
      %296 = vector.shape_cast %295 : vector<1xf32> to vector<1x1xf32>
      %cst_105 = arith.constant 3.200000e+01 : f32
      %297 = vector.broadcast %cst_105 : f32 to vector<1x1xf32>
      %298 = arith.divf %296, %297 : vector<1x1xf32>
      %299 = vector.broadcast %291 : vector<1x1xf32> to vector<1x32xf32>
      %300 = arith.subf %285, %299 : vector<1x32xf32>
      %cst_106 = arith.constant 9.99999974E-6 : f32
      %301 = vector.broadcast %cst_106 : f32 to vector<1x1xf32>
      %302 = arith.addf %298, %301 : vector<1x1xf32>
      %303 = math.rsqrt %302 : vector<1x1xf32>
      %304 = vector.broadcast %303 : vector<1x1xf32> to vector<1x32xf32>
      %305 = arith.mulf %300, %304 : vector<1x32xf32>
      %306 = arith.mulf %305, %286 : vector<1x32xf32>
      %307 = arith.addf %306, %287 : vector<1x32xf32>
      %308 = arith.truncf %307 : vector<1x32xf32> to vector<1x32xbf16>
      %c0_107 = arith.constant 0 : index
      %c0_108 = arith.constant 0 : index
      %309 = vector.load %arg20[%c0_107, %c0_108] : memref<32x128xbf16, #tpu.memory_space<vmem>>, vector<32x128xbf16>
      %cst_109 = arith.constant dense<0.000000e+00> : vector<1x128xf32>
      %310 = tpu.matmul %308, %309, %cst_109 {dimension_numbers = #tpu.dot_dimension_numbers<[1], [0], [0], [1], [0, 0, 1, 1], [], []>} : vector<1x32xbf16>, vector<32x128xbf16>, vector<1x128xf32> -> vector<1x128xf32>
      %cst_110 = arith.constant 0.000000e+00 : f32
      %311 = vector.broadcast %cst_110 : f32 to vector<7x128xf32>
      %312 = tpu.concatenate %310, %311 in 0 : vector<1x128xf32>, vector<7x128xf32> -> vector<8x128xf32>
      %c0_111 = arith.constant 0 : index
      %c0_112 = arith.constant 0 : index
      %c0_113 = arith.constant 0 : index
      %313 = vector.load %arg21[%c0_111, %c0_112, %c0_113] : memref<1x8x128xf32, #tpu.memory_space<vmem>>, vector<1x8x128xf32>
      %314 = vector.shape_cast %313 : vector<1x8x128xf32> to vector<8x128xf32>
      %315 = vector.shape_cast %312 : vector<8x128xf32> to vector<1x8x128xf32>
      tpu.vector_store %arg21[%c0_111, %c0_112, %c0_113], %315 {strides = array<i32>} : memref<1x8x128xf32, #tpu.memory_space<vmem>>, vector<1x8x128xf32>,
    } else {
    }
    return
  }
  func.func @transform_0(%arg0: i32, %arg1: i32) -> (i32, i32) {
    %c0_i32 = arith.constant 0 : i32
    %c0_i32_0 = arith.constant 0 : i32
    return %arg0, %c0_i32 : i32, i32
  }
  func.func @transform_1(%arg0: i32, %arg1: i32) -> (i32, i32) {
    %c0_i32 = arith.constant 0 : i32
    %c0_i32_0 = arith.constant 0 : i32
    %c0_i32_1 = arith.constant 0 : i32
    return %c0_i32, %c0_i32_0 : i32, i32
  }
  func.func @transform_2(%arg0: i32, %arg1: i32) -> (i32, i32) {
    %c0_i32 = arith.constant 0 : i32
    %c0_i32_0 = arith.constant 0 : i32
    %c0_i32_1 = arith.constant 0 : i32
    return %c0_i32, %c0_i32_0 : i32, i32
  }
  func.func @transform_3(%arg0: i32, %arg1: i32) -> (i32, i32) {
    %c0_i32 = arith.constant 0 : i32
    %c0_i32_0 = arith.constant 0 : i32
    %c0_i32_1 = arith.constant 0 : i32
    return %c0_i32, %c0_i32_0 : i32, i32
  }
  func.func @transform_4(%arg0: i32, %arg1: i32) -> (i32, i32, i32) {
    %c0_i32 = arith.constant 0 : i32
    %c0_i32_0 = arith.constant 0 : i32
    %c0_i32_1 = arith.constant 0 : i32
    return %arg1, %c0_i32, %c0_i32_0 : i32, i32, i32
  }
  func.func @transform_5(%arg0: i32, %arg1: i32) -> (i32, i32, i32) {
    %c0_i32 = arith.constant 0 : i32
    %c0_i32_0 = arith.constant 0 : i32
    %c0_i32_1 = arith.constant 0 : i32
    return %arg1, %c0_i32, %c0_i32_0 : i32, i32, i32
  }
  func.func @transform_6(%arg0: i32, %arg1: i32) -> (i32, i32, i32) {
    %c0_i32 = arith.constant 0 : i32
    %c0_i32_0 = arith.constant 0 : i32
    %c0_i32_1 = arith.constant 0 : i32
    return %arg1, %c0_i32, %c0_i32_0 : i32, i32, i32
  }
  func.func @transform_7(%arg0: i32, %arg1: i32) -> (i32, i32, i32) {
    %c0_i32 = arith.constant 0 : i32
    %c0_i32_0 = arith.constant 0 : i32
    %c0_i32_1 = arith.constant 0 : i32
    return %arg1, %c0_i32, %c0_i32_0 : i32, i32, i32
  }
  func.func @transform_8(%arg0: i32, %arg1: i32) -> (i32, i32, i32) {
    %c0_i32 = arith.constant 0 : i32
    %c0_i32_0 = arith.constant 0 : i32
    %c0_i32_1 = arith.constant 0 : i32
    return %arg1, %c0_i32, %c0_i32_0 : i32, i32, i32
  }
  func.func @transform_9(%arg0: i32, %arg1: i32) -> (i32, i32, i32) {
    %c0_i32 = arith.constant 0 : i32
    %c0_i32_0 = arith.constant 0 : i32
    %c0_i32_1 = arith.constant 0 : i32
    return %arg1, %c0_i32, %c0_i32_0 : i32, i32, i32
  }
  func.func @transform_10(%arg0: i32, %arg1: i32) -> (i32, i32, i32) {
    %c0_i32 = arith.constant 0 : i32
    %c0_i32_0 = arith.constant 0 : i32
    %c0_i32_1 = arith.constant 0 : i32
    return %arg1, %c0_i32, %c0_i32_0 : i32, i32, i32
  }
  func.func @transform_11(%arg0: i32, %arg1: i32) -> (i32, i32, i32) {
    %c0_i32 = arith.constant 0 : i32
    %c0_i32_0 = arith.constant 0 : i32
    %c0_i32_1 = arith.constant 0 : i32
    return %arg1, %c0_i32, %c0_i32_0 : i32, i32, i32
  }
  func.func @transform_12(%arg0: i32, %arg1: i32) -> (i32, i32, i32) {
    %c0_i32 = arith.constant 0 : i32
    %c0_i32_0 = arith.constant 0 : i32
    %c0_i32_1 = arith.constant 0 : i32
    return %arg1, %c0_i32, %c0_i32_0 : i32, i32, i32
  }
  func.func @transform_13(%arg0: i32, %arg1: i32) -> (i32, i32, i32) {
    %c0_i32 = arith.constant 0 : i32
    %c0_i32_0 = arith.constant 0 : i32
    %c0_i32_1 = arith.constant 0 : i32
    return %arg1, %c0_i32, %c0_i32_0 : i32, i32, i32
  }
  func.func @transform_14(%arg0: i32, %arg1: i32) -> (i32, i32, i32) {
    %c0_i32 = arith.constant 0 : i32
    %c0_i32_0 = arith.constant 0 : i32
    %c0_i32_1 = arith.constant 0 : i32
    return %arg1, %c0_i32, %c0_i32_0 : i32, i32, i32
  }
  func.func @transform_15(%arg0: i32, %arg1: i32) -> (i32, i32, i32) {
    %c0_i32 = arith.constant 0 : i32
    %c0_i32_0 = arith.constant 0 : i32
    %c0_i32_1 = arith.constant 0 : i32
    return %arg1, %c0_i32, %c0_i32_0 : i32, i32, i32
  }
  func.func @transform_16(%arg0: i32, %arg1: i32) -> (i32, i32) {
    %c0_i32 = arith.constant 0 : i32
    %c0_i32_0 = arith.constant 0 : i32
    %c0_i32_1 = arith.constant 0 : i32
    return %c0_i32, %c0_i32_0 : i32, i32
  }
  func.func @transform_17(%arg0: i32, %arg1: i32) -> (i32, i32) {
    %c0_i32 = arith.constant 0 : i32
    %c0_i32_0 = arith.constant 0 : i32
    %c0_i32_1 = arith.constant 0 : i32
    return %c0_i32, %c0_i32_0 : i32, i32
  }
  func.func @transform_18(%arg0: i32, %arg1: i32) -> (i32, i32) {
    %c0_i32 = arith.constant 0 : i32
    %c0_i32_0 = arith.constant 0 : i32
    %c0_i32_1 = arith.constant 0 : i32
    return %c0_i32, %c0_i32_0 : i32, i32
  }
  func.func @transform_19(%arg0: i32, %arg1: i32) -> (i32, i32, i32) {
    %c0_i32 = arith.constant 0 : i32
    %c0_i32_0 = arith.constant 0 : i32
    %c0_i32_1 = arith.constant 0 : i32
    return %arg0, %c0_i32, %c0_i32_0 : i32, i32, i32
  }
}

</mosaic_0001>

<llo_original>
// kernel: tpu_custom_call.1
$region0: #{tpu_custom_call.1}
  #allocation0 [shape = 'u32[]', space=smem, size = 0x4, offset = 0x4, fixed_abs, tag = 'smem constant byte address 0x4 - core index']
  #allocation1 [shape = 'u32[144,128]{1,0:T(1,128)}', space=vmem, size = 0x12000, scoped, tag = 'internal scratch']
  #allocation2 [shape = 'f32[24,32]{1,0:T(8,128)}', space=vmem, size = 0x3000, scoped, tag = 'scratch operand']
  %s0 = inlined_call_operand.hbm [shape: bf16[32,128], index: 0, kind: input, shape index: {}]
  %s1 = inlined_call_operand.vmem [shape: bf16[128,32], index: 1, kind: input, shape index: {}]
  %s2 = inlined_call_operand.vmem [shape: f32[1,32], index: 2, kind: input, shape index: {}]
  %s3 = inlined_call_operand.hbm [shape: f32[24,32], index: 3, kind: input, shape index: {}]
  %s4 = inlined_call_operand.hbm [shape: f32[6,1,32], index: 4, kind: input, shape index: {}]
  %s5 = inlined_call_operand.hbm [shape: f32[6,1,32], index: 5, kind: input, shape index: {}]
  %s6 = inlined_call_operand.vmem [shape: bf16[6,32,128], index: 6, kind: input, shape index: {}]
  %s7 = inlined_call_operand.hbm [shape: f32[6,1,128], index: 7, kind: input, shape index: {}]
  %s8 = inlined_call_operand.hbm [shape: bf16[6,32,32], index: 8, kind: input, shape index: {}]
  %s9 = inlined_call_operand.hbm [shape: f32[6,1,32], index: 9, kind: input, shape index: {}]
  %s10 = inlined_call_operand.hbm [shape: f32[6,1,32], index: 10, kind: input, shape index: {}]
  %s11 = inlined_call_operand.vmem [shape: f32[6,1,32], index: 11, kind: input, shape index: {}]
  %s12 = inlined_call_operand.hbm [shape: bf16[6,32,32], index: 12, kind: input, shape index: {}]
  %s13 = inlined_call_operand.vmem [shape: f32[6,1,32], index: 13, kind: input, shape index: {}]
  %s14 = inlined_call_operand.hbm [shape: bf16[6,32,32], index: 14, kind: input, shape index: {}]
  %s15 = inlined_call_operand.vmem [shape: f32[6,1,32], index: 15, kind: input, shape index: {}]
  %s16 = inlined_call_operand.vmem [shape: f32[1,32], index: 16, kind: input, shape index: {}]
  %s17 = inlined_call_operand.vmem [shape: f32[1,32], index: 17, kind: input, shape index: {}]
  %s18 = inlined_call_operand.vmem [shape: bf16[32,128], index: 18, kind: input, shape index: {}]
  %s19 = inlined_call_operand.hbm [shape: f32[2,8,128], index: 19, kind: output, shape index: {}]
  %s20 = sld [smem:[#allocation0]]
  $region157: #{tpu_custom_call.1} parent=0
    _
  %s22 = ssub.s32 1, %s20
  %s23 = scalar_select 0, %s22, %s20
  $region1: #{tpu_custom_call.1} parent=0
    #allocation3 [shape = 'u8[8192]{0}', space=vmem, size = 0x2000, scoped, tag = 'input window, operand 0']
    #allocation4 [shape = 's32[2]{0}', space=sflag, size = 0x8, scoped, tag = 'scoped memory for tpu_custom_call.1']
    #allocation5 [shape = 's32[2]{0}', space=sflag, size = 0x8, scoped, tag = 'scoped memory for tpu_custom_call.1']
    #allocation6 [shape = 'u8[12288]{0}', space=vmem, size = 0x3000, scoped, tag = 'input window, operand 3, single buffered']
    #allocation7 [shape = 's32[1]{0}', space=sflag, size = 0x4, scoped, tag = 'scoped memory for tpu_custom_call.1']
    #allocation8 [shape = 'u8[1024]{0}', space=vmem, size = 0x400, scoped, tag = 'input window, operand 4']
    #allocation9 [shape = 'u8[1024]{0}', space=vmem, size = 0x400, scoped, tag = 'input window, operand 5']
    #allocation10 [shape = 'u8[1024]{0}', space=vmem, size = 0x400, scoped, tag = 'input window, operand 7']
    #allocation11 [shape = 'u8[16384]{0}', space=vmem, size = 0x4000, scoped, tag = 'input window, operand 8']
    #allocation12 [shape = 'u8[1024]{0}', space=vmem, size = 0x400, scoped, tag = 'input window, operand 9']
    #allocation13 [shape = 'u8[1024]{0}', space=vmem, size = 0x400, scoped, tag = 'input window, operand 10']
    #allocation14 [shape = 'u8[16384]{0}', space=vmem, size = 0x4000, scoped, tag = 'input window, operand 12']
    #allocation15 [shape = 'u8[16384]{0}', space=vmem, size = 0x4000, scoped, tag = 'input window, operand 14']
    #allocation16 [shape = 'u8[8192]{0}', space=vmem, size = 0x2000, scoped, tag = 'output window, operand 0']
    %24 = vsyncpa [#allocation4], 0
    %s25 = scalar_lea.sflag [#allocation4], 1
    %26 = vsyncpa %s25, 0
    %27 = vsyncpa [#allocation7], 0
    %28 = vsyncpa [#allocation5], 0
    %s29 = scalar_lea.sflag [#allocation5], 1
    %30 = vsyncpa %s29, 0
    loop: start=0, step=1, limit=14
    $region2: #{tpu_custom_call.1} parent=1 // loop_pre_header
      _
    $region3: #{tpu_custom_call.1} parent=1 // loop_header
      %s32 = sphi 0, %s36
      %p33 = scmp.ge.s32.totalorder %s32, 14
      %s39 = sphi 0, %s51
      %s40 = sphi 0, %s47
      %s41 = sphi 0, %s39
      %s42 = sphi 0, %s40
      %s43 = sphi 0, %s41
      %s44 = sphi 0, %s42
      %s54 = sphi 0, %s56
      %s57 = sphi 0, %s54
      %s58 = sphi 0, %s57
      %s74 = sphi 0, %s58
      %s78 = sphi 0, %s78
      %s80 = sphi 0, %s78
      %s81 = sphi 0, %s80
      %s95 = sphi 0, %s81
      %s99 = sphi 0, %s99
      %s101 = sphi 0, %s99
      %s102 = sphi 0, %s101
      %s116 = sphi 0, %s102
      %s120 = sphi 0, %s120
      %s122 = sphi 0, %s120
      %s123 = sphi 0, %s122
      %s137 = sphi 0, %s123
      %s143 = sphi 0, %s145
      %s146 = sphi 0, %s143
      %s147 = sphi 0, %s146
      %s163 = sphi 0, %s147
      %s169 = sphi 0, %s171
      %s172 = sphi 0, %s169
      %s173 = sphi 0, %s172
      %s189 = sphi 0, %s173
      %s195 = sphi 0, %s197
      %s198 = sphi 0, %s195
      %s199 = sphi 0, %s198
      %s215 = sphi 0, %s199
      %s221 = sphi 0, %s223
      %s224 = sphi 0, %s221
      %s225 = sphi 0, %s224
      %s241 = sphi 0, %s225
      %s247 = sphi 0, %s249
      %s250 = sphi 0, %s247
      %s251 = sphi 0, %s250
      %s267 = sphi 0, %s251
      %s273 = sphi 0, %s275
      %s276 = sphi 0, %s273
      %s277 = sphi 0, %s276
      %s293 = sphi 0, %s277
      %s299 = sphi 0, %s301
      %s302 = sphi 0, %s299
      %s303 = sphi 0, %s302
      %s319 = sphi 0, %s303
      %s325 = sphi 0, %s327
      %s328 = sphi 0, %s325
      %s329 = sphi 0, %s328
      %s345 = sphi 0, %s329
      %s351 = sphi 0, %s353
      %s354 = sphi 0, %s351
      %s355 = sphi 0, %s354
      %s371 = sphi 0, %s355
      %s377 = sphi 0, %s379
      %s380 = sphi 0, %s377
      %s381 = sphi 0, %s380
      %s397 = sphi 0, %s381
      %s403 = sphi 0, %s405
      %s406 = sphi 0, %s403
      %s407 = sphi 0, %s406
      %s423 = sphi 0, %s407
      %s429 = sphi 0, %s431
      %s432 = sphi 0, %s429
      %s433 = sphi 0, %s432
      %s449 = sphi 0, %s433
      %s453 = sphi 0, %s453
      %s455 = sphi 0, %s453
      %s456 = sphi 0, %s455
      %s470 = sphi 0, %s456
      %s474 = sphi 0, %s474
      %s476 = sphi 0, %s474
      %s477 = sphi 0, %s476
      %s491 = sphi 0, %s477
      %s495 = sphi 0, %s495
      %s497 = sphi 0, %s495
      %s498 = sphi 0, %s497
      %s512 = sphi 0, %s498
      %s518 = sphi 0, %s520
      %s521 = sphi 0, %s518
      %s522 = sphi 0, %s521
      %s538 = sphi 0, %s522
    $region4: #{tpu_custom_call.1} parent=1 // loop_header_branch
      %35 = sbr.rel (%p33) target = $region8
    $region5: #{tpu_custom_call.1} parent=1 // loop_body
      %s37 = ssub.s32 %s32, 1
      %s38 = ssub.s32 %s32, 2
      %s45 = sadd.s32 1, %s40
      %p46 = scmp.ge.s32.totalorder %s45, 6
      %s47 = scalar_select %p46, 0, %s45
      %s48 = sadd.s32 1, %s39
      %s49 = scalar_select %p46, %s48, %s39
      %p50 = scmp.ge.s32.totalorder %s49, 2
      %s51 = scalar_select %p50, 0, %s49
      %s52 = ssub.s32 %s39, %s51
      %p53 = scmp.eq.s32.totalorder %s52, 0
      %s55 = sadd.s32 %s54, 1
      %s56 = scalar_select %p53, %s54, %s55
      %p59 = pneg %p53
      %p60 = scmp.eq.s32.totalorder %s32, 11
      %p61 = por %p59, %p60
      %p62 = scmp.ne.s32.totalorder %s54, %s57
      %p63 = scmp.eq.s32.totalorder %s32, 0
      %p64 = por %p62, %p63
      %p65 = scmp.ne.s32.totalorder %s54, %s57
      %p66 = scmp.eq.s32.totalorder %s37, 11
      %p67 = por %p65, %p66
      %p68 = scmp.ne.s32.totalorder %s57, %s58
      %p69 = scmp.eq.s32.totalorder %s37, 0
      %p70 = por %p68, %p69
      %p71 = scmp.ne.s32.totalorder %s57, %s58
      %p72 = scmp.eq.s32.totalorder %s38, 11
      %p73 = por %p71, %p72
      %p75 = scmp.ne.s32.totalorder %s58, %s74
      %p76 = scmp.eq.s32.totalorder %s38, 0
      %p77 = por %p75, %p76
      %s79 = sadd.s32 %s78, 1
      %p82 = scmp.eq.s32.totalorder %s32, 11
      %p83 = scmp.ne.s32.totalorder %s78, %s80
      %p84 = scmp.eq.s32.totalorder %s32, 0
      %p85 = por %p83, %p84
      %p86 = scmp.ne.s32.totalorder %s78, %s80
      %p87 = scmp.eq.s32.totalorder %s37, 11
      %p88 = por %p86, %p87
      %p89 = scmp.ne.s32.totalorder %s80, %s81
      %p90 = scmp.eq.s32.totalorder %s37, 0
      %p91 = por %p89, %p90
      %p92 = scmp.ne.s32.totalorder %s80, %s81
      %p93 = scmp.eq.s32.totalorder %s38, 11
      %p94 = por %p92, %p93
      %p96 = scmp.ne.s32.totalorder %s81, %s95
      %p97 = scmp.eq.s32.totalorder %s38, 0
      %p98 = por %p96, %p97
      %s100 = sadd.s32 %s99, 1
      %p103 = scmp.eq.s32.totalorder %s32, 11
      %p104 = scmp.ne.s32.totalorder %s99, %s101
      %p105 = scmp.eq.s32.totalorder %s32, 0
      %p106 = por %p104, %p105
      %p107 = scmp.ne.s32.totalorder %s99, %s101
      %p108 = scmp.eq.s32.totalorder %s37, 11
      %p109 = por %p107, %p108
      %p110 = scmp.ne.s32.totalorder %s101, %s102
      %p111 = scmp.eq.s32.totalorder %s37, 0
      %p112 = por %p110, %p111
      %p113 = scmp.ne.s32.totalorder %s101, %s102
      %p114 = scmp.eq.s32.totalorder %s38, 11
      %p115 = por %p113, %p114
      %p117 = scmp.ne.s32.totalorder %s102, %s116
      %p118 = scmp.eq.s32.totalorder %s38, 0
      %p119 = por %p117, %p118
      %s121 = sadd.s32 %s120, 1
      %p124 = scmp.eq.s32.totalorder %s32, 11
      %p125 = scmp.ne.s32.totalorder %s120, %s122
      %p126 = scmp.eq.s32.totalorder %s32, 0
      %p127 = por %p125, %p126
      %p128 = scmp.ne.s32.totalorder %s120, %s122
      %p129 = scmp.eq.s32.totalorder %s37, 11
      %p130 = por %p128, %p129
      %p131 = scmp.ne.s32.totalorder %s122, %s123
      %p132 = scmp.eq.s32.totalorder %s37, 0
      %p133 = por %p131, %p132
      %p134 = scmp.ne.s32.totalorder %s122, %s123
      %p135 = scmp.eq.s32.totalorder %s38, 11
      %p136 = por %p134, %p135
      %p138 = scmp.ne.s32.totalorder %s123, %s137
      %p139 = scmp.eq.s32.totalorder %s38, 0
      %p140 = por %p138, %p139
      %s141 = ssub.s32 %s40, %s47
      %p142 = scmp.eq.s32.totalorder %s141, 0
      %s144 = sadd.s32 %s143, 1
      %s145 = scalar_select %p142, %s143, %s144
      %p148 = pneg %p142
      %p149 = scmp.eq.s32.totalorder %s32, 11
      %p150 = por %p148, %p149
      %p151 = scmp.ne.s32.totalorder %s143, %s146
      %p152 = scmp.eq.s32.totalorder %s32, 0
      %p153 = por %p151, %p152
      %p154 = scmp.ne.s32.totalorder %s143, %s146
      %p155 = scmp.eq.s32.totalorder %s37, 11
      %p156 = por %p154, %p155
      %p157 = scmp.ne.s32.totalorder %s146, %s147
      %p158 = scmp.eq.s32.totalorder %s37, 0
      %p159 = por %p157, %p158
      %p160 = scmp.ne.s32.totalorder %s146, %s147
      %p161 = scmp.eq.s32.totalorder %s38, 11
      %p162 = por %p160, %p161
      %p164 = scmp.ne.s32.totalorder %s147, %s163
      %p165 = scmp.eq.s32.totalorder %s38, 0
      %p166 = por %p164, %p165
      %s167 = ssub.s32 %s40, %s47
      %p168 = scmp.eq.s32.totalorder %s167, 0
      %s170 = sadd.s32 %s169, 1
      %s171 = scalar_select %p168, %s169, %s170
      %p174 = pneg %p168
      %p175 = scmp.eq.s32.totalorder %s32, 11
      %p176 = por %p174, %p175
      %p177 = scmp.ne.s32.totalorder %s169, %s172
      %p178 = scmp.eq.s32.totalorder %s32, 0
      %p179 = por %p177, %p178
      %p180 = scmp.ne.s32.totalorder %s169, %s172
      %p181 = scmp.eq.s32.totalorder %s37, 11
      %p182 = por %p180, %p181
      %p183 = scmp.ne.s32.totalorder %s172, %s173
      %p184 = scmp.eq.s32.totalorder %s37, 0
      %p185 = por %p183, %p184
      %p186 = scmp.ne.s32.totalorder %s172, %s173
      %p187 = scmp.eq.s32.totalorder %s38, 11
      %p188 = por %p186, %p187
      %p190 = scmp.ne.s32.totalorder %s173, %s189
      %p191 = scmp.eq.s32.totalorder %s38, 0
      %p192 = por %p190, %p191
      %s193 = ssub.s32 %s40, %s47
      %p194 = scmp.eq.s32.totalorder %s193, 0
      %s196 = sadd.s32 %s195, 1
      %s197 = scalar_select %p194, %s195, %s196
      %p200 = pneg %p194
      %p201 = scmp.eq.s32.totalorder %s32, 11
      %p202 = por %p200, %p201
      %p203 = scmp.ne.s32.totalorder %s195, %s198
      %p204 = scmp.eq.s32.totalorder %s32, 0
      %p205 = por %p203, %p204
      %p206 = scmp.ne.s32.totalorder %s195, %s198
      %p207 = scmp.eq.s32.totalorder %s37, 11
      %p208 = por %p206, %p207
      %p209 = scmp.ne.s32.totalorder %s198, %s199
      %p210 = scmp.eq.s32.totalorder %s37, 0
      %p211 = por %p209, %p210
      %p212 = scmp.ne.s32.totalorder %s198, %s199
      %p213 = scmp.eq.s32.totalorder %s38, 11
      %p214 = por %p212, %p213
      %p216 = scmp.ne.s32.totalorder %s199, %s215
      %p217 = scmp.eq.s32.totalorder %s38, 0
      %p218 = por %p216, %p217
      %s219 = ssub.s32 %s40, %s47
      %p220 = scmp.eq.s32.totalorder %s219, 0
      %s222 = sadd.s32 %s221, 1
      %s223 = scalar_select %p220, %s221, %s222
      %p226 = pneg %p220
      %p227 = scmp.eq.s32.totalorder %s32, 11
      %p228 = por %p226, %p227
      %p229 = scmp.ne.s32.totalorder %s221, %s224
      %p230 = scmp.eq.s32.totalorder %s32, 0
      %p231 = por %p229, %p230
      %p232 = scmp.ne.s32.totalorder %s221, %s224
      %p233 = scmp.eq.s32.totalorder %s37, 11
      %p234 = por %p232, %p233
      %p235 = scmp.ne.s32.totalorder %s224, %s225
      %p236 = scmp.eq.s32.totalorder %s37, 0
      %p237 = por %p235, %p236
      %p238 = scmp.ne.s32.totalorder %s224, %s225
      %p239 = scmp.eq.s32.totalorder %s38, 11
      %p240 = por %p238, %p239
      %p242 = scmp.ne.s32.totalorder %s225, %s241
      %p243 = scmp.eq.s32.totalorder %s38, 0
      %p244 = por %p242, %p243
      %s245 = ssub.s32 %s40, %s47
      %p246 = scmp.eq.s32.totalorder %s245, 0
      %s248 = sadd.s32 %s247, 1
      %s249 = scalar_select %p246, %s247, %s248
      %p252 = pneg %p246
      %p253 = scmp.eq.s32.totalorder %s32, 11
      %p254 = por %p252, %p253
      %p255 = scmp.ne.s32.totalorder %s247, %s250
      %p256 = scmp.eq.s32.totalorder %s32, 0
      %p257 = por %p255, %p256
      %p258 = scmp.ne.s32.totalorder %s247, %s250
      %p259 = scmp.eq.s32.totalorder %s37, 11
      %p260 = por %p258, %p259
      %p261 = scmp.ne.s32.totalorder %s250, %s251
      %p262 = scmp.eq.s32.totalorder %s37, 0
      %p263 = por %p261, %p262
      %p264 = scmp.ne.s32.totalorder %s250, %s251
      %p265 = scmp.eq.s32.totalorder %s38, 11
      %p266 = por %p264, %p265
      %p268 = scmp.ne.s32.totalorder %s251, %s267
      %p269 = scmp.eq.s32.totalorder %s38, 0
      %p270 = por %p268, %p269
      %s271 = ssub.s32 %s40, %s47
      %p272 = scmp.eq.s32.totalorder %s271, 0
      %s274 = sadd.s32 %s273, 1
      %s275 = scalar_select %p272, %s273, %s274
      %p278 = pneg %p272
      %p279 = scmp.eq.s32.totalorder %s32, 11
      %p280 = por %p278, %p279
      %p281 = scmp.ne.s32.totalorder %s273, %s276
      %p282 = scmp.eq.s32.totalorder %s32, 0
      %p283 = por %p281, %p282
      %p284 = scmp.ne.s32.totalorder %s273, %s276
      %p285 = scmp.eq.s32.totalorder %s37, 11
      %p286 = por %p284, %p285
      %p287 = scmp.ne.s32.totalorder %s276, %s277
      %p288 = scmp.eq.s32.totalorder %s37, 0
      %p289 = por %p287, %p288
      %p290 = scmp.ne.s32.totalorder %s276, %s277
      %p291 = scmp.eq.s32.totalorder %s38, 11
      %p292 = por %p290, %p291
      %p294 = scmp.ne.s32.totalorder %s277, %s293
      %p295 = scmp.eq.s32.totalorder %s38, 0
      %p296 = por %p294, %p295
      %s297 = ssub.s32 %s40, %s47
      %p298 = scmp.eq.s32.totalorder %s297, 0
      %s300 = sadd.s32 %s299, 1
      %s301 = scalar_select %p298, %s299, %s300
      %p304 = pneg %p298
      %p305 = scmp.eq.s32.totalorder %s32, 11
      %p306 = por %p304, %p305
      %p307 = scmp.ne.s32.totalorder %s299, %s302
      %p308 = scmp.eq.s32.totalorder %s32, 0
      %p309 = por %p307, %p308
      %p310 = scmp.ne.s32.totalorder %s299, %s302
      %p311 = scmp.eq.s32.totalorder %s37, 11
      %p312 = por %p310, %p311
      %p313 = scmp.ne.s32.totalorder %s302, %s303
      %p314 = scmp.eq.s32.totalorder %s37, 0
      %p315 = por %p313, %p314
      %p316 = scmp.ne.s32.totalorder %s302, %s303
      %p317 = scmp.eq.s32.totalorder %s38, 11
      %p318 = por %p316, %p317
      %p320 = scmp.ne.s32.totalorder %s303, %s319
      %p321 = scmp.eq.s32.totalorder %s38, 0
      %p322 = por %p320, %p321
      %s323 = ssub.s32 %s40, %s47
      %p324 = scmp.eq.s32.totalorder %s323, 0
      %s326 = sadd.s32 %s325, 1
      %s327 = scalar_select %p324, %s325, %s326
      %p330 = pneg %p324
      %p331 = scmp.eq.s32.totalorder %s32, 11
      %p332 = por %p330, %p331
      %p333 = scmp.ne.s32.totalorder %s325, %s328
      %p334 = scmp.eq.s32.totalorder %s32, 0
      %p335 = por %p333, %p334
      %p336 = scmp.ne.s32.totalorder %s325, %s328
      %p337 = scmp.eq.s32.totalorder %s37, 11
      %p338 = por %p336, %p337
      %p339 = scmp.ne.s32.totalorder %s328, %s329
      %p340 = scmp.eq.s32.totalorder %s37, 0
      %p341 = por %p339, %p340
      %p342 = scmp.ne.s32.totalorder %s328, %s329
      %p343 = scmp.eq.s32.totalorder %s38, 11
      %p344 = por %p342, %p343
      %p346 = scmp.ne.s32.totalorder %s329, %s345
      %p347 = scmp.eq.s32.totalorder %s38, 0
      %p348 = por %p346, %p347
      %s349 = ssub.s32 %s40, %s47
      %p350 = scmp.eq.s32.totalorder %s349, 0
      %s352 = sadd.s32 %s351, 1
      %s353 = scalar_select %p350, %s351, %s352
      %p356 = pneg %p350
      %p357 = scmp.eq.s32.totalorder %s32, 11
      %p358 = por %p356, %p357
      %p359 = scmp.ne.s32.totalorder %s351, %s354
      %p360 = scmp.eq.s32.totalorder %s32, 0
      %p361 = por %p359, %p360
      %p362 = scmp.ne.s32.totalorder %s351, %s354
      %p363 = scmp.eq.s32.totalorder %s37, 11
      %p364 = por %p362, %p363
      %p365 = scmp.ne.s32.totalorder %s354, %s355
      %p366 = scmp.eq.s32.totalorder %s37, 0
      %p367 = por %p365, %p366
      %p368 = scmp.ne.s32.totalorder %s354, %s355
      %p369 = scmp.eq.s32.totalorder %s38, 11
      %p370 = por %p368, %p369
      %p372 = scmp.ne.s32.totalorder %s355, %s371
      %p373 = scmp.eq.s32.totalorder %s38, 0
      %p374 = por %p372, %p373
      %s375 = ssub.s32 %s40, %s47
      %p376 = scmp.eq.s32.totalorder %s375, 0
      %s378 = sadd.s32 %s377, 1
      %s379 = scalar_select %p376, %s377, %s378
      %p382 = pneg %p376
      %p383 = scmp.eq.s32.totalorder %s32, 11
      %p384 = por %p382, %p383
      %p385 = scmp.ne.s32.totalorder %s377, %s380
      %p386 = scmp.eq.s32.totalorder %s32, 0
      %p387 = por %p385, %p386
      %p388 = scmp.ne.s32.totalorder %s377, %s380
      %p389 = scmp.eq.s32.totalorder %s37, 11
      %p390 = por %p388, %p389
      %p391 = scmp.ne.s32.totalorder %s380, %s381
      %p392 = scmp.eq.s32.totalorder %s37, 0
      %p393 = por %p391, %p392
      %p394 = scmp.ne.s32.totalorder %s380, %s381
      %p395 = scmp.eq.s32.totalorder %s38, 11
      %p396 = por %p394, %p395
      %p398 = scmp.ne.s32.totalorder %s381, %s397
      %p399 = scmp.eq.s32.totalorder %s38, 0
      %p400 = por %p398, %p399
      %s401 = ssub.s32 %s40, %s47
      %p402 = scmp.eq.s32.totalorder %s401, 0
      %s404 = sadd.s32 %s403, 1
      %s405 = scalar_select %p402, %s403, %s404
      %p408 = pneg %p402
      %p409 = scmp.eq.s32.totalorder %s32, 11
      %p410 = por %p408, %p409
      %p411 = scmp.ne.s32.totalorder %s403, %s406
      %p412 = scmp.eq.s32.totalorder %s32, 0
      %p413 = por %p411, %p412
      %p414 = scmp.ne.s32.totalorder %s403, %s406
      %p415 = scmp.eq.s32.totalorder %s37, 11
      %p416 = por %p414, %p415
      %p417 = scmp.ne.s32.totalorder %s406, %s407
      %p418 = scmp.eq.s32.totalorder %s37, 0
      %p419 = por %p417, %p418
      %p420 = scmp.ne.s32.totalorder %s406, %s407
      %p421 = scmp.eq.s32.totalorder %s38, 11
      %p422 = por %p420, %p421
      %p424 = scmp.ne.s32.totalorder %s407, %s423
      %p425 = scmp.eq.s32.totalorder %s38, 0
      %p426 = por %p424, %p425
      %s427 = ssub.s32 %s40, %s47
      %p428 = scmp.eq.s32.totalorder %s427, 0
      %s430 = sadd.s32 %s429, 1
      %s431 = scalar_select %p428, %s429, %s430
      %p434 = pneg %p428
      %p435 = scmp.eq.s32.totalorder %s32, 11
      %p436 = por %p434, %p435
      %p437 = scmp.ne.s32.totalorder %s429, %s432
      %p438 = scmp.eq.s32.totalorder %s32, 0
      %p439 = por %p437, %p438
      %p440 = scmp.ne.s32.totalorder %s429, %s432
      %p441 = scmp.eq.s32.totalorder %s37, 11
      %p442 = por %p440, %p441
      %p443 = scmp.ne.s32.totalorder %s432, %s433
      %p444 = scmp.eq.s32.totalorder %s37, 0
      %p445 = por %p443, %p444
      %p446 = scmp.ne.s32.totalorder %s432, %s433
      %p447 = scmp.eq.s32.totalorder %s38, 11
      %p448 = por %p446, %p447
      %p450 = scmp.ne.s32.totalorder %s433, %s449
      %p451 = scmp.eq.s32.totalorder %s38, 0
      %p452 = por %p450, %p451
      %s454 = sadd.s32 %s453, 1
      %p457 = scmp.eq.s32.totalorder %s32, 11
      %p458 = scmp.ne.s32.totalorder %s453, %s455
      %p459 = scmp.eq.s32.totalorder %s32, 0
      %p460 = por %p458, %p459
      %p461 = scmp.ne.s32.totalorder %s453, %s455
      %p462 = scmp.eq.s32.totalorder %s37, 11
      %p463 = por %p461, %p462
      %p464 = scmp.ne.s32.totalorder %s455, %s456
      %p465 = scmp.eq.s32.totalorder %s37, 0
      %p466 = por %p464, %p465
      %p467 = scmp.ne.s32.totalorder %s455, %s456
      %p468 = scmp.eq.s32.totalorder %s38, 11
      %p469 = por %p467, %p468
      %p471 = scmp.ne.s32.totalorder %s456, %s470
      %p472 = scmp.eq.s32.totalorder %s38, 0
      %p473 = por %p471, %p472
      %s475 = sadd.s32 %s474, 1
      %p478 = scmp.eq.s32.totalorder %s32, 11
      %p479 = scmp.ne.s32.totalorder %s474, %s476
      %p480 = scmp.eq.s32.totalorder %s32, 0
      %p481 = por %p479, %p480
      %p482 = scmp.ne.s32.totalorder %s474, %s476
      %p483 = scmp.eq.s32.totalorder %s37, 11
      %p484 = por %p482, %p483
      %p485 = scmp.ne.s32.totalorder %s476, %s477
      %p486 = scmp.eq.s32.totalorder %s37, 0
      %p487 = por %p485, %p486
      %p488 = scmp.ne.s32.totalorder %s476, %s477
      %p489 = scmp.eq.s32.totalorder %s38, 11
      %p490 = por %p488, %p489
      %p492 = scmp.ne.s32.totalorder %s477, %s491
      %p493 = scmp.eq.s32.totalorder %s38, 0
      %p494 = por %p492, %p493
      %s496 = sadd.s32 %s495, 1
      %p499 = scmp.eq.s32.totalorder %s32, 11
      %p500 = scmp.ne.s32.totalorder %s495, %s497
      %p501 = scmp.eq.s32.totalorder %s32, 0
      %p502 = por %p500, %p501
      %p503 = scmp.ne.s32.totalorder %s495, %s497
      %p504 = scmp.eq.s32.totalorder %s37, 11
      %p505 = por %p503, %p504
      %p506 = scmp.ne.s32.totalorder %s497, %s498
      %p507 = scmp.eq.s32.totalorder %s37, 0
      %p508 = por %p506, %p507
      %p509 = scmp.ne.s32.totalorder %s497, %s498
      %p510 = scmp.eq.s32.totalorder %s38, 11
      %p511 = por %p509, %p510
      %p513 = scmp.ne.s32.totalorder %s498, %s512
      %p514 = scmp.eq.s32.totalorder %s38, 0
      %p515 = por %p513, %p514
      %s516 = ssub.s32 %s39, %s51
      %p517 = scmp.eq.s32.totalorder %s516, 0
      %s519 = sadd.s32 %s518, 1
      %s520 = scalar_select %p517, %s518, %s519
      %p523 = pneg %p517
      %p524 = scmp.eq.s32.totalorder %s32, 11
      %p525 = por %p523, %p524
      %p526 = scmp.ne.s32.totalorder %s518, %s521
      %p527 = scmp.eq.s32.totalorder %s32, 0
      %p528 = por %p526, %p527
      %p529 = scmp.ne.s32.totalorder %s518, %s521
      %p530 = scmp.eq.s32.totalorder %s37, 11
      %p531 = por %p529, %p530
      %p532 = scmp.ne.s32.totalorder %s521, %s522
      %p533 = scmp.eq.s32.totalorder %s37, 0
      %p534 = por %p532, %p533
      %p535 = scmp.ne.s32.totalorder %s521, %s522
      %p536 = scmp.eq.s32.totalorder %s38, 11
      %p537 = por %p535, %p536
      %p539 = scmp.ne.s32.totalorder %s522, %s538
      %p540 = scmp.eq.s32.totalorder %s38, 0
      %p541 = por %p539, %p540
      %p542 = scmp.le.s32.totalorder 1, %s32
      %p543 = scmp.lt.s32.totalorder %s32, 13
      %p544 = pnand %p542, %p543
      %p545 = pneg %p544
      // Predicated region
      $region9: #{tpu_custom_call.1} parent=5 // pred_check
        _
      $region10: #{tpu_custom_call.1} parent=5 // pred_check_branch
        %547 = sbr.rel (%p544) target = $region12
      $region11: #{tpu_custom_call.1} parent=5 // pred_region
        %s548 = ssub.s32 %s32, 1
        // Predicated region
        $region13: #{tpu_custom_call.1} parent=11 // pred_check
          %p549 = pneg %p91
        $region14: #{tpu_custom_call.1} parent=11 // pred_check_branch
          %551 = sbr.rel (%p549) target = $region16
        $region15: #{tpu_custom_call.1} parent=11 // pred_region
          _
        $region16: #{tpu_custom_call.1} parent=11 // pred_fallthru
          _
        // Predicated region
        $region17: #{tpu_custom_call.1} parent=11 // pred_check
          %p552 = pneg %p112
        $region18: #{tpu_custom_call.1} parent=11 // pred_check_branch
          %554 = sbr.rel (%p552) target = $region20
        $region19: #{tpu_custom_call.1} parent=11 // pred_region
          _
        $region20: #{tpu_custom_call.1} parent=11 // pred_fallthru
          _
        // Predicated region
        $region21: #{tpu_custom_call.1} parent=11 // pred_check
          %p555 = pneg %p133
        $region22: #{tpu_custom_call.1} parent=11 // pred_check_branch
          %557 = sbr.rel (%p555) target = $region24
        $region23: #{tpu_custom_call.1} parent=11 // pred_region
          %s559 = ssub.s32 384, 384
          %560 = vsyncadd [#allocation7], %s559
          %s561 = sshll.u32 [#allocation6], 4
          %s562 = int_to_ptr.vmem [resolvable:$true] %s561
          %567 = dma.hbm_to_vmem [thread:$0]  %s3, 384, %s562, [#allocation7], 128, 128, 8
        $region24: #{tpu_custom_call.1} parent=11 // pred_fallthru
          _
        // Predicated region
        $region25: #{tpu_custom_call.1} parent=11 // pred_check
          %p568 = pneg %p466
        $region26: #{tpu_custom_call.1} parent=11 // pred_check_branch
          %570 = sbr.rel (%p568) target = $region28
        $region27: #{tpu_custom_call.1} parent=11 // pred_region
          _
        $region28: #{tpu_custom_call.1} parent=11 // pred_fallthru
          _
        // Predicated region
        $region29: #{tpu_custom_call.1} parent=11 // pred_check
          %p571 = pneg %p487
        $region30: #{tpu_custom_call.1} parent=11 // pred_check_branch
          %573 = sbr.rel (%p571) target = $region32
        $region31: #{tpu_custom_call.1} parent=11 // pred_region
          _
        $region32: #{tpu_custom_call.1} parent=11 // pred_fallthru
          _
        // Predicated region
        $region33: #{tpu_custom_call.1} parent=11 // pred_check
          %p574 = pneg %p508
        $region34: #{tpu_custom_call.1} parent=11 // pred_check_branch
          %576 = sbr.rel (%p574) target = $region36
        $region35: #{tpu_custom_call.1} parent=11 // pred_region
          _
        $region36: #{tpu_custom_call.1} parent=11 // pred_fallthru
          _
      $region12: #{tpu_custom_call.1} parent=5 // pred_fallthru
        _
      %p577 = scmp.lt.s32.totalorder %s32, 12
      // Predicated region
      $region37: #{tpu_custom_call.1} parent=5 // pred_check
        %p578 = pneg %p577
      $region38: #{tpu_custom_call.1} parent=5 // pred_check_branch
        %580 = sbr.rel (%p578) target = $region40
      $region39: #{tpu_custom_call.1} parent=5 // pred_region
        // Predicated region
        $region41: #{tpu_custom_call.1} parent=39 // pred_check
          %p581 = pneg %p64
        $region42: #{tpu_custom_call.1} parent=39 // pred_check_branch
          %583 = sbr.rel (%p581) target = $region44
        $region43: #{tpu_custom_call.1} parent=39 // pred_region
          %s584 = sand.u32 %s32, 1
          %s585 = scalar_lea.sflag [#allocation4], %s584
          %s586 = sand.u32 %s54, 1
          %s587 = smul.addr %s586, 8
          %s588 = scalar_lea.vmem [#allocation3], %s587
          %s589 = smul.u32 2, %s39
          %s591 = ssub.s32 128, 128
          %592 = vsyncadd %s585, %s591
          %s593 = smul.addr %s589, 64
          %s594 = scalar_lea.hbm %s0, %s593
          %s595 = sshll.u32 %s588, 4
          %s596 = int_to_ptr.vmem [resolvable:$true] %s595
          %601 = dma.hbm_to_vmem [thread:$0]  %s594, 128, %s596, %s585, 64, 64, 4
        $region44: #{tpu_custom_call.1} parent=39 // pred_fallthru
          _
        // Predicated region
        $region45: #{tpu_custom_call.1} parent=39 // pred_check
          %p602 = pneg %p153
        $region46: #{tpu_custom_call.1} parent=39 // pred_check_branch
          %604 = sbr.rel (%p602) target = $region48
        $region47: #{tpu_custom_call.1} parent=39 // pred_region
          %s605 = sand.u32 %s32, 1
          %s606 = scalar_lea.sflag [#allocation4], %s605
          %s607 = sand.u32 %s143, 1
          %s608 = scalar_lea.vmem [#allocation8], %s607
          %s610 = ssub.s32 16, 16
          %611 = vsyncadd %s606, %s610
          %s612 = smul.addr %s40, 16
          %s613 = scalar_lea.hbm %s4, %s612
          %s615 = sshll.u32 %s608, 4
          %s616 = int_to_ptr.vmem [resolvable:$true] %s615
          %618 = dma.hbm_to_vmem [thread:$0]  %s613, 16, %s616, %s606
        $region48: #{tpu_custom_call.1} parent=39 // pred_fallthru
          _
        // Predicated region
        $region49: #{tpu_custom_call.1} parent=39 // pred_check
          %p619 = pneg %p179
        $region50: #{tpu_custom_call.1} parent=39 // pred_check_branch
          %621 = sbr.rel (%p619) target = $region52
        $region51: #{tpu_custom_call.1} parent=39 // pred_region
          %s622 = sand.u32 %s32, 1
          %s623 = scalar_lea.sflag [#allocation4], %s622
          %s624 = sand.u32 %s169, 1
          %s625 = scalar_lea.vmem [#allocation9], %s624
          %s627 = ssub.s32 16, 16
          %628 = vsyncadd %s623, %s627
          %s629 = smul.addr %s40, 16
          %s630 = scalar_lea.hbm %s5, %s629
          %s632 = sshll.u32 %s625, 4
          %s633 = int_to_ptr.vmem [resolvable:$true] %s632
          %635 = dma.hbm_to_vmem [thread:$0]  %s630, 16, %s633, %s623
        $region52: #{tpu_custom_call.1} parent=39 // pred_fallthru
          _
        // Predicated region
        $region53: #{tpu_custom_call.1} parent=39 // pred_check
          %p636 = pneg %p205
        $region54: #{tpu_custom_call.1} parent=39 // pred_check_branch
          %638 = sbr.rel (%p636) target = $region56
        $region55: #{tpu_custom_call.1} parent=39 // pred_region
          %p639 = scmp.lt.s32.totalorder %s40, 5
          %s640 = scalar_select %p639, %s40, 5
          %s641 = smul.addr %s640, 4
          %s642 = smul.addr %s641, 4
          %s643 = scalar_lea.vmem %s6, %s642
        $region56: #{tpu_custom_call.1} parent=39 // pred_fallthru
          _
        // Predicated region
        $region57: #{tpu_custom_call.1} parent=39 // pred_check
          %p644 = pneg %p231
        $region58: #{tpu_custom_call.1} parent=39 // pred_check_branch
          %646 = sbr.rel (%p644) target = $region60
        $region59: #{tpu_custom_call.1} parent=39 // pred_region
          %s647 = sand.u32 %s32, 1
          %s648 = scalar_lea.sflag [#allocation4], %s647
          %s649 = sand.u32 %s221, 1
          %s650 = scalar_lea.vmem [#allocation10], %s649
          %s652 = ssub.s32 16, 16
          %653 = vsyncadd %s648, %s652
          %s654 = smul.addr %s40, 16
          %s655 = scalar_lea.hbm %s7, %s654
          %s657 = sshll.u32 %s650, 4
          %s658 = int_to_ptr.vmem [resolvable:$true] %s657
          %660 = dma.hbm_to_vmem [thread:$0]  %s655, 16, %s658, %s648
        $region60: #{tpu_custom_call.1} parent=39 // pred_fallthru
          _
        // Predicated region
        $region61: #{tpu_custom_call.1} parent=39 // pred_check
          %p661 = pneg %p257
        $region62: #{tpu_custom_call.1} parent=39 // pred_check_branch
          %663 = sbr.rel (%p661) target = $region64
        $region63: #{tpu_custom_call.1} parent=39 // pred_region
          %s664 = sand.u32 %s32, 1
          %s665 = scalar_lea.sflag [#allocation4], %s664
          %s666 = sand.u32 %s247, 1
          %s667 = smul.addr %s666, 16
          %s668 = scalar_lea.vmem [#allocation11], %s667
          %s670 = ssub.s32 256, 256
          %671 = vsyncadd %s665, %s670
          %s672 = smul.addr %s40, 4
          %s673 = smul.addr %s672, 64
          %s674 = scalar_lea.hbm %s8, %s673
          %s675 = sshll.u32 %s668, 4
          %s676 = int_to_ptr.vmem [resolvable:$true] %s675
          %681 = dma.hbm_to_vmem [thread:$0]  %s674, 256, %s676, %s665, 64, 64, 4
        $region64: #{tpu_custom_call.1} parent=39 // pred_fallthru
          _
        // Predicated region
        $region65: #{tpu_custom_call.1} parent=39 // pred_check
          %p682 = pneg %p283
        $region66: #{tpu_custom_call.1} parent=39 // pred_check_branch
          %684 = sbr.rel (%p682) target = $region68
        $region67: #{tpu_custom_call.1} parent=39 // pred_region
          %s685 = sand.u32 %s32, 1
          %s686 = scalar_lea.sflag [#allocation4], %s685
          %s687 = sand.u32 %s273, 1
          %s688 = scalar_lea.vmem [#allocation12], %s687
          %s690 = ssub.s32 16, 16
          %691 = vsyncadd %s686, %s690
          %s692 = smul.addr %s40, 16
          %s693 = scalar_lea.hbm %s9, %s692
          %s695 = sshll.u32 %s688, 4
          %s696 = int_to_ptr.vmem [resolvable:$true] %s695
          %698 = dma.hbm_to_vmem [thread:$0]  %s693, 16, %s696, %s686
        $region68: #{tpu_custom_call.1} parent=39 // pred_fallthru
          _
        // Predicated region
        $region69: #{tpu_custom_call.1} parent=39 // pred_check
          %p699 = pneg %p309
        $region70: #{tpu_custom_call.1} parent=39 // pred_check_branch
          %701 = sbr.rel (%p699) target = $region72
        $region71: #{tpu_custom_call.1} parent=39 // pred_region
          %s702 = sand.u32 %s32, 1
          %s703 = scalar_lea.sflag [#allocation4], %s702
          %s704 = sand.u32 %s299, 1
          %s705 = scalar_lea.vmem [#allocation13], %s704
          %s707 = ssub.s32 16, 16
          %708 = vsyncadd %s703, %s707
          %s709 = smul.addr %s40, 16
          %s710 = scalar_lea.hbm %s10, %s709
          %s712 = sshll.u32 %s705, 4
          %s713 = int_to_ptr.vmem [resolvable:$true] %s712
          %715 = dma.hbm_to_vmem [thread:$0]  %s710, 16, %s713, %s703
        $region72: #{tpu_custom_call.1} parent=39 // pred_fallthru
          _
        // Predicated region
        $region73: #{tpu_custom_call.1} parent=39 // pred_check
          %p716 = pneg %p335
        $region74: #{tpu_custom_call.1} parent=39 // pred_check_branch
          %718 = sbr.rel (%p716) target = $region76
        $region75: #{tpu_custom_call.1} parent=39 // pred_region
          %p719 = scmp.lt.s32.totalorder %s40, 5
          %s720 = scalar_select %p719, %s40, 5
          %s721 = scalar_lea.vmem %s11, %s720
        $region76: #{tpu_custom_call.1} parent=39 // pred_fallthru
          _
        // Predicated region
        $region77: #{tpu_custom_call.1} parent=39 // pred_check
          %p722 = pneg %p361
        $region78: #{tpu_custom_call.1} parent=39 // pred_check_branch
          %724 = sbr.rel (%p722) target = $region80
        $region79: #{tpu_custom_call.1} parent=39 // pred_region
          %s725 = sand.u32 %s32, 1
          %s726 = scalar_lea.sflag [#allocation4], %s725
          %s727 = sand.u32 %s351, 1
          %s728 = smul.addr %s727, 16
          %s729 = scalar_lea.vmem [#allocation14], %s728
          %s731 = ssub.s32 256, 256
          %732 = vsyncadd %s726, %s731
          %s733 = smul.addr %s40, 4
          %s734 = smul.addr %s733, 64
          %s735 = scalar_lea.hbm %s12, %s734
          %s736 = sshll.u32 %s729, 4
          %s737 = int_to_ptr.vmem [resolvable:$true] %s736
          %742 = dma.hbm_to_vmem [thread:$0]  %s735, 256, %s737, %s726, 64, 64, 4
        $region80: #{tpu_custom_call.1} parent=39 // pred_fallthru
          _
        // Predicated region
        $region81: #{tpu_custom_call.1} parent=39 // pred_check
          %p743 = pneg %p387
        $region82: #{tpu_custom_call.1} parent=39 // pred_check_branch
          %745 = sbr.rel (%p743) target = $region84
        $region83: #{tpu_custom_call.1} parent=39 // pred_region
          %p746 = scmp.lt.s32.totalorder %s40, 5
          %s747 = scalar_select %p746, %s40, 5
          %s748 = scalar_lea.vmem %s13, %s747
        $region84: #{tpu_custom_call.1} parent=39 // pred_fallthru
          _
        // Predicated region
        $region85: #{tpu_custom_call.1} parent=39 // pred_check
          %p749 = pneg %p413
        $region86: #{tpu_custom_call.1} parent=39 // pred_check_branch
          %751 = sbr.rel (%p749) target = $region88
        $region87: #{tpu_custom_call.1} parent=39 // pred_region
          %s752 = sand.u32 %s32, 1
          %s753 = scalar_lea.sflag [#allocation4], %s752
          %s754 = sand.u32 %s403, 1
          %s755 = smul.addr %s754, 16
          %s756 = scalar_lea.vmem [#allocation15], %s755
          %s758 = ssub.s32 256, 256
          %759 = vsyncadd %s753, %s758
          %s760 = smul.addr %s40, 4
          %s761 = smul.addr %s760, 64
          %s762 = scalar_lea.hbm %s14, %s761
          %s763 = sshll.u32 %s756, 4
          %s764 = int_to_ptr.vmem [resolvable:$true] %s763
          %769 = dma.hbm_to_vmem [thread:$0]  %s762, 256, %s764, %s753, 64, 64, 4
        $region88: #{tpu_custom_call.1} parent=39 // pred_fallthru
          _
        // Predicated region
        $region89: #{tpu_custom_call.1} parent=39 // pred_check
          %p770 = pneg %p439
        $region90: #{tpu_custom_call.1} parent=39 // pred_check_branch
          %772 = sbr.rel (%p770) target = $region92
        $region91: #{tpu_custom_call.1} parent=39 // pred_region
          %p773 = scmp.lt.s32.totalorder %s40, 5
          %s774 = scalar_select %p773, %s40, 5
          %s775 = scalar_lea.vmem %s15, %s774
        $region92: #{tpu_custom_call.1} parent=39 // pred_fallthru
          _
      $region40: #{tpu_custom_call.1} parent=5 // pred_fallthru
        _
      %p776 = scmp.le.s32.totalorder 1, %s32
      %p777 = scmp.lt.s32.totalorder %s32, 13
      %p778 = pnand %p776, %p777
      %p779 = pneg %p778
      // Predicated region
      $region93: #{tpu_custom_call.1} parent=5 // pred_check
        _
      $region94: #{tpu_custom_call.1} parent=5 // pred_check_branch
        %781 = sbr.rel (%p778) target = $region96
      $region95: #{tpu_custom_call.1} parent=5 // pred_region
        %s782 = ssub.s32 %s32, 1
        %s783 = sand.u32 %s37, 1
        %s784 = scalar_lea.sflag [#allocation4], %s783
        %s785 = sand.u32 %s57, 1
        %s786 = smul.addr %s785, 8
        %s787 = scalar_lea.vmem [#allocation3], %s786
        // Predicated region
        $region97: #{tpu_custom_call.1} parent=95 // pred_check
          %p788 = pneg %p70
        $region98: #{tpu_custom_call.1} parent=95 // pred_check_branch
          %790 = sbr.rel (%p788) target = $region100
        $region99: #{tpu_custom_call.1} parent=95 // pred_region
          %791 = dma.done %s784, 128
        $region100: #{tpu_custom_call.1} parent=95 // pred_fallthru
          _
        // Predicated region
        $region101: #{tpu_custom_call.1} parent=95 // pred_check
          %p792 = pneg %p133
        $region102: #{tpu_custom_call.1} parent=95 // pred_check_branch
          %794 = sbr.rel (%p792) target = $region104
        $region103: #{tpu_custom_call.1} parent=95 // pred_region
          %795 = dma.done [#allocation7], 384
        $region104: #{tpu_custom_call.1} parent=95 // pred_fallthru
          _
        %s796 = sand.u32 %s37, 1
        %s797 = scalar_lea.sflag [#allocation4], %s796
        %s798 = sand.u32 %s146, 1
        %s799 = scalar_lea.vmem [#allocation8], %s798
        // Predicated region
        $region105: #{tpu_custom_call.1} parent=95 // pred_check
          %p800 = pneg %p159
        $region106: #{tpu_custom_call.1} parent=95 // pred_check_branch
          %802 = sbr.rel (%p800) target = $region108
        $region107: #{tpu_custom_call.1} parent=95 // pred_region
          %803 = dma.done %s797, 16
        $region108: #{tpu_custom_call.1} parent=95 // pred_fallthru
          _
        %s804 = sand.u32 %s37, 1
        %s805 = scalar_lea.sflag [#allocation4], %s804
        %s806 = sand.u32 %s172, 1
        %s807 = scalar_lea.vmem [#allocation9], %s806
        // Predicated region
        $region109: #{tpu_custom_call.1} parent=95 // pred_check
          %p808 = pneg %p185
        $region110: #{tpu_custom_call.1} parent=95 // pred_check_branch
          %810 = sbr.rel (%p808) target = $region112
        $region111: #{tpu_custom_call.1} parent=95 // pred_region
          %811 = dma.done %s805, 16
        $region112: #{tpu_custom_call.1} parent=95 // pred_fallthru
          _
        %s812 = sand.u32 %s37, 1
        %s813 = scalar_lea.sflag [#allocation4], %s812
        %s814 = sand.u32 %s224, 1
        %s815 = scalar_lea.vmem [#allocation10], %s814
        // Predicated region
        $region113: #{tpu_custom_call.1} parent=95 // pred_check
          %p816 = pneg %p237
        $region114: #{tpu_custom_call.1} parent=95 // pred_check_branch
          %818 = sbr.rel (%p816) target = $region116
        $region115: #{tpu_custom_call.1} parent=95 // pred_region
          %819 = dma.done %s813, 16
        $region116: #{tpu_custom_call.1} parent=95 // pred_fallthru
          _
        %s820 = sand.u32 %s37, 1
        %s821 = scalar_lea.sflag [#allocation4], %s820
        %s822 = sand.u32 %s250, 1
        %s823 = smul.addr %s822, 16
        %s824 = scalar_lea.vmem [#allocation11], %s823
        // Predicated region
        $region117: #{tpu_custom_call.1} parent=95 // pred_check
          %p825 = pneg %p263
        $region118: #{tpu_custom_call.1} parent=95 // pred_check_branch
          %827 = sbr.rel (%p825) target = $region120
        $region119: #{tpu_custom_call.1} parent=95 // pred_region
          %828 = dma.done %s821, 256
        $region120: #{tpu_custom_call.1} parent=95 // pred_fallthru
          _
        %s829 = sand.u32 %s37, 1
        %s830 = scalar_lea.sflag [#allocation4], %s829
        %s831 = sand.u32 %s276, 1
        %s832 = scalar_lea.vmem [#allocation12], %s831
        // Predicated region
        $region121: #{tpu_custom_call.1} parent=95 // pred_check
          %p833 = pneg %p289
        $region122: #{tpu_custom_call.1} parent=95 // pred_check_branch
          %835 = sbr.rel (%p833) target = $region124
        $region123: #{tpu_custom_call.1} parent=95 // pred_region
          %836 = dma.done %s830, 16
        $region124: #{tpu_custom_call.1} parent=95 // pred_fallthru
          _
        %s837 = sand.u32 %s37, 1
        %s838 = scalar_lea.sflag [#allocation4], %s837
        %s839 = sand.u32 %s302, 1
        %s840 = scalar_lea.vmem [#allocation13], %s839
        // Predicated region
        $region125: #{tpu_custom_call.1} parent=95 // pred_check
          %p841 = pneg %p315
        $region126: #{tpu_custom_call.1} parent=95 // pred_check_branch
          %843 = sbr.rel (%p841) target = $region128
        $region127: #{tpu_custom_call.1} parent=95 // pred_region
          %844 = dma.done %s838, 16
        $region128: #{tpu_custom_call.1} parent=95 // pred_fallthru
          _
        %s845 = sand.u32 %s37, 1
        %s846 = scalar_lea.sflag [#allocation4], %s845
        %s847 = sand.u32 %s354, 1
        %s848 = smul.addr %s847, 16
        %s849 = scalar_lea.vmem [#allocation14], %s848
        // Predicated region
        $region129: #{tpu_custom_call.1} parent=95 // pred_check
          %p850 = pneg %p367
        $region130: #{tpu_custom_call.1} parent=95 // pred_check_branch
          %852 = sbr.rel (%p850) target = $region132
        $region131: #{tpu_custom_call.1} parent=95 // pred_region
          %853 = dma.done %s846, 256
        $region132: #{tpu_custom_call.1} parent=95 // pred_fallthru
          _
        %s854 = sand.u32 %s37, 1
        %s855 = scalar_lea.sflag [#allocation4], %s854
        %s856 = sand.u32 %s406, 1
        %s857 = smul.addr %s856, 16
        %s858 = scalar_lea.vmem [#allocation15], %s857
        // Predicated region
        $region133: #{tpu_custom_call.1} parent=95 // pred_check
          %p859 = pneg %p419
        $region134: #{tpu_custom_call.1} parent=95 // pred_check_branch
          %861 = sbr.rel (%p859) target = $region136
        $region135: #{tpu_custom_call.1} parent=95 // pred_region
          %862 = dma.done %s855, 256
        $region136: #{tpu_custom_call.1} parent=95 // pred_fallthru
          _
        %s863 = sand.u32 %s37, 1
        %s864 = scalar_lea.sflag [#allocation4], %s863
        %s865 = sand.u32 %s57, 1
        %s866 = smul.addr %s865, 8
        %s867 = scalar_lea.vmem [#allocation3], %s866
        %p868 = pneg %p70
        %p869 = pneg %p67
        %p870 = pneg %p91
        %p871 = pneg %p88
        %p872 = pneg %p112
        %p873 = pneg %p109
        %p874 = pneg %p133
        %p875 = pneg %p130
        %s876 = sand.u32 %s37, 1
        %s877 = scalar_lea.sflag [#allocation4], %s876
        %s878 = sand.u32 %s146, 1
        %s879 = scalar_lea.vmem [#allocation8], %s878
        %p880 = pneg %p159
        %p881 = pneg %p156
        %s882 = sand.u32 %s37, 1
        %s883 = scalar_lea.sflag [#allocation4], %s882
        %s884 = sand.u32 %s172, 1
        %s885 = scalar_lea.vmem [#allocation9], %s884
        %p886 = pneg %p185
        %p887 = pneg %p182
        %p888 = scmp.lt.s32.totalorder %s42, 5
        %s889 = scalar_select %p888, %s42, 5
        %s890 = smul.addr %s889, 4
        %s891 = smul.addr %s890, 4
        %s892 = scalar_lea.vmem %s6, %s891
        %p893 = pneg %p211
        %p894 = pneg %p208
        %s895 = sand.u32 %s37, 1
        %s896 = scalar_lea.sflag [#allocation4], %s895
        %s897 = sand.u32 %s224, 1
        %s898 = scalar_lea.vmem [#allocation10], %s897
        %p899 = pneg %p237
        %p900 = pneg %p234
        %s901 = sand.u32 %s37, 1
        %s902 = scalar_lea.sflag [#allocation4], %s901
        %s903 = sand.u32 %s250, 1
        %s904 = smul.addr %s903, 16
        %s905 = scalar_lea.vmem [#allocation11], %s904
        %p906 = pneg %p263
        %p907 = pneg %p260
        %s908 = sand.u32 %s37, 1
        %s909 = scalar_lea.sflag [#allocation4], %s908
        %s910 = sand.u32 %s276, 1
        %s911 = scalar_lea.vmem [#allocation12], %s910
        %p912 = pneg %p289
        %p913 = pneg %p286
        %s914 = sand.u32 %s37, 1
        %s915 = scalar_lea.sflag [#allocation4], %s914
        %s916 = sand.u32 %s302, 1
        %s917 = scalar_lea.vmem [#allocation13], %s916
        %p918 = pneg %p315
        %p919 = pneg %p312
        %p920 = scmp.lt.s32.totalorder %s42, 5
        %s921 = scalar_select %p920, %s42, 5
        %s922 = scalar_lea.vmem %s11, %s921
        %p923 = pneg %p341
        %p924 = pneg %p338
        %s925 = sand.u32 %s37, 1
        %s926 = scalar_lea.sflag [#allocation4], %s925
        %s927 = sand.u32 %s354, 1
        %s928 = smul.addr %s927, 16
        %s929 = scalar_lea.vmem [#allocation14], %s928
        %p930 = pneg %p367
        %p931 = pneg %p364
        %p932 = scmp.lt.s32.totalorder %s42, 5
        %s933 = scalar_select %p932, %s42, 5
        %s934 = scalar_lea.vmem %s13, %s933
        %p935 = pneg %p393
        %p936 = pneg %p390
        %s937 = sand.u32 %s37, 1
        %s938 = scalar_lea.sflag [#allocation4], %s937
        %s939 = sand.u32 %s406, 1
        %s940 = smul.addr %s939, 16
        %s941 = scalar_lea.vmem [#allocation15], %s940
        %p942 = pneg %p419
        %p943 = pneg %p416
        %p944 = scmp.lt.s32.totalorder %s42, 5
        %s945 = scalar_select %p944, %s42, 5
        %s946 = scalar_lea.vmem %s15, %s945
        %p947 = pneg %p445
        %p948 = pneg %p442
        %p949 = pneg %p466
        %p950 = pneg %p463
        %p951 = pneg %p487
        %p952 = pneg %p484
        %p953 = pneg %p508
        %p954 = pneg %p505
        %p955 = pneg %p534
        %p956 = pneg %p531
        %s957 = sand.u32 %s521, 1
        %s958 = scalar_lea.sflag [#allocation5], %s957
        %s959 = sand.u32 %s521, 1
        %s960 = smul.addr %s959, 8
        %s961 = scalar_lea.vmem [#allocation16], %s960
        %s962 = smul.u32 2, %s41
        %p963 = scmp.lt.s32.totalorder %s42, 5
        %s964 = scalar_select %p963, %s42, 5
        %s965 = smul.addr %s964, 4
        %s966 = smul.addr %s965, 4
        %s967 = scalar_lea.vmem %s6, %s966
        %p968 = scmp.lt.s32.totalorder %s42, 5
        %s969 = scalar_select %p968, %s42, 5
        %s970 = scalar_lea.vmem %s11, %s969
        %p971 = scmp.lt.s32.totalorder %s42, 5
        %s972 = scalar_select %p971, %s42, 5
        %s973 = scalar_lea.vmem %s13, %s972
        %p974 = scmp.lt.s32.totalorder %s42, 5
        %s975 = scalar_select %p974, %s42, 5
        %s976 = scalar_lea.vmem %s15, %s975
        %p978 = scmp.eq.s32.totalorder %s42, 0
        // Predicated region
        $region137: #{tpu_custom_call.1} parent=95 // pred_check
          %p979 = pneg %p978
        $region138: #{tpu_custom_call.1} parent=95 // pred_check_branch
          %981 = sbr.rel (%p979) target = $region140
        $region139: #{tpu_custom_call.1} parent=95 // pred_region
          %v982 = vld [vmem:[%s787] sm:$0xf]
          %v983 = vld [vmem:[%s787 + $0x4] sm:$0xf]
          %v984 = vld [vmem:[%s1] sm:$0xf]
          %v985 = vld [vmem:[%s1 + $0x4] sm:$0xf]
          %v986 = vld [vmem:[%s1 + $0x8] sm:$0xf]
          %v987 = vld [vmem:[%s1 + $0xc] sm:$0xf]
          %v988 = vld [vmem:[%s1 + $0x10] sm:$0xf]
          %v989 = vld [vmem:[%s1 + $0x14] sm:$0xf]
          %v990 = vld [vmem:[%s1 + $0x18] sm:$0xf]
          %v991 = vld [vmem:[%s1 + $0x1c] sm:$0xf]
          %v992 = vld [vmem:[%s1 + $0x20] sm:$0xf]
          %v993 = vld [vmem:[%s1 + $0x24] sm:$0xf]
          %v994 = vld [vmem:[%s1 + $0x28] sm:$0xf]
          %v995 = vld [vmem:[%s1 + $0x2c] sm:$0xf]
          %v996 = vld [vmem:[%s1 + $0x30] sm:$0xf]
          %v997 = vld [vmem:[%s1 + $0x34] sm:$0xf]
          %v998 = vld [vmem:[%s1 + $0x38] sm:$0xf]
          %v999 = vld [vmem:[%s1 + $0x3c] sm:$0xf]
          %v1002 = vunpack.c.l.b16 %v982
          %v1003 = vunpack.c.l.b16 %v983
          %v1004 = vpack.c.b16 %v1003, %v1002
          %v1022 = vunpack.c.l.b16 %v984
          %v1023 = vunpack.c.l.b16 %v985
          %v1024 = vunpack.c.l.b16 %v986
          %v1025 = vunpack.c.l.b16 %v987
          %v1026 = vunpack.c.l.b16 %v988
          %v1027 = vunpack.c.l.b16 %v989
          %v1028 = vunpack.c.l.b16 %v990
          %v1029 = vunpack.c.l.b16 %v991
          %v1030 = vunpack.c.l.b16 %v992
          %v1031 = vunpack.c.l.b16 %v993
          %v1032 = vunpack.c.l.b16 %v994
          %v1033 = vunpack.c.l.b16 %v995
          %v1034 = vunpack.c.l.b16 %v996
          %v1035 = vunpack.c.l.b16 %v997
          %v1036 = vunpack.c.l.b16 %v998
          %v1037 = vunpack.c.l.b16 %v999
          %v1038 = vpack.c.b16 %v1023, %v1022
          %v1039 = vpack.c.b16 %v1025, %v1024
          %v1040 = vpack.c.b16 %v1027, %v1026
          %v1041 = vpack.c.b16 %v1029, %v1028
          %v1042 = vpack.c.b16 %v1031, %v1030
          %v1043 = vpack.c.b16 %v1033, %v1032
          %v1044 = vpack.c.b16 %v1035, %v1034
          %v1045 = vpack.c.b16 %v1037, %v1036
          %1054 = vmatprep.subr.bf16.mxu0 0
          %1055 = vmatpush1.bf16.msra.mxu0 %v1038
          %1056 = vmatprep.subr.bf16.mxu0 0
          %1057 = vmatpush1.bf16.msra.mxu0 %v1039
          %1058 = vmatprep.subr.bf16.mxu0 0
          %1059 = vmatpush1.bf16.msra.mxu0 %v1040
          %1060 = vmatprep.subr.bf16.mxu0 0
          %1061 = vmatpush1.bf16.msra.mxu0 %v1041
          %1062 = vmatprep.subr.bf16.mxu0 0
          %1063 = vmatpush1.bf16.msra.mxu0 %v1042
          %1064 = vmatprep.subr.bf16.mxu0 0
          %1065 = vmatpush1.bf16.msra.mxu0 %v1043
          %1066 = vmatprep.subr.bf16.mxu0 0
          %1067 = vmatpush1.bf16.msra.mxu0 %v1044
          %1068 = vmatprep.subr.bf16.mxu0 0
          %1069 = vmatpush1.bf16.msra.mxu0 %v1045
          %1070 = vmatprep.subr.bf16.mxu0 0
          %1071 = vmatpush1.bf16.msra.mxu0 0
          %1072 = vmatprep.subr.bf16.mxu0 0
          %1073 = vmatpush1.bf16.msra.mxu0 0
          %1074 = vmatprep.subr.bf16.mxu0 0
          %1075 = vmatpush1.bf16.msra.mxu0 0
          %1076 = vmatprep.subr.bf16.mxu0 0
          %1077 = vmatpush1.bf16.msra.mxu0 0
          %1078 = vmatprep.subr.bf16.mxu0 0
          %1079 = vmatpush1.bf16.msra.mxu0 0
          %1080 = vmatprep.subr.bf16.mxu0 0
          %1081 = vmatpush1.bf16.msra.mxu0 0
          %1082 = vmatprep.subr.bf16.mxu0 0
          %1083 = vmatpush1.bf16.msra.mxu0 0
          %1084 = vmatprep.subr.bf16.mxu0 0
          %1085 = vmatpush1.bf16.msra.mxu0 0
          %1086 = vmatprep.mubr.bf16.mxu0 0
          %1087 = vmatmul.mubr.bf16.gmra.mrb[0].mxu0 %v1004
          %v1088 = vpop.f32.mrb[0].mxu0
          %v1089 = vadd.f32 0.0, %v1088
          %v1090 = vpop.f32.mrb[0].mxu0
          %v1091 = vpop.f32.mrb[0].mxu0
          %v1092 = vadd.f32 0.0, %v1091
          %v1093 = vpop.f32.mrb[0].mxu0
          %1094 = vdwg.mxu0
          %v1095 = vld [vmem:[%s2] sm:$0x1]
          %vm1098 = vcmask 1040384
          %v1099 = vrot.slane %v1089, 7
          %v1100 = vrot.slane %v1092, 7
          %v1101 = vsel %vm1098, %v1099, %v1100
          %v1105 = vsel %vm1098, %v1095, %v1099
          %v1106 = vsel %vm1098, %v1100, 0.0
          %v1107 = vld [vmem:[#allocation6] sm:$0xff]
          %v1108 = vld [vmem:[#allocation6 + $0x8] sm:$0xff]
          %v1109 = vld [vmem:[#allocation6 + $0x10] sm:$0xff]
          %v1110 = vadd.f32 %v1105, %v1107
          %v1111 = vadd.f32 %v1101, %v1108
          %v1112 = vadd.f32 %v1106, %v1109
          %vm1113 = vcmask 261120
          %1114 = vst.msk [vmem:[#allocation2] sm:$0xff] %vm1113, %v1110
          %1115 = vst.msk [vmem:[#allocation2 + $0x8] sm:$0xff] %vm1113, %v1111
          %1116 = vst.msk [vmem:[#allocation2 + $0x10] sm:$0xff] %vm1113, %v1112
        $region140: #{tpu_custom_call.1} parent=95 // pred_fallthru
          _
        %v1117 = vld [vmem:[#allocation2] sm:$0xff]
        %v1118 = vld [vmem:[#allocation2 + $0x8] sm:$0xff]
        %v1119 = vld [vmem:[#allocation2 + $0x10] sm:$0xff]
        %v1120 = vld [vmem:[%s799] sm:$0x1]
        %v1121 = vld [vmem:[%s807] sm:$0x1]
        %vm1122 = vcmask 261120
        %v1123 = vsel %vm1122, %v1117, 0.0
        %1124 = vadd.xlane.f32.xlu0 %v1123
        %v1125 = vpop.xlane.xlu0 %1124
        %v1126 = vsel %vm1122, %v1118, 0.0
        %1127 = vadd.xlane.f32.xlu0 %v1126
        %v1128 = vpop.xlane.xlu0 %1127
        %v1129 = vsel %vm1122, %v1119, 0.0
        %1130 = vadd.xlane.f32.xlu0 %v1129
        %v1131 = vpop.xlane.xlu0 %1130
        %v1132 = vrcp.pop 32.0
        %v1133 = vmul.f32 %v1125, %v1132
        %v1134 = vmul.f32 %v1128, %v1132
        %v1135 = vmul.f32 %v1131, %v1132
        %v1136 = vsub.f32 %v1117, %v1133
        %v1137 = vsub.f32 %v1118, %v1134
        %v1138 = vsub.f32 %v1119, %v1135
        %v1139 = vmul.f32 %v1136, %v1136
        %v1140 = vmul.f32 %v1137, %v1137
        %v1141 = vmul.f32 %v1138, %v1138
        %v1142 = vsel %vm1122, %v1139, 0.0
        %1143 = vadd.xlane.f32.xlu0 %v1142
        %v1144 = vpop.xlane.xlu0 %1143
        %v1145 = vsel %vm1122, %v1140, 0.0
        %1146 = vadd.xlane.f32.xlu0 %v1145
        %v1147 = vpop.xlane.xlu0 %1146
        %v1148 = vsel %vm1122, %v1141, 0.0
        %1149 = vadd.xlane.f32.xlu0 %v1148
        %v1150 = vpop.xlane.xlu0 %1149
        %v1151 = vmul.f32 %v1144, %v1132
        %v1152 = vmul.f32 %v1147, %v1132
        %v1153 = vmul.f32 %v1150, %v1132
        %v1154 = vadd.f32 %v1151, 1e-05
        %v1155 = vadd.f32 %v1152, 1e-05
        %v1156 = vadd.f32 %v1153, 1e-05
        %v1157 = vrsqrt.pop %v1154
        %v1158 = vrsqrt.pop %v1155
        %v1159 = vrsqrt.pop %v1156
        %v1160 = vmul.f32 %v1136, %v1157
        %v1161 = vmul.f32 %v1137, %v1158
        %v1162 = vmul.f32 %v1138, %v1159
        %v1164 = vlaneseq
        %v1165 = vshrl.u32 %v1164, 7
        %v1166 = vsub.s32 0, %v1165
        %v1167 = vrot.slane %v1120, %v1166
        %v1169 = vmul.f32 %v1160, %v1167
        %v1170 = vmul.f32 %v1161, %v1167
        %v1171 = vmul.f32 %v1162, %v1167
        %v1173 = vlaneseq
        %v1174 = vshrl.u32 %v1173, 7
        %v1175 = vsub.s32 0, %v1174
        %v1176 = vrot.slane %v1121, %v1175
        %v1178 = vadd.f32 %v1169, %v1176
        %v1179 = vadd.f32 %v1170, %v1176
        %v1180 = vadd.f32 %v1171, %v1176
        %v1181 = vpack.c.bf16 %v1179, %v1178
        %v1182 = vpack.c.bf16 %v1180, %v1180
        %v1183 = vld [vmem:[%s967] sm:$0xf]
        %v1184 = vld [vmem:[%s967 + $0x4] sm:$0xf]
        %v1185 = vld [vmem:[%s967 + $0x8] sm:$0xf]
        %v1186 = vld [vmem:[%s967 + $0xc] sm:$0xf]
        %v1187 = vld [vmem:[%s815] sm:$0x1]
        %v1189 = vlaneseq
        %v1190 = vshrl.u32 %v1189, 7
        %v1191 = vsub.s32 0, %v1190
        %v1192 = vrot.slane %v1187, %v1191
        %v1198 = vunpack.c.l.b16 %v1183
        %v1199 = vunpack.c.l.b16 %v1184
        %v1200 = vunpack.c.l.b16 %v1185
        %v1201 = vunpack.c.l.b16 %v1186
        %v1202 = vpack.c.b16 %v1199, %v1198
        %v1203 = vpack.c.b16 %v1201, %v1200
        %v1207 = vsel %vm1122, %v1181, 0
        %v1210 = vsel %vm1122, %v1182, 0
        %1212 = vmatprep.subr.bf16.mxu0 0
        %1213 = vmatpush1.bf16.msra.mxu0 %v1202
        %1214 = vmatprep.subr.bf16.mxu0 0
        %1215 = vmatpush1.bf16.msra.mxu0 %v1203
        %1216 = vmatprep.subr.bf16.mxu0 0
        %1217 = vmatpush1.bf16.msra.mxu0 0
        %1218 = vmatprep.subr.bf16.mxu0 0
        %1219 = vmatpush1.bf16.msra.mxu0 0
        %1220 = vmatprep.subr.bf16.mxu0 0
        %1221 = vmatpush1.bf16.msra.mxu0 0
        %1222 = vmatprep.subr.bf16.mxu0 0
        %1223 = vmatpush1.bf16.msra.mxu0 0
        %1224 = vmatprep.subr.bf16.mxu0 0
        %1225 = vmatpush1.bf16.msra.mxu0 0
        %1226 = vmatprep.subr.bf16.mxu0 0
        %1227 = vmatpush1.bf16.msra.mxu0 0
        %1228 = vmatprep.subr.bf16.mxu0 0
        %1229 = vmatpush1.bf16.msra.mxu0 0
        %1230 = vmatprep.subr.bf16.mxu0 0
        %1231 = vmatpush1.bf16.msra.mxu0 0
        %1232 = vmatprep.subr.bf16.mxu0 0
        %1233 = vmatpush1.bf16.msra.mxu0 0
        %1234 = vmatprep.subr.bf16.mxu0 0
        %1235 = vmatpush1.bf16.msra.mxu0 0
        %1236 = vmatprep.subr.bf16.mxu0 0
        %1237 = vmatpush1.bf16.msra.mxu0 0
        %1238 = vmatprep.subr.bf16.mxu0 0
        %1239 = vmatpush1.bf16.msra.mxu0 0
        %1240 = vmatprep.subr.bf16.mxu0 0
        %1241 = vmatpush1.bf16.msra.mxu0 0
        %1242 = vmatprep.subr.bf16.mxu0 0
        %1243 = vmatpush1.bf16.msra.mxu0 0
        %1244 = vmatprep.mubr.bf16.mxu0 0
        %1245 = vmatmul.mubr.bf16.gmra.mrb[0].mxu0 %v1207
        %v1246 = vpop.f32.mrb[0].mxu0
        %v1247 = vadd.f32 %v1192, %v1246
        %v1248 = vpop.f32.mrb[0].mxu0
        %v1249 = vpop.f32.mrb[0].mxu0
        %v1250 = vadd.f32 %v1192, %v1249
        %v1251 = vpop.f32.mrb[0].mxu0
        %1252 = vmatprep.mubr.bf16.mxu0 0
        %1253 = vmatmul.mubr.bf16.gmra.mrb[0].mxu0 %v1210
        %v1254 = vpop.f32.mrb[0].mxu0
        %v1255 = vadd.f32 %v1192, %v1254
        %v1256 = vpop.f32.mrb[0].mxu0
        %v1257 = vpop.f32.mrb[0].mxu0
        %v1258 = vpop.f32.mrb[0].mxu0
        %1259 = vdwg.mxu0
        %v1260 = vmul.f32 %v1247, 0.5
        %v1261 = vmul.f32 %v1250, 0.5
        %v1262 = vmul.f32 %v1255, 0.5
        %v1263 = vpack.c.bf16 %v1261, %v1260
        %v1264 = vpack.c.bf16 %v1262, %v1262
        %v1265 = vpack.c.bf16 %v1250, %v1247
        %v1266 = vpack.c.bf16 %v1255, %v1255
        %v1267 = vld [vmem:[%s824] sm:$0xf]
        %v1268 = vld [vmem:[%s824 + $0x4] sm:$0xf]
        %v1269 = vld [vmem:[%s824 + $0x8] sm:$0xf]
        %v1270 = vld [vmem:[%s824 + $0xc] sm:$0xf]
        %v1271 = vlaneseq
        %v1272 = vand.u32 %v1271, 127
        %vm1273 = vcmp.lt.s32.totalorder %v1272, 17
        %v1274 = vsel %vm1273, 0.0, -1e+30
        %1277 = vrot.lane.b32.xlu0 %v1265, 96
        %v1278 = vpop.permute.xlu0 %1277
        %1279 = vrot.lane.b32.xlu0 %v1266, 96
        %v1280 = vpop.permute.xlu0 %1279
        %vm1281 = vcmask 31744
        %v1283 = vsel %vm1281, %v1263, 0
        %v1286 = vsel %vm1281, %v1264, 0
        %v1289 = vsel %vm1281, %v1278, 0
        %v1292 = vsel %vm1281, %v1280, 0
        %1294 = vmatprep.subr.bf16.mxu0 0
        %1295 = vmatpush1.bf16.xpose.msra.mxu0 %v1289
        %1296 = vmatprep.subr.bf16.mxu0 0
        %1297 = vmatpush1.bf16.xpose.msra.mxu0 %v1292
        %1298 = vmatprep.subr.bf16.mxu0 0
        %1299 = vmatpush1.bf16.xpose.msra.mxu0 0
        %1300 = vmatprep.subr.bf16.mxu0 0
        %1301 = vmatpush1.bf16.xpose.msra.mxu0 0
        %1302 = vmatprep.subr.bf16.mxu0 0
        %1303 = vmatpush1.bf16.xpose.msra.mxu0 0
        %1304 = vmatprep.subr.bf16.mxu0 0
        %1305 = vmatpush1.bf16.xpose.msra.mxu0 0
        %1306 = vmatprep.subr.bf16.mxu0 0
        %1307 = vmatpush1.bf16.xpose.msra.mxu0 0
        %1308 = vmatprep.subr.bf16.mxu0 0
        %1309 = vmatpush1.bf16.xpose.msra.mxu0 0
        %1310 = vmatprep.subr.bf16.mxu0 0
        %1311 = vmatpush1.bf16.xpose.msra.mxu0 0
        %1312 = vmatprep.subr.bf16.mxu0 0
        %1313 = vmatpush1.bf16.xpose.msra.mxu0 0
        %1314 = vmatprep.subr.bf16.mxu0 0
        %1315 = vmatpush1.bf16.xpose.msra.mxu0 0
        %1316 = vmatprep.subr.bf16.mxu0 0
        %1317 = vmatpush1.bf16.xpose.msra.mxu0 0
        %1318 = vmatprep.subr.bf16.mxu0 0
        %1319 = vmatpush1.bf16.xpose.msra.mxu0 0
        %1320 = vmatprep.subr.bf16.mxu0 0
        %1321 = vmatpush1.bf16.xpose.msra.mxu0 0
        %1322 = vmatprep.subr.bf16.mxu0 0
        %1323 = vmatpush1.bf16.xpose.msra.mxu0 0
        %1324 = vmatprep.subr.bf16.mxu0 0
        %1325 = vmatpush1.bf16.xpose.msra.mxu0 0
        %1326 = vmatprep.mubr.bf16.mxu0 0
        %1327 = vmatmul.mubr.bf16.gmra.mrb[0].mxu0 %v1283
        %v1328 = vpop.f32.mrb[0].mxu0
        %v1329 = vadd.f32 %v1274, %v1328
        %v1330 = vpop.f32.mrb[0].mxu0
        %v1331 = vpop.f32.mrb[0].mxu0
        %v1332 = vadd.f32 %v1274, %v1331
        %v1333 = vpop.f32.mrb[0].mxu0
        %1334 = vmatprep.mubr.bf16.mxu0 0
        %1335 = vmatmul.mubr.bf16.gmra.mrb[0].mxu0 %v1286
        %v1336 = vpop.f32.mrb[0].mxu0
        %v1337 = vadd.f32 %v1274, %v1336
        %v1338 = vpop.f32.mrb[0].mxu0
        %v1339 = vpop.f32.mrb[0].mxu0
        %v1340 = vpop.f32.mrb[0].mxu0
        %1341 = vdwg.mxu0
        %vm1342 = vcmask 195584
        %v1343 = vsel %vm1342, %v1329, -inf
        %1344 = vmax.xlane.f32.xlu0 %v1343
        %v1345 = vpop.xlane.xlu0 %1344
        %v1346 = vsel %vm1342, %v1332, -inf
        %1347 = vmax.xlane.f32.xlu0 %v1346
        %v1348 = vpop.xlane.xlu0 %1347
        %v1349 = vsel %vm1342, %v1337, -inf
        %1350 = vmax.xlane.f32.xlu0 %v1349
        %v1351 = vpop.xlane.xlu0 %1350
        %v1352 = vsub.f32 %v1329, %v1345
        %v1353 = vsub.f32 %v1332, %v1348
        %v1354 = vsub.f32 %v1337, %v1351
        %v1355 = vmul.f32 %v1352, 1.442695
        %v1356 = vpow.pop %v1355
        %v1357 = vmul.f32 %v1353, 1.442695
        %v1358 = vpow.pop %v1357
        %v1359 = vmul.f32 %v1354, 1.442695
        %v1360 = vpow.pop %v1359
        %v1361 = vsel %vm1342, %v1356, 0.0
        %1362 = vadd.xlane.f32.xlu0 %v1361
        %v1363 = vpop.xlane.xlu0 %1362
        %v1364 = vsel %vm1342, %v1358, 0.0
        %1365 = vadd.xlane.f32.xlu0 %v1364
        %v1366 = vpop.xlane.xlu0 %1365
        %v1367 = vsel %vm1342, %v1360, 0.0
        %1368 = vadd.xlane.f32.xlu0 %v1367
        %v1369 = vpop.xlane.xlu0 %1368
        %v1370 = vrcp.pop %v1363
        %v1371 = vrcp.pop %v1366
        %v1372 = vrcp.pop %v1369
        %v1373 = vmul.f32 %v1356, %v1370
        %v1374 = vmul.f32 %v1358, %v1371
        %v1375 = vmul.f32 %v1360, %v1372
        %v1376 = vpack.c.bf16 %v1374, %v1373
        %v1377 = vpack.c.bf16 %v1375, %v1375
        %1378 = vrot.lane.b32.xlu0 %v1265, 64
        %v1379 = vpop.permute.xlu0 %1378
        %1380 = vrot.lane.b32.xlu0 %v1266, 64
        %v1381 = vpop.permute.xlu0 %1380
        %v1384 = vsel %vm1342, %v1376, 0
        %v1387 = vsel %vm1342, %v1377, 0
        %vm1389 = vcmask 1043456
        %v1391 = vsel %vm1389, %v1381, 0
        %1393 = vmatprep.subr.bf16.mxu0 0
        %1394 = vmatpush1.bf16.msra.mxu0 %v1379
        %1395 = vmatprep.subr.bf16.mxu0 0
        %1396 = vmatpush1.bf16.msra.mxu0 %v1391
        %1397 = vmatprep.subr.bf16.mxu0 0
        %1398 = vmatpush1.bf16.msra.mxu0 0
        %1399 = vmatprep.subr.bf16.mxu0 0
        %1400 = vmatpush1.bf16.msra.mxu0 0
        %1401 = vmatprep.subr.bf16.mxu0 0
        %1402 = vmatpush1.bf16.msra.mxu0 0
        %1403 = vmatprep.subr.bf16.mxu0 0
        %1404 = vmatpush1.bf16.msra.mxu0 0
        %1405 = vmatprep.subr.bf16.mxu0 0
        %1406 = vmatpush1.bf16.msra.mxu0 0
        %1407 = vmatprep.subr.bf16.mxu0 0
        %1408 = vmatpush1.bf16.msra.mxu0 0
        %1409 = vmatprep.subr.bf16.mxu0 0
        %1410 = vmatpush1.bf16.msra.mxu0 0
        %1411 = vmatprep.subr.bf16.mxu0 0
        %1412 = vmatpush1.bf16.msra.mxu0 0
        %1413 = vmatprep.subr.bf16.mxu0 0
        %1414 = vmatpush1.bf16.msra.mxu0 0
        %1415 = vmatprep.subr.bf16.mxu0 0
        %1416 = vmatpush1.bf16.msra.mxu0 0
        %1417 = vmatprep.subr.bf16.mxu0 0
        %1418 = vmatpush1.bf16.msra.mxu0 0
        %1419 = vmatprep.subr.bf16.mxu0 0
        %1420 = vmatpush1.bf16.msra.mxu0 0
        %1421 = vmatprep.subr.bf16.mxu0 0
        %1422 = vmatpush1.bf16.msra.mxu0 0
        %1423 = vmatprep.subr.bf16.mxu0 0
        %1424 = vmatpush1.bf16.msra.mxu0 0
        %1425 = vmatprep.mubr.bf16.mxu0 0
        %1426 = vmatmul.mubr.bf16.gmra.mrb[0].mxu0 %v1384
        %v1427 = vpop.f32.mrb[0].mxu0
        %v1428 = vadd.f32 0.0, %v1427
        %v1429 = vpop.f32.mrb[0].mxu0
        %v1430 = vpop.f32.mrb[0].mxu0
        %v1431 = vadd.f32 0.0, %v1430
        %v1432 = vpop.f32.mrb[0].mxu0
        %1433 = vmatprep.mubr.bf16.mxu0 0
        %1434 = vmatmul.mubr.bf16.gmra.mrb[0].mxu0 %v1387
        %v1435 = vpop.f32.mrb[0].mxu0
        %v1436 = vadd.f32 0.0, %v1435
        %v1437 = vpop.f32.mrb[0].mxu0
        %v1438 = vpop.f32.mrb[0].mxu0
        %v1439 = vpop.f32.mrb[0].mxu0
        %1440 = vdwg.mxu0
        %v1441 = vpack.c.bf16 %v1431, %v1428
        %v1442 = vpack.c.bf16 %v1436, %v1436
        %1445 = vrot.lane.b32.xlu0 %v1263, 124
        %v1446 = vpop.permute.xlu0 %1445
        %1447 = vrot.lane.b32.xlu0 %v1264, 124
        %v1448 = vpop.permute.xlu0 %1447
        %1449 = vrot.lane.b32.xlu0 %v1265, 92
        %v1450 = vpop.permute.xlu0 %1449
        %1451 = vrot.lane.b32.xlu0 %v1266, 92
        %v1452 = vpop.permute.xlu0 %1451
        %v1454 = vsel %vm1281, %v1446, 0
        %v1457 = vsel %vm1281, %v1448, 0
        %v1460 = vsel %vm1281, %v1450, 0
        %v1463 = vsel %vm1281, %v1452, 0
        %1465 = vmatprep.subr.bf16.mxu0 0
        %1466 = vmatpush1.bf16.xpose.msra.mxu0 %v1460
        %1467 = vmatprep.subr.bf16.mxu0 0
        %1468 = vmatpush1.bf16.xpose.msra.mxu0 %v1463
        %1469 = vmatprep.subr.bf16.mxu0 0
        %1470 = vmatpush1.bf16.xpose.msra.mxu0 0
        %1471 = vmatprep.subr.bf16.mxu0 0
        %1472 = vmatpush1.bf16.xpose.msra.mxu0 0
        %1473 = vmatprep.subr.bf16.mxu0 0
        %1474 = vmatpush1.bf16.xpose.msra.mxu0 0
        %1475 = vmatprep.subr.bf16.mxu0 0
        %1476 = vmatpush1.bf16.xpose.msra.mxu0 0
        %1477 = vmatprep.subr.bf16.mxu0 0
        %1478 = vmatpush1.bf16.xpose.msra.mxu0 0
        %1479 = vmatprep.subr.bf16.mxu0 0
        %1480 = vmatpush1.bf16.xpose.msra.mxu0 0
        %1481 = vmatprep.subr.bf16.mxu0 0
        %1482 = vmatpush1.bf16.xpose.msra.mxu0 0
        %1483 = vmatprep.subr.bf16.mxu0 0
        %1484 = vmatpush1.bf16.xpose.msra.mxu0 0
        %1485 = vmatprep.subr.bf16.mxu0 0
        %1486 = vmatpush1.bf16.xpose.msra.mxu0 0
        %1487 = vmatprep.subr.bf16.mxu0 0
        %1488 = vmatpush1.bf16.xpose.msra.mxu0 0
        %1489 = vmatprep.subr.bf16.mxu0 0
        %1490 = vmatpush1.bf16.xpose.msra.mxu0 0
        %1491 = vmatprep.subr.bf16.mxu0 0
        %1492 = vmatpush1.bf16.xpose.msra.mxu0 0
        %1493 = vmatprep.subr.bf16.mxu0 0
        %1494 = vmatpush1.bf16.xpose.msra.mxu0 0
        %1495 = vmatprep.subr.bf16.mxu0 0
        %1496 = vmatpush1.bf16.xpose.msra.mxu0 0
        %1497 = vmatprep.mubr.bf16.mxu0 0
        %1498 = vmatmul.mubr.bf16.gmra.mrb[0].mxu0 %v1454
        %v1499 = vpop.f32.mrb[0].mxu0
        %v1500 = vadd.f32 %v1274, %v1499
        %v1501 = vpop.f32.mrb[0].mxu0
        %v1502 = vpop.f32.mrb[0].mxu0
        %v1503 = vadd.f32 %v1274, %v1502
        %v1504 = vpop.f32.mrb[0].mxu0
        %1505 = vmatprep.mubr.bf16.mxu0 0
        %1506 = vmatmul.mubr.bf16.gmra.mrb[0].mxu0 %v1457
        %v1507 = vpop.f32.mrb[0].mxu0
        %v1508 = vadd.f32 %v1274, %v1507
        %v1509 = vpop.f32.mrb[0].mxu0
        %v1510 = vpop.f32.mrb[0].mxu0
        %v1511 = vpop.f32.mrb[0].mxu0
        %1512 = vdwg.mxu0
        %v1513 = vsel %vm1342, %v1500, -inf
        %1514 = vmax.xlane.f32.xlu0 %v1513
        %v1515 = vpop.xlane.xlu0 %1514
        %v1516 = vsel %vm1342, %v1503, -inf
        %1517 = vmax.xlane.f32.xlu0 %v1516
        %v1518 = vpop.xlane.xlu0 %1517
        %v1519 = vsel %vm1342, %v1508, -inf
        %1520 = vmax.xlane.f32.xlu0 %v1519
        %v1521 = vpop.xlane.xlu0 %1520
        %v1522 = vsub.f32 %v1500, %v1515
        %v1523 = vsub.f32 %v1503, %v1518
        %v1524 = vsub.f32 %v1508, %v1521
        %v1525 = vmul.f32 %v1522, 1.442695
        %v1526 = vpow.pop %v1525
        %v1527 = vmul.f32 %v1523, 1.442695
        %v1528 = vpow.pop %v1527
        %v1529 = vmul.f32 %v1524, 1.442695
        %v1530 = vpow.pop %v1529
        %v1531 = vsel %vm1342, %v1526, 0.0
        %1532 = vadd.xlane.f32.xlu0 %v1531
        %v1533 = vpop.xlane.xlu0 %1532
        %v1534 = vsel %vm1342, %v1528, 0.0
        %1535 = vadd.xlane.f32.xlu0 %v1534
        %v1536 = vpop.xlane.xlu0 %1535
        %v1537 = vsel %vm1342, %v1530, 0.0
        %1538 = vadd.xlane.f32.xlu0 %v1537
        %v1539 = vpop.xlane.xlu0 %1538
        %v1540 = vrcp.pop %v1533
        %v1541 = vrcp.pop %v1536
        %v1542 = vrcp.pop %v1539
        %v1543 = vmul.f32 %v1526, %v1540
        %v1544 = vmul.f32 %v1528, %v1541
        %v1545 = vmul.f32 %v1530, %v1542
        %v1546 = vpack.c.bf16 %v1544, %v1543
        %v1547 = vpack.c.bf16 %v1545, %v1545
        %1548 = vrot.lane.b32.xlu0 %v1265, 60
        %v1549 = vpop.permute.xlu0 %1548
        %1550 = vrot.lane.b32.xlu0 %v1266, 60
        %v1551 = vpop.permute.xlu0 %1550
        %v1554 = vsel %vm1342, %v1546, 0
        %v1557 = vsel %vm1342, %v1547, 0
        %v1560 = vsel %vm1389, %v1551, 0
        %1562 = vmatprep.subr.bf16.mxu0 0
        %1563 = vmatpush1.bf16.msra.mxu0 %v1549
        %1564 = vmatprep.subr.bf16.mxu0 0
        %1565 = vmatpush1.bf16.msra.mxu0 %v1560
        %1566 = vmatprep.subr.bf16.mxu0 0
        %1567 = vmatpush1.bf16.msra.mxu0 0
        %1568 = vmatprep.subr.bf16.mxu0 0
        %1569 = vmatpush1.bf16.msra.mxu0 0
        %1570 = vmatprep.subr.bf16.mxu0 0
        %1571 = vmatpush1.bf16.msra.mxu0 0
        %1572 = vmatprep.subr.bf16.mxu0 0
        %1573 = vmatpush1.bf16.msra.mxu0 0
        %1574 = vmatprep.subr.bf16.mxu0 0
        %1575 = vmatpush1.bf16.msra.mxu0 0
        %1576 = vmatprep.subr.bf16.mxu0 0
        %1577 = vmatpush1.bf16.msra.mxu0 0
        %1578 = vmatprep.subr.bf16.mxu0 0
        %1579 = vmatpush1.bf16.msra.mxu0 0
        %1580 = vmatprep.subr.bf16.mxu0 0
        %1581 = vmatpush1.bf16.msra.mxu0 0
        %1582 = vmatprep.subr.bf16.mxu0 0
        %1583 = vmatpush1.bf16.msra.mxu0 0
        %1584 = vmatprep.subr.bf16.mxu0 0
        %1585 = vmatpush1.bf16.msra.mxu0 0
        %1586 = vmatprep.subr.bf16.mxu0 0
        %1587 = vmatpush1.bf16.msra.mxu0 0
        %1588 = vmatprep.subr.bf16.mxu0 0
        %1589 = vmatpush1.bf16.msra.mxu0 0
        %1590 = vmatprep.subr.bf16.mxu0 0
        %1591 = vmatpush1.bf16.msra.mxu0 0
        %1592 = vmatprep.subr.bf16.mxu0 0
        %1593 = vmatpush1.bf16.msra.mxu0 0
        %1594 = vmatprep.mubr.bf16.mxu0 0
        %1595 = vmatmul.mubr.bf16.gmra.mrb[0].mxu0 %v1554
        %v1596 = vpop.f32.mrb[0].mxu0
        %v1597 = vadd.f32 0.0, %v1596
        %v1598 = vpop.f32.mrb[0].mxu0
        %v1599 = vpop.f32.mrb[0].mxu0
        %v1600 = vadd.f32 0.0, %v1599
        %v1601 = vpop.f32.mrb[0].mxu0
        %1602 = vmatprep.mubr.bf16.mxu0 0
        %1603 = vmatmul.mubr.bf16.gmra.mrb[0].mxu0 %v1557
        %v1604 = vpop.f32.mrb[0].mxu0
        %v1605 = vadd.f32 0.0, %v1604
        %v1606 = vpop.f32.mrb[0].mxu0
        %v1607 = vpop.f32.mrb[0].mxu0
        %v1608 = vpop.f32.mrb[0].mxu0
        %1609 = vdwg.mxu0
        %v1610 = vpack.c.bf16 %v1600, %v1597
        %v1611 = vpack.c.bf16 %v1605, %v1605
        %v1613 = vunpack.c.l.b16 %v1267
        %v1614 = vpack.c.b16 %v1613, %v1613
        %v1615 = vrot.slane %v1614, 2
        %v1617 = vsel %vm1281, %v1610, 0
        %v1620 = vsel %vm1281, %v1611, 0
        %vm1622 = vcmask 1041408
        %v1624 = vsel %vm1622, %v1615, 0
        %1626 = vmatprep.subr.bf16.mxu0 0
        %1627 = vmatpush1.bf16.msra.mxu0 %v1624
        %1628 = vmatprep.subr.bf16.mxu0 0
        %1629 = vmatpush1.bf16.msra.mxu0 0
        %1630 = vmatprep.subr.bf16.mxu0 0
        %1631 = vmatpush1.bf16.msra.mxu0 0
        %1632 = vmatprep.subr.bf16.mxu0 0
        %1633 = vmatpush1.bf16.msra.mxu0 0
        %1634 = vmatprep.subr.bf16.mxu0 0
        %1635 = vmatpush1.bf16.msra.mxu0 0
        %1636 = vmatprep.subr.bf16.mxu0 0
        %1637 = vmatpush1.bf16.msra.mxu0 0
        %1638 = vmatprep.subr.bf16.mxu0 0
        %1639 = vmatpush1.bf16.msra.mxu0 0
        %1640 = vmatprep.subr.bf16.mxu0 0
        %1641 = vmatpush1.bf16.msra.mxu0 0
        %1642 = vmatprep.subr.bf16.mxu0 0
        %1643 = vmatpush1.bf16.msra.mxu0 0
        %1644 = vmatprep.subr.bf16.mxu0 0
        %1645 = vmatpush1.bf16.msra.mxu0 0
        %1646 = vmatprep.subr.bf16.mxu0 0
        %1647 = vmatpush1.bf16.msra.mxu0 0
        %1648 = vmatprep.subr.bf16.mxu0 0
        %1649 = vmatpush1.bf16.msra.mxu0 0
        %1650 = vmatprep.subr.bf16.mxu0 0
        %1651 = vmatpush1.bf16.msra.mxu0 0
        %1652 = vmatprep.subr.bf16.mxu0 0
        %1653 = vmatpush1.bf16.msra.mxu0 0
        %1654 = vmatprep.subr.bf16.mxu0 0
        %1655 = vmatpush1.bf16.msra.mxu0 0
        %1656 = vmatprep.subr.bf16.mxu0 0
        %1657 = vmatpush1.bf16.msra.mxu0 0
        %1658 = vmatprep.mubr.bf16.mxu0 0
        %1659 = vmatmul.mubr.bf16.gmra.mrb[0].mxu0 %v1617
        %v1660 = vpop.f32.mrb[0].mxu0
        %v1661 = vadd.f32 0.0, %v1660
        %v1662 = vpop.f32.mrb[0].mxu0
        %v1663 = vpop.f32.mrb[0].mxu0
        %v1664 = vadd.f32 0.0, %v1663
        %v1665 = vpop.f32.mrb[0].mxu0
        %1666 = vmatprep.mubr.bf16.mxu0 0
        %1667 = vmatmul.mubr.bf16.gmra.mrb[0].mxu0 %v1620
        %v1668 = vpop.f32.mrb[0].mxu0
        %v1669 = vadd.f32 0.0, %v1668
        %v1670 = vpop.f32.mrb[0].mxu0
        %v1671 = vpop.f32.mrb[0].mxu0
        %v1672 = vpop.f32.mrb[0].mxu0
        %1673 = vdwg.mxu0
        %v1675 = vsel %vm1281, %v1441, 0
        %v1678 = vsel %vm1281, %v1442, 0
        %v1681 = vsel %vm1622, %v1267, 0
        %1683 = vmatprep.subr.bf16.mxu0 0
        %1684 = vmatpush1.bf16.msra.mxu0 %v1681
        %1685 = vmatprep.subr.bf16.mxu0 0
        %1686 = vmatpush1.bf16.msra.mxu0 0
        %1687 = vmatprep.subr.bf16.mxu0 0
        %1688 = vmatpush1.bf16.msra.mxu0 0
        %1689 = vmatprep.subr.bf16.mxu0 0
        %1690 = vmatpush1.bf16.msra.mxu0 0
        %1691 = vmatprep.subr.bf16.mxu0 0
        %1692 = vmatpush1.bf16.msra.mxu0 0
        %1693 = vmatprep.subr.bf16.mxu0 0
        %1694 = vmatpush1.bf16.msra.mxu0 0
        %1695 = vmatprep.subr.bf16.mxu0 0
        %1696 = vmatpush1.bf16.msra.mxu0 0
        %1697 = vmatprep.subr.bf16.mxu0 0
        %1698 = vmatpush1.bf16.msra.mxu0 0
        %1699 = vmatprep.subr.bf16.mxu0 0
        %1700 = vmatpush1.bf16.msra.mxu0 0
        %1701 = vmatprep.subr.bf16.mxu0 0
        %1702 = vmatpush1.bf16.msra.mxu0 0
        %1703 = vmatprep.subr.bf16.mxu0 0
        %1704 = vmatpush1.bf16.msra.mxu0 0
        %1705 = vmatprep.subr.bf16.mxu0 0
        %1706 = vmatpush1.bf16.msra.mxu0 0
        %1707 = vmatprep.subr.bf16.mxu0 0
        %1708 = vmatpush1.bf16.msra.mxu0 0
        %1709 = vmatprep.subr.bf16.mxu0 0
        %1710 = vmatpush1.bf16.msra.mxu0 0
        %1711 = vmatprep.subr.bf16.mxu0 0
        %1712 = vmatpush1.bf16.msra.mxu0 0
        %1713 = vmatprep.subr.bf16.mxu0 0
        %1714 = vmatpush1.bf16.msra.mxu0 0
        %1715 = vmatprep.mubr.bf16.mxu0 0
        %1716 = vmatmul.mubr.bf16.gmra.mrb[0].mxu0 %v1675
        %v1717 = vpop.f32.mrb[0].mxu0
        %v1718 = vadd.f32 %v1661, %v1717
        %v1719 = vpop.f32.mrb[0].mxu0
        %v1720 = vpop.f32.mrb[0].mxu0
        %v1721 = vadd.f32 %v1664, %v1720
        %v1722 = vpop.f32.mrb[0].mxu0
        %1723 = vmatprep.mubr.bf16.mxu0 0
        %1724 = vmatmul.mubr.bf16.gmra.mrb[0].mxu0 %v1678
        %v1725 = vpop.f32.mrb[0].mxu0
        %v1726 = vadd.f32 %v1669, %v1725
        %v1727 = vpop.f32.mrb[0].mxu0
        %v1728 = vpop.f32.mrb[0].mxu0
        %v1729 = vpop.f32.mrb[0].mxu0
        %1730 = vdwg.mxu0
        %1731 = vrot.lane.b32.xlu0 %v1263, 120
        %v1732 = vpop.permute.xlu0 %1731
        %1733 = vrot.lane.b32.xlu0 %v1264, 120
        %v1734 = vpop.permute.xlu0 %1733
        %1735 = vrot.lane.b32.xlu0 %v1265, 88
        %v1736 = vpop.permute.xlu0 %1735
        %1737 = vrot.lane.b32.xlu0 %v1266, 88
        %v1738 = vpop.permute.xlu0 %1737
        %v1740 = vsel %vm1281, %v1732, 0
        %v1743 = vsel %vm1281, %v1734, 0
        %v1746 = vsel %vm1281, %v1736, 0
        %v1749 = vsel %vm1281, %v1738, 0
        %1751 = vmatprep.subr.bf16.mxu0 0
        %1752 = vmatpush1.bf16.xpose.msra.mxu0 %v1746
        %1753 = vmatprep.subr.bf16.mxu0 0
        %1754 = vmatpush1.bf16.xpose.msra.mxu0 %v1749
        %1755 = vmatprep.subr.bf16.mxu0 0
        %1756 = vmatpush1.bf16.xpose.msra.mxu0 0
        %1757 = vmatprep.subr.bf16.mxu0 0
        %1758 = vmatpush1.bf16.xpose.msra.mxu0 0
        %1759 = vmatprep.subr.bf16.mxu0 0
        %1760 = vmatpush1.bf16.xpose.msra.mxu0 0
        %1761 = vmatprep.subr.bf16.mxu0 0
        %1762 = vmatpush1.bf16.xpose.msra.mxu0 0
        %1763 = vmatprep.subr.bf16.mxu0 0
        %1764 = vmatpush1.bf16.xpose.msra.mxu0 0
        %1765 = vmatprep.subr.bf16.mxu0 0
        %1766 = vmatpush1.bf16.xpose.msra.mxu0 0
        %1767 = vmatprep.subr.bf16.mxu0 0
        %1768 = vmatpush1.bf16.xpose.msra.mxu0 0
        %1769 = vmatprep.subr.bf16.mxu0 0
        %1770 = vmatpush1.bf16.xpose.msra.mxu0 0
        %1771 = vmatprep.subr.bf16.mxu0 0
        %1772 = vmatpush1.bf16.xpose.msra.mxu0 0
        %1773 = vmatprep.subr.bf16.mxu0 0
        %1774 = vmatpush1.bf16.xpose.msra.mxu0 0
        %1775 = vmatprep.subr.bf16.mxu0 0
        %1776 = vmatpush1.bf16.xpose.msra.mxu0 0
        %1777 = vmatprep.subr.bf16.mxu0 0
        %1778 = vmatpush1.bf16.xpose.msra.mxu0 0
        %1779 = vmatprep.subr.bf16.mxu0 0
        %1780 = vmatpush1.bf16.xpose.msra.mxu0 0
        %1781 = vmatprep.subr.bf16.mxu0 0
        %1782 = vmatpush1.bf16.xpose.msra.mxu0 0
        %1783 = vmatprep.mubr.bf16.mxu0 0
        %1784 = vmatmul.mubr.bf16.gmra.mrb[0].mxu0 %v1740
        %v1785 = vpop.f32.mrb[0].mxu0
        %v1786 = vadd.f32 %v1274, %v1785
        %v1787 = vpop.f32.mrb[0].mxu0
        %v1788 = vpop.f32.mrb[0].mxu0
        %v1789 = vadd.f32 %v1274, %v1788
        %v1790 = vpop.f32.mrb[0].mxu0
        %1791 = vmatprep.mubr.bf16.mxu0 0
        %1792 = vmatmul.mubr.bf16.gmra.mrb[0].mxu0 %v1743
        %v1793 = vpop.f32.mrb[0].mxu0
        %v1794 = vadd.f32 %v1274, %v1793
        %v1795 = vpop.f32.mrb[0].mxu0
        %v1796 = vpop.f32.mrb[0].mxu0
        %v1797 = vpop.f32.mrb[0].mxu0
        %1798 = vdwg.mxu0
        %v1799 = vsel %vm1342, %v1786, -inf
        %1800 = vmax.xlane.f32.xlu0 %v1799
        %v1801 = vpop.xlane.xlu0 %1800
        %v1802 = vsel %vm1342, %v1789, -inf
        %1803 = vmax.xlane.f32.xlu0 %v1802
        %v1804 = vpop.xlane.xlu0 %1803
        %v1805 = vsel %vm1342, %v1794, -inf
        %1806 = vmax.xlane.f32.xlu0 %v1805
        %v1807 = vpop.xlane.xlu0 %1806
        %v1808 = vsub.f32 %v1786, %v1801
        %v1809 = vsub.f32 %v1789, %v1804
        %v1810 = vsub.f32 %v1794, %v1807
        %v1811 = vmul.f32 %v1808, 1.442695
        %v1812 = vpow.pop %v1811
        %v1813 = vmul.f32 %v1809, 1.442695
        %v1814 = vpow.pop %v1813
        %v1815 = vmul.f32 %v1810, 1.442695
        %v1816 = vpow.pop %v1815
        %v1817 = vsel %vm1342, %v1812, 0.0
        %1818 = vadd.xlane.f32.xlu0 %v1817
        %v1819 = vpop.xlane.xlu0 %1818
        %v1820 = vsel %vm1342, %v1814, 0.0
        %1821 = vadd.xlane.f32.xlu0 %v1820
        %v1822 = vpop.xlane.xlu0 %1821
        %v1823 = vsel %vm1342, %v1816, 0.0
        %1824 = vadd.xlane.f32.xlu0 %v1823
        %v1825 = vpop.xlane.xlu0 %1824
        %v1826 = vrcp.pop %v1819
        %v1827 = vrcp.pop %v1822
        %v1828 = vrcp.pop %v1825
        %v1829 = vmul.f32 %v1812, %v1826
        %v1830 = vmul.f32 %v1814, %v1827
        %v1831 = vmul.f32 %v1816, %v1828
        %v1832 = vpack.c.bf16 %v1830, %v1829
        %v1833 = vpack.c.bf16 %v1831, %v1831
        %1834 = vrot.lane.b32.xlu0 %v1265, 56
        %v1835 = vpop.permute.xlu0 %1834
        %1836 = vrot.lane.b32.xlu0 %v1266, 56
        %v1837 = vpop.permute.xlu0 %1836
        %v1840 = vsel %vm1342, %v1832, 0
        %v1843 = vsel %vm1342, %v1833, 0
        %v1846 = vsel %vm1389, %v1837, 0
        %1848 = vmatprep.subr.bf16.mxu0 0
        %1849 = vmatpush1.bf16.msra.mxu0 %v1835
        %1850 = vmatprep.subr.bf16.mxu0 0
        %1851 = vmatpush1.bf16.msra.mxu0 %v1846
        %1852 = vmatprep.subr.bf16.mxu0 0
        %1853 = vmatpush1.bf16.msra.mxu0 0
        %1854 = vmatprep.subr.bf16.mxu0 0
        %1855 = vmatpush1.bf16.msra.mxu0 0
        %1856 = vmatprep.subr.bf16.mxu0 0
        %1857 = vmatpush1.bf16.msra.mxu0 0
        %1858 = vmatprep.subr.bf16.mxu0 0
        %1859 = vmatpush1.bf16.msra.mxu0 0
        %1860 = vmatprep.subr.bf16.mxu0 0
        %1861 = vmatpush1.bf16.msra.mxu0 0
        %1862 = vmatprep.subr.bf16.mxu0 0
        %1863 = vmatpush1.bf16.msra.mxu0 0
        %1864 = vmatprep.subr.bf16.mxu0 0
        %1865 = vmatpush1.bf16.msra.mxu0 0
        %1866 = vmatprep.subr.bf16.mxu0 0
        %1867 = vmatpush1.bf16.msra.mxu0 0
        %1868 = vmatprep.subr.bf16.mxu0 0
        %1869 = vmatpush1.bf16.msra.mxu0 0
        %1870 = vmatprep.subr.bf16.mxu0 0
        %1871 = vmatpush1.bf16.msra.mxu0 0
        %1872 = vmatprep.subr.bf16.mxu0 0
        %1873 = vmatpush1.bf16.msra.mxu0 0
        %1874 = vmatprep.subr.bf16.mxu0 0
        %1875 = vmatpush1.bf16.msra.mxu0 0
        %1876 = vmatprep.subr.bf16.mxu0 0
        %1877 = vmatpush1.bf16.msra.mxu0 0
        %1878 = vmatprep.subr.bf16.mxu0 0
        %1879 = vmatpush1.bf16.msra.mxu0 0
        %1880 = vmatprep.mubr.bf16.mxu0 0
        %1881 = vmatmul.mubr.bf16.gmra.mrb[0].mxu0 %v1840
        %v1882 = vpop.f32.mrb[0].mxu0
        %v1883 = vadd.f32 0.0, %v1882
        %v1884 = vpop.f32.mrb[0].mxu0
        %v1885 = vpop.f32.mrb[0].mxu0
        %v1886 = vadd.f32 0.0, %v1885
        %v1887 = vpop.f32.mrb[0].mxu0
        %1888 = vmatprep.mubr.bf16.mxu0 0
        %1889 = vmatmul.mubr.bf16.gmra.mrb[0].mxu0 %v1843
        %v1890 = vpop.f32.mrb[0].mxu0
        %v1891 = vadd.f32 0.0, %v1890
        %v1892 = vpop.f32.mrb[0].mxu0
        %v1893 = vpop.f32.mrb[0].mxu0
        %v1894 = vpop.f32.mrb[0].mxu0
        %1895 = vdwg.mxu0
        %v1896 = vpack.c.bf16 %v1886, %v1883
        %v1897 = vpack.c.bf16 %v1891, %v1891
        %v1899 = vsel %vm1281, %v1896, 0
        %v1902 = vsel %vm1281, %v1897, 0
        %v1905 = vsel %vm1622, %v1268, 0
        %1907 = vmatprep.subr.bf16.mxu0 0
        %1908 = vmatpush1.bf16.msra.mxu0 %v1905
        %1909 = vmatprep.subr.bf16.mxu0 0
        %1910 = vmatpush1.bf16.msra.mxu0 0
        %1911 = vmatprep.subr.bf16.mxu0 0
        %1912 = vmatpush1.bf16.msra.mxu0 0
        %1913 = vmatprep.subr.bf16.mxu0 0
        %1914 = vmatpush1.bf16.msra.mxu0 0
        %1915 = vmatprep.subr.bf16.mxu0 0
        %1916 = vmatpush1.bf16.msra.mxu0 0
        %1917 = vmatprep.subr.bf16.mxu0 0
        %1918 = vmatpush1.bf16.msra.mxu0 0
        %1919 = vmatprep.subr.bf16.mxu0 0
        %1920 = vmatpush1.bf16.msra.mxu0 0
        %1921 = vmatprep.subr.bf16.mxu0 0
        %1922 = vmatpush1.bf16.msra.mxu0 0
        %1923 = vmatprep.subr.bf16.mxu0 0
        %1924 = vmatpush1.bf16.msra.mxu0 0
        %1925 = vmatprep.subr.bf16.mxu0 0
        %1926 = vmatpush1.bf16.msra.mxu0 0
        %1927 = vmatprep.subr.bf16.mxu0 0
        %1928 = vmatpush1.bf16.msra.mxu0 0
        %1929 = vmatprep.subr.bf16.mxu0 0
        %1930 = vmatpush1.bf16.msra.mxu0 0
        %1931 = vmatprep.subr.bf16.mxu0 0
        %1932 = vmatpush1.bf16.msra.mxu0 0
        %1933 = vmatprep.subr.bf16.mxu0 0
        %1934 = vmatpush1.bf16.msra.mxu0 0
        %1935 = vmatprep.subr.bf16.mxu0 0
        %1936 = vmatpush1.bf16.msra.mxu0 0
        %1937 = vmatprep.subr.bf16.mxu0 0
        %1938 = vmatpush1.bf16.msra.mxu0 0
        %1939 = vmatprep.mubr.bf16.mxu0 0
        %1940 = vmatmul.mubr.bf16.gmra.mrb[0].mxu0 %v1899
        %v1941 = vpop.f32.mrb[0].mxu0
        %v1942 = vadd.f32 0.0, %v1941
        %v1943 = vpop.f32.mrb[0].mxu0
        %v1944 = vpop.f32.mrb[0].mxu0
        %v1945 = vadd.f32 0.0, %v1944
        %v1946 = vpop.f32.mrb[0].mxu0
        %1947 = vmatprep.mubr.bf16.mxu0 0
        %1948 = vmatmul.mubr.bf16.gmra.mrb[0].mxu0 %v1902
        %v1949 = vpop.f32.mrb[0].mxu0
        %v1950 = vadd.f32 0.0, %v1949
        %v1951 = vpop.f32.mrb[0].mxu0
        %v1952 = vpop.f32.mrb[0].mxu0
        %v1953 = vpop.f32.mrb[0].mxu0
        %1954 = vdwg.mxu0
        %v1955 = vadd.f32 %v1718, %v1942
        %v1956 = vadd.f32 %v1721, %v1945
        %v1957 = vadd.f32 %v1726, %v1950
        %1958 = vrot.lane.b32.xlu0 %v1263, 116
        %v1959 = vpop.permute.xlu0 %1958
        %1960 = vrot.lane.b32.xlu0 %v1264, 116
        %v1961 = vpop.permute.xlu0 %1960
        %1962 = vrot.lane.b32.xlu0 %v1265, 84
        %v1963 = vpop.permute.xlu0 %1962
        %1964 = vrot.lane.b32.xlu0 %v1266, 84
        %v1965 = vpop.permute.xlu0 %1964
        %v1967 = vsel %vm1281, %v1959, 0
        %v1970 = vsel %vm1281, %v1961, 0
        %v1973 = vsel %vm1281, %v1963, 0
        %v1976 = vsel %vm1281, %v1965, 0
        %1978 = vmatprep.subr.bf16.mxu0 0
        %1979 = vmatpush1.bf16.xpose.msra.mxu0 %v1973
        %1980 = vmatprep.subr.bf16.mxu0 0
        %1981 = vmatpush1.bf16.xpose.msra.mxu0 %v1976
        %1982 = vmatprep.subr.bf16.mxu0 0
        %1983 = vmatpush1.bf16.xpose.msra.mxu0 0
        %1984 = vmatprep.subr.bf16.mxu0 0
        %1985 = vmatpush1.bf16.xpose.msra.mxu0 0
        %1986 = vmatprep.subr.bf16.mxu0 0
        %1987 = vmatpush1.bf16.xpose.msra.mxu0 0
        %1988 = vmatprep.subr.bf16.mxu0 0
        %1989 = vmatpush1.bf16.xpose.msra.mxu0 0
        %1990 = vmatprep.subr.bf16.mxu0 0
        %1991 = vmatpush1.bf16.xpose.msra.mxu0 0
        %1992 = vmatprep.subr.bf16.mxu0 0
        %1993 = vmatpush1.bf16.xpose.msra.mxu0 0
        %1994 = vmatprep.subr.bf16.mxu0 0
        %1995 = vmatpush1.bf16.xpose.msra.mxu0 0
        %1996 = vmatprep.subr.bf16.mxu0 0
        %1997 = vmatpush1.bf16.xpose.msra.mxu0 0
        %1998 = vmatprep.subr.bf16.mxu0 0
        %1999 = vmatpush1.bf16.xpose.msra.mxu0 0
        %2000 = vmatprep.subr.bf16.mxu0 0
        %2001 = vmatpush1.bf16.xpose.msra.mxu0 0
        %2002 = vmatprep.subr.bf16.mxu0 0
        %2003 = vmatpush1.bf16.xpose.msra.mxu0 0
        %2004 = vmatprep.subr.bf16.mxu0 0
        %2005 = vmatpush1.bf16.xpose.msra.mxu0 0
        %2006 = vmatprep.subr.bf16.mxu0 0
        %2007 = vmatpush1.bf16.xpose.msra.mxu0 0
        %2008 = vmatprep.subr.bf16.mxu0 0
        %2009 = vmatpush1.bf16.xpose.msra.mxu0 0
        %2010 = vmatprep.mubr.bf16.mxu0 0
        %2011 = vmatmul.mubr.bf16.gmra.mrb[0].mxu0 %v1967
        %v2012 = vpop.f32.mrb[0].mxu0
        %v2013 = vadd.f32 %v1274, %v2012
        %v2014 = vpop.f32.mrb[0].mxu0
        %v2015 = vpop.f32.mrb[0].mxu0
        %v2016 = vadd.f32 %v1274, %v2015
        %v2017 = vpop.f32.mrb[0].mxu0
        %2018 = vmatprep.mubr.bf16.mxu0 0
        %2019 = vmatmul.mubr.bf16.gmra.mrb[0].mxu0 %v1970
        %v2020 = vpop.f32.mrb[0].mxu0
        %v2021 = vadd.f32 %v1274, %v2020
        %v2022 = vpop.f32.mrb[0].mxu0
        %v2023 = vpop.f32.mrb[0].mxu0
        %v2024 = vpop.f32.mrb[0].mxu0
        %2025 = vdwg.mxu0
        %v2026 = vsel %vm1342, %v2013, -inf
        %2027 = vmax.xlane.f32.xlu0 %v2026
        %v2028 = vpop.xlane.xlu0 %2027
        %v2029 = vsel %vm1342, %v2016, -inf
        %2030 = vmax.xlane.f32.xlu0 %v2029
        %v2031 = vpop.xlane.xlu0 %2030
        %v2032 = vsel %vm1342, %v2021, -inf
        %2033 = vmax.xlane.f32.xlu0 %v2032
        %v2034 = vpop.xlane.xlu0 %2033
        %v2035 = vsub.f32 %v2013, %v2028
        %v2036 = vsub.f32 %v2016, %v2031
        %v2037 = vsub.f32 %v2021, %v2034
        %v2038 = vmul.f32 %v2035, 1.442695
        %v2039 = vpow.pop %v2038
        %v2040 = vmul.f32 %v2036, 1.442695
        %v2041 = vpow.pop %v2040
        %v2042 = vmul.f32 %v2037, 1.442695
        %v2043 = vpow.pop %v2042
        %v2044 = vsel %vm1342, %v2039, 0.0
        %2045 = vadd.xlane.f32.xlu0 %v2044
        %v2046 = vpop.xlane.xlu0 %2045
        %v2047 = vsel %vm1342, %v2041, 0.0
        %2048 = vadd.xlane.f32.xlu0 %v2047
        %v2049 = vpop.xlane.xlu0 %2048
        %v2050 = vsel %vm1342, %v2043, 0.0
        %2051 = vadd.xlane.f32.xlu0 %v2050
        %v2052 = vpop.xlane.xlu0 %2051
        %v2053 = vrcp.pop %v2046
        %v2054 = vrcp.pop %v2049
        %v2055 = vrcp.pop %v2052
        %v2056 = vmul.f32 %v2039, %v2053
        %v2057 = vmul.f32 %v2041, %v2054
        %v2058 = vmul.f32 %v2043, %v2055
        %v2059 = vpack.c.bf16 %v2057, %v2056
        %v2060 = vpack.c.bf16 %v2058, %v2058
        %2061 = vrot.lane.b32.xlu0 %v1265, 52
        %v2062 = vpop.permute.xlu0 %2061
        %2063 = vrot.lane.b32.xlu0 %v1266, 52
        %v2064 = vpop.permute.xlu0 %2063
        %v2067 = vsel %vm1342, %v2059, 0
        %v2070 = vsel %vm1342, %v2060, 0
        %v2073 = vsel %vm1389, %v2064, 0
        %2075 = vmatprep.subr.bf16.mxu0 0
        %2076 = vmatpush1.bf16.msra.mxu0 %v2062
        %2077 = vmatprep.subr.bf16.mxu0 0
        %2078 = vmatpush1.bf16.msra.mxu0 %v2073
        %2079 = vmatprep.subr.bf16.mxu0 0
        %2080 = vmatpush1.bf16.msra.mxu0 0
        %2081 = vmatprep.subr.bf16.mxu0 0
        %2082 = vmatpush1.bf16.msra.mxu0 0
        %2083 = vmatprep.subr.bf16.mxu0 0
        %2084 = vmatpush1.bf16.msra.mxu0 0
        %2085 = vmatprep.subr.bf16.mxu0 0
        %2086 = vmatpush1.bf16.msra.mxu0 0
        %2087 = vmatprep.subr.bf16.mxu0 0
        %2088 = vmatpush1.bf16.msra.mxu0 0
        %2089 = vmatprep.subr.bf16.mxu0 0
        %2090 = vmatpush1.bf16.msra.mxu0 0
        %2091 = vmatprep.subr.bf16.mxu0 0
        %2092 = vmatpush1.bf16.msra.mxu0 0
        %2093 = vmatprep.subr.bf16.mxu0 0
        %2094 = vmatpush1.bf16.msra.mxu0 0
        %2095 = vmatprep.subr.bf16.mxu0 0
        %2096 = vmatpush1.bf16.msra.mxu0 0
        %2097 = vmatprep.subr.bf16.mxu0 0
        %2098 = vmatpush1.bf16.msra.mxu0 0
        %2099 = vmatprep.subr.bf16.mxu0 0
        %2100 = vmatpush1.bf16.msra.mxu0 0
        %2101 = vmatprep.subr.bf16.mxu0 0
        %2102 = vmatpush1.bf16.msra.mxu0 0
        %2103 = vmatprep.subr.bf16.mxu0 0
        %2104 = vmatpush1.bf16.msra.mxu0 0
        %2105 = vmatprep.subr.bf16.mxu0 0
        %2106 = vmatpush1.bf16.msra.mxu0 0
        %2107 = vmatprep.mubr.bf16.mxu0 0
        %2108 = vmatmul.mubr.bf16.gmra.mrb[0].mxu0 %v2067
        %v2109 = vpop.f32.mrb[0].mxu0
        %v2110 = vadd.f32 0.0, %v2109
        %v2111 = vpop.f32.mrb[0].mxu0
        %v2112 = vpop.f32.mrb[0].mxu0
        %v2113 = vadd.f32 0.0, %v2112
        %v2114 = vpop.f32.mrb[0].mxu0
        %2115 = vmatprep.mubr.bf16.mxu0 0
        %2116 = vmatmul.mubr.bf16.gmra.mrb[0].mxu0 %v2070
        %v2117 = vpop.f32.mrb[0].mxu0
        %v2118 = vadd.f32 0.0, %v2117
        %v2119 = vpop.f32.mrb[0].mxu0
        %v2120 = vpop.f32.mrb[0].mxu0
        %v2121 = vpop.f32.mrb[0].mxu0
        %2122 = vdwg.mxu0
        %v2123 = vpack.c.bf16 %v2113, %v2110
        %v2124 = vpack.c.bf16 %v2118, %v2118
        %v2126 = vunpack.c.l.b16 %v1268
        %v2127 = vpack.c.b16 %v2126, %v2126
        %v2128 = vrot.slane %v2127, 2
        %v2130 = vsel %vm1281, %v2123, 0
        %v2133 = vsel %vm1281, %v2124, 0
        %v2136 = vsel %vm1622, %v2128, 0
        %2138 = vmatprep.subr.bf16.mxu0 0
        %2139 = vmatpush1.bf16.msra.mxu0 %v2136
        %2140 = vmatprep.subr.bf16.mxu0 0
        %2141 = vmatpush1.bf16.msra.mxu0 0
        %2142 = vmatprep.subr.bf16.mxu0 0
        %2143 = vmatpush1.bf16.msra.mxu0 0
        %2144 = vmatprep.subr.bf16.mxu0 0
        %2145 = vmatpush1.bf16.msra.mxu0 0
        %2146 = vmatprep.subr.bf16.mxu0 0
        %2147 = vmatpush1.bf16.msra.mxu0 0
        %2148 = vmatprep.subr.bf16.mxu0 0
        %2149 = vmatpush1.bf16.msra.mxu0 0
        %2150 = vmatprep.subr.bf16.mxu0 0
        %2151 = vmatpush1.bf16.msra.mxu0 0
        %2152 = vmatprep.subr.bf16.mxu0 0
        %2153 = vmatpush1.bf16.msra.mxu0 0
        %2154 = vmatprep.subr.bf16.mxu0 0
        %2155 = vmatpush1.bf16.msra.mxu0 0
        %2156 = vmatprep.subr.bf16.mxu0 0
        %2157 = vmatpush1.bf16.msra.mxu0 0
        %2158 = vmatprep.subr.bf16.mxu0 0
        %2159 = vmatpush1.bf16.msra.mxu0 0
        %2160 = vmatprep.subr.bf16.mxu0 0
        %2161 = vmatpush1.bf16.msra.mxu0 0
        %2162 = vmatprep.subr.bf16.mxu0 0
        %2163 = vmatpush1.bf16.msra.mxu0 0
        %2164 = vmatprep.subr.bf16.mxu0 0
        %2165 = vmatpush1.bf16.msra.mxu0 0
        %2166 = vmatprep.subr.bf16.mxu0 0
        %2167 = vmatpush1.bf16.msra.mxu0 0
        %2168 = vmatprep.subr.bf16.mxu0 0
        %2169 = vmatpush1.bf16.msra.mxu0 0
        %2170 = vmatprep.mubr.bf16.mxu0 0
        %2171 = vmatmul.mubr.bf16.gmra.mrb[0].mxu0 %v2130
        %v2172 = vpop.f32.mrb[0].mxu0
        %v2173 = vadd.f32 0.0, %v2172
        %v2174 = vpop.f32.mrb[0].mxu0
        %v2175 = vpop.f32.mrb[0].mxu0
        %v2176 = vadd.f32 0.0, %v2175
        %v2177 = vpop.f32.mrb[0].mxu0
        %2178 = vmatprep.mubr.bf16.mxu0 0
        %2179 = vmatmul.mubr.bf16.gmra.mrb[0].mxu0 %v2133
        %v2180 = vpop.f32.mrb[0].mxu0
        %v2181 = vadd.f32 0.0, %v2180
        %v2182 = vpop.f32.mrb[0].mxu0
        %v2183 = vpop.f32.mrb[0].mxu0
        %v2184 = vpop.f32.mrb[0].mxu0
        %2185 = vdwg.mxu0
        %v2186 = vadd.f32 %v1955, %v2173
        %v2187 = vadd.f32 %v1956, %v2176
        %v2188 = vadd.f32 %v1957, %v2181
        %2189 = vrot.lane.b32.xlu0 %v1263, 112
        %v2190 = vpop.permute.xlu0 %2189
        %2191 = vrot.lane.b32.xlu0 %v1264, 112
        %v2192 = vpop.permute.xlu0 %2191
        %2193 = vrot.lane.b32.xlu0 %v1265, 80
        %v2194 = vpop.permute.xlu0 %2193
        %2195 = vrot.lane.b32.xlu0 %v1266, 80
        %v2196 = vpop.permute.xlu0 %2195
        %v2198 = vsel %vm1281, %v2190, 0
        %v2201 = vsel %vm1281, %v2192, 0
        %v2204 = vsel %vm1281, %v2194, 0
        %v2207 = vsel %vm1281, %v2196, 0
        %2209 = vmatprep.subr.bf16.mxu0 0
        %2210 = vmatpush1.bf16.xpose.msra.mxu0 %v2204
        %2211 = vmatprep.subr.bf16.mxu0 0
        %2212 = vmatpush1.bf16.xpose.msra.mxu0 %v2207
        %2213 = vmatprep.subr.bf16.mxu0 0
        %2214 = vmatpush1.bf16.xpose.msra.mxu0 0
        %2215 = vmatprep.subr.bf16.mxu0 0
        %2216 = vmatpush1.bf16.xpose.msra.mxu0 0
        %2217 = vmatprep.subr.bf16.mxu0 0
        %2218 = vmatpush1.bf16.xpose.msra.mxu0 0
        %2219 = vmatprep.subr.bf16.mxu0 0
        %2220 = vmatpush1.bf16.xpose.msra.mxu0 0
        %2221 = vmatprep.subr.bf16.mxu0 0
        %2222 = vmatpush1.bf16.xpose.msra.mxu0 0
        %2223 = vmatprep.subr.bf16.mxu0 0
        %2224 = vmatpush1.bf16.xpose.msra.mxu0 0
        %2225 = vmatprep.subr.bf16.mxu0 0
        %2226 = vmatpush1.bf16.xpose.msra.mxu0 0
        %2227 = vmatprep.subr.bf16.mxu0 0
        %2228 = vmatpush1.bf16.xpose.msra.mxu0 0
        %2229 = vmatprep.subr.bf16.mxu0 0
        %2230 = vmatpush1.bf16.xpose.msra.mxu0 0
        %2231 = vmatprep.subr.bf16.mxu0 0
        %2232 = vmatpush1.bf16.xpose.msra.mxu0 0
        %2233 = vmatprep.subr.bf16.mxu0 0
        %2234 = vmatpush1.bf16.xpose.msra.mxu0 0
        %2235 = vmatprep.subr.bf16.mxu0 0
        %2236 = vmatpush1.bf16.xpose.msra.mxu0 0
        %2237 = vmatprep.subr.bf16.mxu0 0
        %2238 = vmatpush1.bf16.xpose.msra.mxu0 0
        %2239 = vmatprep.subr.bf16.mxu0 0
        %2240 = vmatpush1.bf16.xpose.msra.mxu0 0
        %2241 = vmatprep.mubr.bf16.mxu0 0
        %2242 = vmatmul.mubr.bf16.gmra.mrb[0].mxu0 %v2198
        %v2243 = vpop.f32.mrb[0].mxu0
        %v2244 = vadd.f32 %v1274, %v2243
        %v2245 = vpop.f32.mrb[0].mxu0
        %v2246 = vpop.f32.mrb[0].mxu0
        %v2247 = vadd.f32 %v1274, %v2246
        %v2248 = vpop.f32.mrb[0].mxu0
        %2249 = vmatprep.mubr.bf16.mxu0 0
        %2250 = vmatmul.mubr.bf16.gmra.mrb[0].mxu0 %v2201
        %v2251 = vpop.f32.mrb[0].mxu0
        %v2252 = vadd.f32 %v1274, %v2251
        %v2253 = vpop.f32.mrb[0].mxu0
        %v2254 = vpop.f32.mrb[0].mxu0
        %v2255 = vpop.f32.mrb[0].mxu0
        %2256 = vdwg.mxu0
        %v2257 = vsel %vm1342, %v2244, -inf
        %2258 = vmax.xlane.f32.xlu0 %v2257
        %v2259 = vpop.xlane.xlu0 %2258
        %v2260 = vsel %vm1342, %v2247, -inf
        %2261 = vmax.xlane.f32.xlu0 %v2260
        %v2262 = vpop.xlane.xlu0 %2261
        %v2263 = vsel %vm1342, %v2252, -inf
        %2264 = vmax.xlane.f32.xlu0 %v2263
        %v2265 = vpop.xlane.xlu0 %2264
        %v2266 = vsub.f32 %v2244, %v2259
        %v2267 = vsub.f32 %v2247, %v2262
        %v2268 = vsub.f32 %v2252, %v2265
        %v2269 = vmul.f32 %v2266, 1.442695
        %v2270 = vpow.pop %v2269
        %v2271 = vmul.f32 %v2267, 1.442695
        %v2272 = vpow.pop %v2271
        %v2273 = vmul.f32 %v2268, 1.442695
        %v2274 = vpow.pop %v2273
        %v2275 = vsel %vm1342, %v2270, 0.0
        %2276 = vadd.xlane.f32.xlu0 %v2275
        %v2277 = vpop.xlane.xlu0 %2276
        %v2278 = vsel %vm1342, %v2272, 0.0
        %2279 = vadd.xlane.f32.xlu0 %v2278
        %v2280 = vpop.xlane.xlu0 %2279
        %v2281 = vsel %vm1342, %v2274, 0.0
        %2282 = vadd.xlane.f32.xlu0 %v2281
        %v2283 = vpop.xlane.xlu0 %2282
        %v2284 = vrcp.pop %v2277
        %v2285 = vrcp.pop %v2280
        %v2286 = vrcp.pop %v2283
        %v2287 = vmul.f32 %v2270, %v2284
        %v2288 = vmul.f32 %v2272, %v2285
        %v2289 = vmul.f32 %v2274, %v2286
        %v2290 = vpack.c.bf16 %v2288, %v2287
        %v2291 = vpack.c.bf16 %v2289, %v2289
        %2292 = vrot.lane.b32.xlu0 %v1265, 48
        %v2293 = vpop.permute.xlu0 %2292
        %2294 = vrot.lane.b32.xlu0 %v1266, 48
        %v2295 = vpop.permute.xlu0 %2294
        %v2298 = vsel %vm1342, %v2290, 0
        %v2301 = vsel %vm1342, %v2291, 0
        %v2304 = vsel %vm1389, %v2295, 0
        %2306 = vmatprep.subr.bf16.mxu0 0
        %2307 = vmatpush1.bf16.msra.mxu0 %v2293
        %2308 = vmatprep.subr.bf16.mxu0 0
        %2309 = vmatpush1.bf16.msra.mxu0 %v2304
        %2310 = vmatprep.subr.bf16.mxu0 0
        %2311 = vmatpush1.bf16.msra.mxu0 0
        %2312 = vmatprep.subr.bf16.mxu0 0
        %2313 = vmatpush1.bf16.msra.mxu0 0
        %2314 = vmatprep.subr.bf16.mxu0 0
        %2315 = vmatpush1.bf16.msra.mxu0 0
        %2316 = vmatprep.subr.bf16.mxu0 0
        %2317 = vmatpush1.bf16.msra.mxu0 0
        %2318 = vmatprep.subr.bf16.mxu0 0
        %2319 = vmatpush1.bf16.msra.mxu0 0
        %2320 = vmatprep.subr.bf16.mxu0 0
        %2321 = vmatpush1.bf16.msra.mxu0 0
        %2322 = vmatprep.subr.bf16.mxu0 0
        %2323 = vmatpush1.bf16.msra.mxu0 0
        %2324 = vmatprep.subr.bf16.mxu0 0
        %2325 = vmatpush1.bf16.msra.mxu0 0
        %2326 = vmatprep.subr.bf16.mxu0 0
        %2327 = vmatpush1.bf16.msra.mxu0 0
        %2328 = vmatprep.subr.bf16.mxu0 0
        %2329 = vmatpush1.bf16.msra.mxu0 0
        %2330 = vmatprep.subr.bf16.mxu0 0
        %2331 = vmatpush1.bf16.msra.mxu0 0
        %2332 = vmatprep.subr.bf16.mxu0 0
        %2333 = vmatpush1.bf16.msra.mxu0 0
        %2334 = vmatprep.subr.bf16.mxu0 0
        %2335 = vmatpush1.bf16.msra.mxu0 0
        %2336 = vmatprep.subr.bf16.mxu0 0
        %2337 = vmatpush1.bf16.msra.mxu0 0
        %2338 = vmatprep.mubr.bf16.mxu0 0
        %2339 = vmatmul.mubr.bf16.gmra.mrb[0].mxu0 %v2298
        %v2340 = vpop.f32.mrb[0].mxu0
        %v2341 = vadd.f32 0.0, %v2340
        %v2342 = vpop.f32.mrb[0].mxu0
        %v2343 = vpop.f32.mrb[0].mxu0
        %v2344 = vadd.f32 0.0, %v2343
        %v2345 = vpop.f32.mrb[0].mxu0
        %2346 = vmatprep.mubr.bf16.mxu0 0
        %2347 = vmatmul.mubr.bf16.gmra.mrb[0].mxu0 %v2301
        %v2348 = vpop.f32.mrb[0].mxu0
        %v2349 = vadd.f32 0.0, %v2348
        %v2350 = vpop.f32.mrb[0].mxu0
        %v2351 = vpop.f32.mrb[0].mxu0
        %v2352 = vpop.f32.mrb[0].mxu0
        %2353 = vdwg.mxu0
        %v2354 = vpack.c.bf16 %v2344, %v2341
        %v2355 = vpack.c.bf16 %v2349, %v2349
        %v2357 = vsel %vm1281, %v2354, 0
        %v2360 = vsel %vm1281, %v2355, 0
        %v2363 = vsel %vm1622, %v1269, 0
        %2365 = vmatprep.subr.bf16.mxu0 0
        %2366 = vmatpush1.bf16.msra.mxu0 %v2363
        %2367 = vmatprep.subr.bf16.mxu0 0
        %2368 = vmatpush1.bf16.msra.mxu0 0
        %2369 = vmatprep.subr.bf16.mxu0 0
        %2370 = vmatpush1.bf16.msra.mxu0 0
        %2371 = vmatprep.subr.bf16.mxu0 0
        %2372 = vmatpush1.bf16.msra.mxu0 0
        %2373 = vmatprep.subr.bf16.mxu0 0
        %2374 = vmatpush1.bf16.msra.mxu0 0
        %2375 = vmatprep.subr.bf16.mxu0 0
        %2376 = vmatpush1.bf16.msra.mxu0 0
        %2377 = vmatprep.subr.bf16.mxu0 0
        %2378 = vmatpush1.bf16.msra.mxu0 0
        %2379 = vmatprep.subr.bf16.mxu0 0
        %2380 = vmatpush1.bf16.msra.mxu0 0
        %2381 = vmatprep.subr.bf16.mxu0 0
        %2382 = vmatpush1.bf16.msra.mxu0 0
        %2383 = vmatprep.subr.bf16.mxu0 0
        %2384 = vmatpush1.bf16.msra.mxu0 0
        %2385 = vmatprep.subr.bf16.mxu0 0
        %2386 = vmatpush1.bf16.msra.mxu0 0
        %2387 = vmatprep.subr.bf16.mxu0 0
        %2388 = vmatpush1.bf16.msra.mxu0 0
        %2389 = vmatprep.subr.bf16.mxu0 0
        %2390 = vmatpush1.bf16.msra.mxu0 0
        %2391 = vmatprep.subr.bf16.mxu0 0
        %2392 = vmatpush1.bf16.msra.mxu0 0
        %2393 = vmatprep.subr.bf16.mxu0 0
        %2394 = vmatpush1.bf16.msra.mxu0 0
        %2395 = vmatprep.subr.bf16.mxu0 0
        %2396 = vmatpush1.bf16.msra.mxu0 0
        %2397 = vmatprep.mubr.bf16.mxu0 0
        %2398 = vmatmul.mubr.bf16.gmra.mrb[0].mxu0 %v2357
        %v2399 = vpop.f32.mrb[0].mxu0
        %v2400 = vadd.f32 0.0, %v2399
        %v2401 = vpop.f32.mrb[0].mxu0
        %v2402 = vpop.f32.mrb[0].mxu0
        %v2403 = vadd.f32 0.0, %v2402
        %v2404 = vpop.f32.mrb[0].mxu0
        %2405 = vmatprep.mubr.bf16.mxu0 0
        %2406 = vmatmul.mubr.bf16.gmra.mrb[0].mxu0 %v2360
        %v2407 = vpop.f32.mrb[0].mxu0
        %v2408 = vadd.f32 0.0, %v2407
        %v2409 = vpop.f32.mrb[0].mxu0
        %v2410 = vpop.f32.mrb[0].mxu0
        %v2411 = vpop.f32.mrb[0].mxu0
        %2412 = vdwg.mxu0
        %v2413 = vadd.f32 %v2186, %v2400
        %v2414 = vadd.f32 %v2187, %v2403
        %v2415 = vadd.f32 %v2188, %v2408
        %2416 = vrot.lane.b32.xlu0 %v1263, 108
        %v2417 = vpop.permute.xlu0 %2416
        %2418 = vrot.lane.b32.xlu0 %v1264, 108
        %v2419 = vpop.permute.xlu0 %2418
        %2420 = vrot.lane.b32.xlu0 %v1265, 76
        %v2421 = vpop.permute.xlu0 %2420
        %2422 = vrot.lane.b32.xlu0 %v1266, 76
        %v2423 = vpop.permute.xlu0 %2422
        %v2425 = vsel %vm1281, %v2417, 0
        %v2428 = vsel %vm1281, %v2419, 0
        %v2431 = vsel %vm1281, %v2421, 0
        %v2434 = vsel %vm1281, %v2423, 0
        %2436 = vmatprep.subr.bf16.mxu0 0
        %2437 = vmatpush1.bf16.xpose.msra.mxu0 %v2431
        %2438 = vmatprep.subr.bf16.mxu0 0
        %2439 = vmatpush1.bf16.xpose.msra.mxu0 %v2434
        %2440 = vmatprep.subr.bf16.mxu0 0
        %2441 = vmatpush1.bf16.xpose.msra.mxu0 0
        %2442 = vmatprep.subr.bf16.mxu0 0
        %2443 = vmatpush1.bf16.xpose.msra.mxu0 0
        %2444 = vmatprep.subr.bf16.mxu0 0
        %2445 = vmatpush1.bf16.xpose.msra.mxu0 0
        %2446 = vmatprep.subr.bf16.mxu0 0
        %2447 = vmatpush1.bf16.xpose.msra.mxu0 0
        %2448 = vmatprep.subr.bf16.mxu0 0
        %2449 = vmatpush1.bf16.xpose.msra.mxu0 0
        %2450 = vmatprep.subr.bf16.mxu0 0
        %2451 = vmatpush1.bf16.xpose.msra.mxu0 0
        %2452 = vmatprep.subr.bf16.mxu0 0
        %2453 = vmatpush1.bf16.xpose.msra.mxu0 0
        %2454 = vmatprep.subr.bf16.mxu0 0
        %2455 = vmatpush1.bf16.xpose.msra.mxu0 0
        %2456 = vmatprep.subr.bf16.mxu0 0
        %2457 = vmatpush1.bf16.xpose.msra.mxu0 0
        %2458 = vmatprep.subr.bf16.mxu0 0
        %2459 = vmatpush1.bf16.xpose.msra.mxu0 0
        %2460 = vmatprep.subr.bf16.mxu0 0
        %2461 = vmatpush1.bf16.xpose.msra.mxu0 0
        %2462 = vmatprep.subr.bf16.mxu0 0
        %2463 = vmatpush1.bf16.xpose.msra.mxu0 0
        %2464 = vmatprep.subr.bf16.mxu0 0
        %2465 = vmatpush1.bf16.xpose.msra.mxu0 0
        %2466 = vmatprep.subr.bf16.mxu0 0
        %2467 = vmatpush1.bf16.xpose.msra.mxu0 0
        %2468 = vmatprep.mubr.bf16.mxu0 0
        %2469 = vmatmul.mubr.bf16.gmra.mrb[0].mxu0 %v2425
        %v2470 = vpop.f32.mrb[0].mxu0
        %v2471 = vadd.f32 %v1274, %v2470
        %v2472 = vpop.f32.mrb[0].mxu0
        %v2473 = vpop.f32.mrb[0].mxu0
        %v2474 = vadd.f32 %v1274, %v2473
        %v2475 = vpop.f32.mrb[0].mxu0
        %2476 = vmatprep.mubr.bf16.mxu0 0
        %2477 = vmatmul.mubr.bf16.gmra.mrb[0].mxu0 %v2428
        %v2478 = vpop.f32.mrb[0].mxu0
        %v2479 = vadd.f32 %v1274, %v2478
        %v2480 = vpop.f32.mrb[0].mxu0
        %v2481 = vpop.f32.mrb[0].mxu0
        %v2482 = vpop.f32.mrb[0].mxu0
        %2483 = vdwg.mxu0
        %v2484 = vsel %vm1342, %v2471, -inf
        %2485 = vmax.xlane.f32.xlu0 %v2484
        %v2486 = vpop.xlane.xlu0 %2485
        %v2487 = vsel %vm1342, %v2474, -inf
        %2488 = vmax.xlane.f32.xlu0 %v2487
        %v2489 = vpop.xlane.xlu0 %2488
        %v2490 = vsel %vm1342, %v2479, -inf
        %2491 = vmax.xlane.f32.xlu0 %v2490
        %v2492 = vpop.xlane.xlu0 %2491
        %v2493 = vsub.f32 %v2471, %v2486
        %v2494 = vsub.f32 %v2474, %v2489
        %v2495 = vsub.f32 %v2479, %v2492
        %v2496 = vmul.f32 %v2493, 1.442695
        %v2497 = vpow.pop %v2496
        %v2498 = vmul.f32 %v2494, 1.442695
        %v2499 = vpow.pop %v2498
        %v2500 = vmul.f32 %v2495, 1.442695
        %v2501 = vpow.pop %v2500
        %v2502 = vsel %vm1342, %v2497, 0.0
        %2503 = vadd.xlane.f32.xlu0 %v2502
        %v2504 = vpop.xlane.xlu0 %2503
        %v2505 = vsel %vm1342, %v2499, 0.0
        %2506 = vadd.xlane.f32.xlu0 %v2505
        %v2507 = vpop.xlane.xlu0 %2506
        %v2508 = vsel %vm1342, %v2501, 0.0
        %2509 = vadd.xlane.f32.xlu0 %v2508
        %v2510 = vpop.xlane.xlu0 %2509
        %v2511 = vrcp.pop %v2504
        %v2512 = vrcp.pop %v2507
        %v2513 = vrcp.pop %v2510
        %v2514 = vmul.f32 %v2497, %v2511
        %v2515 = vmul.f32 %v2499, %v2512
        %v2516 = vmul.f32 %v2501, %v2513
        %v2517 = vpack.c.bf16 %v2515, %v2514
        %v2518 = vpack.c.bf16 %v2516, %v2516
        %2519 = vrot.lane.b32.xlu0 %v1265, 44
        %v2520 = vpop.permute.xlu0 %2519
        %2521 = vrot.lane.b32.xlu0 %v1266, 44
        %v2522 = vpop.permute.xlu0 %2521
        %v2525 = vsel %vm1342, %v2517, 0
        %v2528 = vsel %vm1342, %v2518, 0
        %v2531 = vsel %vm1389, %v2522, 0
        %2533 = vmatprep.subr.bf16.mxu0 0
        %2534 = vmatpush1.bf16.msra.mxu0 %v2520
        %2535 = vmatprep.subr.bf16.mxu0 0
        %2536 = vmatpush1.bf16.msra.mxu0 %v2531
        %2537 = vmatprep.subr.bf16.mxu0 0
        %2538 = vmatpush1.bf16.msra.mxu0 0
        %2539 = vmatprep.subr.bf16.mxu0 0
        %2540 = vmatpush1.bf16.msra.mxu0 0
        %2541 = vmatprep.subr.bf16.mxu0 0
        %2542 = vmatpush1.bf16.msra.mxu0 0
        %2543 = vmatprep.subr.bf16.mxu0 0
        %2544 = vmatpush1.bf16.msra.mxu0 0
        %2545 = vmatprep.subr.bf16.mxu0 0
        %2546 = vmatpush1.bf16.msra.mxu0 0
        %2547 = vmatprep.subr.bf16.mxu0 0
        %2548 = vmatpush1.bf16.msra.mxu0 0
        %2549 = vmatprep.subr.bf16.mxu0 0
        %2550 = vmatpush1.bf16.msra.mxu0 0
        %2551 = vmatprep.subr.bf16.mxu0 0
        %2552 = vmatpush1.bf16.msra.mxu0 0
        %2553 = vmatprep.subr.bf16.mxu0 0
        %2554 = vmatpush1.bf16.msra.mxu0 0
        %2555 = vmatprep.subr.bf16.mxu0 0
        %2556 = vmatpush1.bf16.msra.mxu0 0
        %2557 = vmatprep.subr.bf16.mxu0 0
        %2558 = vmatpush1.bf16.msra.mxu0 0
        %2559 = vmatprep.subr.bf16.mxu0 0
        %2560 = vmatpush1.bf16.msra.mxu0 0
        %2561 = vmatprep.subr.bf16.mxu0 0
        %2562 = vmatpush1.bf16.msra.mxu0 0
        %2563 = vmatprep.subr.bf16.mxu0 0
        %2564 = vmatpush1.bf16.msra.mxu0 0
        %2565 = vmatprep.mubr.bf16.mxu0 0
        %2566 = vmatmul.mubr.bf16.gmra.mrb[0].mxu0 %v2525
        %v2567 = vpop.f32.mrb[0].mxu0
        %v2568 = vadd.f32 0.0, %v2567
        %v2569 = vpop.f32.mrb[0].mxu0
        %v2570 = vpop.f32.mrb[0].mxu0
        %v2571 = vadd.f32 0.0, %v2570
        %v2572 = vpop.f32.mrb[0].mxu0
        %2573 = vmatprep.mubr.bf16.mxu0 0
        %2574 = vmatmul.mubr.bf16.gmra.mrb[0].mxu0 %v2528
        %v2575 = vpop.f32.mrb[0].mxu0
        %v2576 = vadd.f32 0.0, %v2575
        %v2577 = vpop.f32.mrb[0].mxu0
        %v2578 = vpop.f32.mrb[0].mxu0
        %v2579 = vpop.f32.mrb[0].mxu0
        %2580 = vdwg.mxu0
        %v2581 = vpack.c.bf16 %v2571, %v2568
        %v2582 = vpack.c.bf16 %v2576, %v2576
        %v2584 = vunpack.c.l.b16 %v1269
        %v2585 = vpack.c.b16 %v2584, %v2584
        %v2586 = vrot.slane %v2585, 2
        %v2588 = vsel %vm1281, %v2581, 0
        %v2591 = vsel %vm1281, %v2582, 0
        %v2594 = vsel %vm1622, %v2586, 0
        %2596 = vmatprep.subr.bf16.mxu0 0
        %2597 = vmatpush1.bf16.msra.mxu0 %v2594
        %2598 = vmatprep.subr.bf16.mxu0 0
        %2599 = vmatpush1.bf16.msra.mxu0 0
        %2600 = vmatprep.subr.bf16.mxu0 0
        %2601 = vmatpush1.bf16.msra.mxu0 0
        %2602 = vmatprep.subr.bf16.mxu0 0
        %2603 = vmatpush1.bf16.msra.mxu0 0
        %2604 = vmatprep.subr.bf16.mxu0 0
        %2605 = vmatpush1.bf16.msra.mxu0 0
        %2606 = vmatprep.subr.bf16.mxu0 0
        %2607 = vmatpush1.bf16.msra.mxu0 0
        %2608 = vmatprep.subr.bf16.mxu0 0
        %2609 = vmatpush1.bf16.msra.mxu0 0
        %2610 = vmatprep.subr.bf16.mxu0 0
        %2611 = vmatpush1.bf16.msra.mxu0 0
        %2612 = vmatprep.subr.bf16.mxu0 0
        %2613 = vmatpush1.bf16.msra.mxu0 0
        %2614 = vmatprep.subr.bf16.mxu0 0
        %2615 = vmatpush1.bf16.msra.mxu0 0
        %2616 = vmatprep.subr.bf16.mxu0 0
        %2617 = vmatpush1.bf16.msra.mxu0 0
        %2618 = vmatprep.subr.bf16.mxu0 0
        %2619 = vmatpush1.bf16.msra.mxu0 0
        %2620 = vmatprep.subr.bf16.mxu0 0
        %2621 = vmatpush1.bf16.msra.mxu0 0
        %2622 = vmatprep.subr.bf16.mxu0 0
        %2623 = vmatpush1.bf16.msra.mxu0 0
        %2624 = vmatprep.subr.bf16.mxu0 0
        %2625 = vmatpush1.bf16.msra.mxu0 0
        %2626 = vmatprep.subr.bf16.mxu0 0
        %2627 = vmatpush1.bf16.msra.mxu0 0
        %2628 = vmatprep.mubr.bf16.mxu0 0
        %2629 = vmatmul.mubr.bf16.gmra.mrb[0].mxu0 %v2588
        %v2630 = vpop.f32.mrb[0].mxu0
        %v2631 = vadd.f32 0.0, %v2630
        %v2632 = vpop.f32.mrb[0].mxu0
        %v2633 = vpop.f32.mrb[0].mxu0
        %v2634 = vadd.f32 0.0, %v2633
        %v2635 = vpop.f32.mrb[0].mxu0
        %2636 = vmatprep.mubr.bf16.mxu0 0
        %2637 = vmatmul.mubr.bf16.gmra.mrb[0].mxu0 %v2591
        %v2638 = vpop.f32.mrb[0].mxu0
        %v2639 = vadd.f32 0.0, %v2638
        %v2640 = vpop.f32.mrb[0].mxu0
        %v2641 = vpop.f32.mrb[0].mxu0
        %v2642 = vpop.f32.mrb[0].mxu0
        %2643 = vdwg.mxu0
        %v2644 = vadd.f32 %v2413, %v2631
        %v2645 = vadd.f32 %v2414, %v2634
        %v2646 = vadd.f32 %v2415, %v2639
        %2647 = vrot.lane.b32.xlu0 %v1263, 104
        %v2648 = vpop.permute.xlu0 %2647
        %2649 = vrot.lane.b32.xlu0 %v1264, 104
        %v2650 = vpop.permute.xlu0 %2649
        %2651 = vrot.lane.b32.xlu0 %v1265, 72
        %v2652 = vpop.permute.xlu0 %2651
        %2653 = vrot.lane.b32.xlu0 %v1266, 72
        %v2654 = vpop.permute.xlu0 %2653
        %v2656 = vsel %vm1281, %v2648, 0
        %v2659 = vsel %vm1281, %v2650, 0
        %v2662 = vsel %vm1281, %v2652, 0
        %v2665 = vsel %vm1281, %v2654, 0
        %2667 = vmatprep.subr.bf16.mxu0 0
        %2668 = vmatpush1.bf16.xpose.msra.mxu0 %v2662
        %2669 = vmatprep.subr.bf16.mxu0 0
        %2670 = vmatpush1.bf16.xpose.msra.mxu0 %v2665
        %2671 = vmatprep.subr.bf16.mxu0 0
        %2672 = vmatpush1.bf16.xpose.msra.mxu0 0
        %2673 = vmatprep.subr.bf16.mxu0 0
        %2674 = vmatpush1.bf16.xpose.msra.mxu0 0
        %2675 = vmatprep.subr.bf16.mxu0 0
        %2676 = vmatpush1.bf16.xpose.msra.mxu0 0
        %2677 = vmatprep.subr.bf16.mxu0 0
        %2678 = vmatpush1.bf16.xpose.msra.mxu0 0
        %2679 = vmatprep.subr.bf16.mxu0 0
        %2680 = vmatpush1.bf16.xpose.msra.mxu0 0
        %2681 = vmatprep.subr.bf16.mxu0 0
        %2682 = vmatpush1.bf16.xpose.msra.mxu0 0
        %2683 = vmatprep.subr.bf16.mxu0 0
        %2684 = vmatpush1.bf16.xpose.msra.mxu0 0
        %2685 = vmatprep.subr.bf16.mxu0 0
        %2686 = vmatpush1.bf16.xpose.msra.mxu0 0
        %2687 = vmatprep.subr.bf16.mxu0 0
        %2688 = vmatpush1.bf16.xpose.msra.mxu0 0
        %2689 = vmatprep.subr.bf16.mxu0 0
        %2690 = vmatpush1.bf16.xpose.msra.mxu0 0
        %2691 = vmatprep.subr.bf16.mxu0 0
        %2692 = vmatpush1.bf16.xpose.msra.mxu0 0
        %2693 = vmatprep.subr.bf16.mxu0 0
        %2694 = vmatpush1.bf16.xpose.msra.mxu0 0
        %2695 = vmatprep.subr.bf16.mxu0 0
        %2696 = vmatpush1.bf16.xpose.msra.mxu0 0
        %2697 = vmatprep.subr.bf16.mxu0 0
        %2698 = vmatpush1.bf16.xpose.msra.mxu0 0
        %2699 = vmatprep.mubr.bf16.mxu0 0
        %2700 = vmatmul.mubr.bf16.gmra.mrb[0].mxu0 %v2656
        %v2701 = vpop.f32.mrb[0].mxu0
        %v2702 = vadd.f32 %v1274, %v2701
        %v2703 = vpop.f32.mrb[0].mxu0
        %v2704 = vpop.f32.mrb[0].mxu0
        %v2705 = vadd.f32 %v1274, %v2704
        %v2706 = vpop.f32.mrb[0].mxu0
        %2707 = vmatprep.mubr.bf16.mxu0 0
        %2708 = vmatmul.mubr.bf16.gmra.mrb[0].mxu0 %v2659
        %v2709 = vpop.f32.mrb[0].mxu0
        %v2710 = vadd.f32 %v1274, %v2709
        %v2711 = vpop.f32.mrb[0].mxu0
        %v2712 = vpop.f32.mrb[0].mxu0
        %v2713 = vpop.f32.mrb[0].mxu0
        %2714 = vdwg.mxu0
        %v2715 = vsel %vm1342, %v2702, -inf
        %2716 = vmax.xlane.f32.xlu0 %v2715
        %v2717 = vpop.xlane.xlu0 %2716
        %v2718 = vsel %vm1342, %v2705, -inf
        %2719 = vmax.xlane.f32.xlu0 %v2718
        %v2720 = vpop.xlane.xlu0 %2719
        %v2721 = vsel %vm1342, %v2710, -inf
        %2722 = vmax.xlane.f32.xlu0 %v2721
        %v2723 = vpop.xlane.xlu0 %2722
        %v2724 = vsub.f32 %v2702, %v2717
        %v2725 = vsub.f32 %v2705, %v2720
        %v2726 = vsub.f32 %v2710, %v2723
        %v2727 = vmul.f32 %v2724, 1.442695
        %v2728 = vpow.pop %v2727
        %v2729 = vmul.f32 %v2725, 1.442695
        %v2730 = vpow.pop %v2729
        %v2731 = vmul.f32 %v2726, 1.442695
        %v2732 = vpow.pop %v2731
        %v2733 = vsel %vm1342, %v2728, 0.0
        %2734 = vadd.xlane.f32.xlu0 %v2733
        %v2735 = vpop.xlane.xlu0 %2734
        %v2736 = vsel %vm1342, %v2730, 0.0
        %2737 = vadd.xlane.f32.xlu0 %v2736
        %v2738 = vpop.xlane.xlu0 %2737
        %v2739 = vsel %vm1342, %v2732, 0.0
        %2740 = vadd.xlane.f32.xlu0 %v2739
        %v2741 = vpop.xlane.xlu0 %2740
        %v2742 = vrcp.pop %v2735
        %v2743 = vrcp.pop %v2738
        %v2744 = vrcp.pop %v2741
        %v2745 = vmul.f32 %v2728, %v2742
        %v2746 = vmul.f32 %v2730, %v2743
        %v2747 = vmul.f32 %v2732, %v2744
        %v2748 = vpack.c.bf16 %v2746, %v2745
        %v2749 = vpack.c.bf16 %v2747, %v2747
        %2750 = vrot.lane.b32.xlu0 %v1265, 40
        %v2751 = vpop.permute.xlu0 %2750
        %2752 = vrot.lane.b32.xlu0 %v1266, 40
        %v2753 = vpop.permute.xlu0 %2752
        %v2756 = vsel %vm1342, %v2748, 0
        %v2759 = vsel %vm1342, %v2749, 0
        %v2762 = vsel %vm1389, %v2753, 0
        %2764 = vmatprep.subr.bf16.mxu0 0
        %2765 = vmatpush1.bf16.msra.mxu0 %v2751
        %2766 = vmatprep.subr.bf16.mxu0 0
        %2767 = vmatpush1.bf16.msra.mxu0 %v2762
        %2768 = vmatprep.subr.bf16.mxu0 0
        %2769 = vmatpush1.bf16.msra.mxu0 0
        %2770 = vmatprep.subr.bf16.mxu0 0
        %2771 = vmatpush1.bf16.msra.mxu0 0
        %2772 = vmatprep.subr.bf16.mxu0 0
        %2773 = vmatpush1.bf16.msra.mxu0 0
        %2774 = vmatprep.subr.bf16.mxu0 0
        %2775 = vmatpush1.bf16.msra.mxu0 0
        %2776 = vmatprep.subr.bf16.mxu0 0
        %2777 = vmatpush1.bf16.msra.mxu0 0
        %2778 = vmatprep.subr.bf16.mxu0 0
        %2779 = vmatpush1.bf16.msra.mxu0 0
        %2780 = vmatprep.subr.bf16.mxu0 0
        %2781 = vmatpush1.bf16.msra.mxu0 0
        %2782 = vmatprep.subr.bf16.mxu0 0
        %2783 = vmatpush1.bf16.msra.mxu0 0
        %2784 = vmatprep.subr.bf16.mxu0 0
        %2785 = vmatpush1.bf16.msra.mxu0 0
        %2786 = vmatprep.subr.bf16.mxu0 0
        %2787 = vmatpush1.bf16.msra.mxu0 0
        %2788 = vmatprep.subr.bf16.mxu0 0
        %2789 = vmatpush1.bf16.msra.mxu0 0
        %2790 = vmatprep.subr.bf16.mxu0 0
        %2791 = vmatpush1.bf16.msra.mxu0 0
        %2792 = vmatprep.subr.bf16.mxu0 0
        %2793 = vmatpush1.bf16.msra.mxu0 0
        %2794 = vmatprep.subr.bf16.mxu0 0
        %2795 = vmatpush1.bf16.msra.mxu0 0
        %2796 = vmatprep.mubr.bf16.mxu0 0
        %2797 = vmatmul.mubr.bf16.gmra.mrb[0].mxu0 %v2756
        %v2798 = vpop.f32.mrb[0].mxu0
        %v2799 = vadd.f32 0.0, %v2798
        %v2800 = vpop.f32.mrb[0].mxu0
        %v2801 = vpop.f32.mrb[0].mxu0
        %v2802 = vadd.f32 0.0, %v2801
        %v2803 = vpop.f32.mrb[0].mxu0
        %2804 = vmatprep.mubr.bf16.mxu0 0
        %2805 = vmatmul.mubr.bf16.gmra.mrb[0].mxu0 %v2759
        %v2806 = vpop.f32.mrb[0].mxu0
        %v2807 = vadd.f32 0.0, %v2806
        %v2808 = vpop.f32.mrb[0].mxu0
        %v2809 = vpop.f32.mrb[0].mxu0
        %v2810 = vpop.f32.mrb[0].mxu0
        %2811 = vdwg.mxu0
        %v2812 = vpack.c.bf16 %v2802, %v2799
        %v2813 = vpack.c.bf16 %v2807, %v2807
        %v2815 = vsel %vm1281, %v2812, 0
        %v2818 = vsel %vm1281, %v2813, 0
        %v2821 = vsel %vm1622, %v1270, 0
        %2823 = vmatprep.subr.bf16.mxu0 0
        %2824 = vmatpush1.bf16.msra.mxu0 %v2821
        %2825 = vmatprep.subr.bf16.mxu0 0
        %2826 = vmatpush1.bf16.msra.mxu0 0
        %2827 = vmatprep.subr.bf16.mxu0 0
        %2828 = vmatpush1.bf16.msra.mxu0 0
        %2829 = vmatprep.subr.bf16.mxu0 0
        %2830 = vmatpush1.bf16.msra.mxu0 0
        %2831 = vmatprep.subr.bf16.mxu0 0
        %2832 = vmatpush1.bf16.msra.mxu0 0
        %2833 = vmatprep.subr.bf16.mxu0 0
        %2834 = vmatpush1.bf16.msra.mxu0 0
        %2835 = vmatprep.subr.bf16.mxu0 0
        %2836 = vmatpush1.bf16.msra.mxu0 0
        %2837 = vmatprep.subr.bf16.mxu0 0
        %2838 = vmatpush1.bf16.msra.mxu0 0
        %2839 = vmatprep.subr.bf16.mxu0 0
        %2840 = vmatpush1.bf16.msra.mxu0 0
        %2841 = vmatprep.subr.bf16.mxu0 0
        %2842 = vmatpush1.bf16.msra.mxu0 0
        %2843 = vmatprep.subr.bf16.mxu0 0
        %2844 = vmatpush1.bf16.msra.mxu0 0
        %2845 = vmatprep.subr.bf16.mxu0 0
        %2846 = vmatpush1.bf16.msra.mxu0 0
        %2847 = vmatprep.subr.bf16.mxu0 0
        %2848 = vmatpush1.bf16.msra.mxu0 0
        %2849 = vmatprep.subr.bf16.mxu0 0
        %2850 = vmatpush1.bf16.msra.mxu0 0
        %2851 = vmatprep.subr.bf16.mxu0 0
        %2852 = vmatpush1.bf16.msra.mxu0 0
        %2853 = vmatprep.subr.bf16.mxu0 0
        %2854 = vmatpush1.bf16.msra.mxu0 0
        %2855 = vmatprep.mubr.bf16.mxu0 0
        %2856 = vmatmul.mubr.bf16.gmra.mrb[0].mxu0 %v2815
        %v2857 = vpop.f32.mrb[0].mxu0
        %v2858 = vadd.f32 0.0, %v2857
        %v2859 = vpop.f32.mrb[0].mxu0
        %v2860 = vpop.f32.mrb[0].mxu0
        %v2861 = vadd.f32 0.0, %v2860
        %v2862 = vpop.f32.mrb[0].mxu0
        %2863 = vmatprep.mubr.bf16.mxu0 0
        %2864 = vmatmul.mubr.bf16.gmra.mrb[0].mxu0 %v2818
        %v2865 = vpop.f32.mrb[0].mxu0
        %v2866 = vadd.f32 0.0, %v2865
        %v2867 = vpop.f32.mrb[0].mxu0
        %v2868 = vpop.f32.mrb[0].mxu0
        %v2869 = vpop.f32.mrb[0].mxu0
        %2870 = vdwg.mxu0
        %v2871 = vadd.f32 %v2644, %v2858
        %v2872 = vadd.f32 %v2645, %v2861
        %v2873 = vadd.f32 %v2646, %v2866
        %2874 = vrot.lane.b32.xlu0 %v1263, 100
        %v2875 = vpop.permute.xlu0 %2874
        %2876 = vrot.lane.b32.xlu0 %v1264, 100
        %v2877 = vpop.permute.xlu0 %2876
        %2878 = vrot.lane.b32.xlu0 %v1265, 68
        %v2879 = vpop.permute.xlu0 %2878
        %2880 = vrot.lane.b32.xlu0 %v1266, 68
        %v2881 = vpop.permute.xlu0 %2880
        %v2883 = vsel %vm1281, %v2875, 0
        %v2886 = vsel %vm1281, %v2877, 0
        %v2889 = vsel %vm1281, %v2879, 0
        %v2892 = vsel %vm1281, %v2881, 0
        %2894 = vmatprep.subr.bf16.mxu0 0
        %2895 = vmatpush1.bf16.xpose.msra.mxu0 %v2889
        %2896 = vmatprep.subr.bf16.mxu0 0
        %2897 = vmatpush1.bf16.xpose.msra.mxu0 %v2892
        %2898 = vmatprep.subr.bf16.mxu0 0
        %2899 = vmatpush1.bf16.xpose.msra.mxu0 0
        %2900 = vmatprep.subr.bf16.mxu0 0
        %2901 = vmatpush1.bf16.xpose.msra.mxu0 0
        %2902 = vmatprep.subr.bf16.mxu0 0
        %2903 = vmatpush1.bf16.xpose.msra.mxu0 0
        %2904 = vmatprep.subr.bf16.mxu0 0
        %2905 = vmatpush1.bf16.xpose.msra.mxu0 0
        %2906 = vmatprep.subr.bf16.mxu0 0
        %2907 = vmatpush1.bf16.xpose.msra.mxu0 0
        %2908 = vmatprep.subr.bf16.mxu0 0
        %2909 = vmatpush1.bf16.xpose.msra.mxu0 0
        %2910 = vmatprep.subr.bf16.mxu0 0
        %2911 = vmatpush1.bf16.xpose.msra.mxu0 0
        %2912 = vmatprep.subr.bf16.mxu0 0
        %2913 = vmatpush1.bf16.xpose.msra.mxu0 0
        %2914 = vmatprep.subr.bf16.mxu0 0
        %2915 = vmatpush1.bf16.xpose.msra.mxu0 0
        %2916 = vmatprep.subr.bf16.mxu0 0
        %2917 = vmatpush1.bf16.xpose.msra.mxu0 0
        %2918 = vmatprep.subr.bf16.mxu0 0
        %2919 = vmatpush1.bf16.xpose.msra.mxu0 0
        %2920 = vmatprep.subr.bf16.mxu0 0
        %2921 = vmatpush1.bf16.xpose.msra.mxu0 0
        %2922 = vmatprep.subr.bf16.mxu0 0
        %2923 = vmatpush1.bf16.xpose.msra.mxu0 0
        %2924 = vmatprep.subr.bf16.mxu0 0
        %2925 = vmatpush1.bf16.xpose.msra.mxu0 0
        %2926 = vmatprep.mubr.bf16.mxu0 0
        %2927 = vmatmul.mubr.bf16.gmra.mrb[0].mxu0 %v2883
        %v2928 = vpop.f32.mrb[0].mxu0
        %v2929 = vadd.f32 %v1274, %v2928
        %v2930 = vpop.f32.mrb[0].mxu0
        %v2931 = vpop.f32.mrb[0].mxu0
        %v2932 = vadd.f32 %v1274, %v2931
        %v2933 = vpop.f32.mrb[0].mxu0
        %2934 = vmatprep.mubr.bf16.mxu0 0
        %2935 = vmatmul.mubr.bf16.gmra.mrb[0].mxu0 %v2886
        %v2936 = vpop.f32.mrb[0].mxu0
        %v2937 = vadd.f32 %v1274, %v2936
        %v2938 = vpop.f32.mrb[0].mxu0
        %v2939 = vpop.f32.mrb[0].mxu0
        %v2940 = vpop.f32.mrb[0].mxu0
        %2941 = vdwg.mxu0
        %v2942 = vsel %vm1342, %v2929, -inf
        %2943 = vmax.xlane.f32.xlu0 %v2942
        %v2944 = vpop.xlane.xlu0 %2943
        %v2945 = vsel %vm1342, %v2932, -inf
        %2946 = vmax.xlane.f32.xlu0 %v2945
        %v2947 = vpop.xlane.xlu0 %2946
        %v2948 = vsel %vm1342, %v2937, -inf
        %2949 = vmax.xlane.f32.xlu0 %v2948
        %v2950 = vpop.xlane.xlu0 %2949
        %v2951 = vsub.f32 %v2929, %v2944
        %v2952 = vsub.f32 %v2932, %v2947
        %v2953 = vsub.f32 %v2937, %v2950
        %v2954 = vmul.f32 %v2951, 1.442695
        %v2955 = vpow.pop %v2954
        %v2956 = vmul.f32 %v2952, 1.442695
        %v2957 = vpow.pop %v2956
        %v2958 = vmul.f32 %v2953, 1.442695
        %v2959 = vpow.pop %v2958
        %v2960 = vsel %vm1342, %v2955, 0.0
        %2961 = vadd.xlane.f32.xlu0 %v2960
        %v2962 = vpop.xlane.xlu0 %2961
        %v2963 = vsel %vm1342, %v2957, 0.0
        %2964 = vadd.xlane.f32.xlu0 %v2963
        %v2965 = vpop.xlane.xlu0 %2964
        %v2966 = vsel %vm1342, %v2959, 0.0
        %2967 = vadd.xlane.f32.xlu0 %v2966
        %v2968 = vpop.xlane.xlu0 %2967
        %v2969 = vrcp.pop %v2962
        %v2970 = vrcp.pop %v2965
        %v2971 = vrcp.pop %v2968
        %v2972 = vmul.f32 %v2955, %v2969
        %v2973 = vmul.f32 %v2957, %v2970
        %v2974 = vmul.f32 %v2959, %v2971
        %v2975 = vpack.c.bf16 %v2973, %v2972
        %v2976 = vpack.c.bf16 %v2974, %v2974
        %2977 = vrot.lane.b32.xlu0 %v1265, 36
        %v2978 = vpop.permute.xlu0 %2977
        %2979 = vrot.lane.b32.xlu0 %v1266, 36
        %v2980 = vpop.permute.xlu0 %2979
        %v2983 = vsel %vm1342, %v2975, 0
        %v2986 = vsel %vm1342, %v2976, 0
        %v2989 = vsel %vm1389, %v2980, 0
        %2991 = vmatprep.subr.bf16.mxu0 0
        %2992 = vmatpush1.bf16.msra.mxu0 %v2978
        %2993 = vmatprep.subr.bf16.mxu0 0
        %2994 = vmatpush1.bf16.msra.mxu0 %v2989
        %2995 = vmatprep.subr.bf16.mxu0 0
        %2996 = vmatpush1.bf16.msra.mxu0 0
        %2997 = vmatprep.subr.bf16.mxu0 0
        %2998 = vmatpush1.bf16.msra.mxu0 0
        %2999 = vmatprep.subr.bf16.mxu0 0
        %3000 = vmatpush1.bf16.msra.mxu0 0
        %3001 = vmatprep.subr.bf16.mxu0 0
        %3002 = vmatpush1.bf16.msra.mxu0 0
        %3003 = vmatprep.subr.bf16.mxu0 0
        %3004 = vmatpush1.bf16.msra.mxu0 0
        %3005 = vmatprep.subr.bf16.mxu0 0
        %3006 = vmatpush1.bf16.msra.mxu0 0
        %3007 = vmatprep.subr.bf16.mxu0 0
        %3008 = vmatpush1.bf16.msra.mxu0 0
        %3009 = vmatprep.subr.bf16.mxu0 0
        %3010 = vmatpush1.bf16.msra.mxu0 0
        %3011 = vmatprep.subr.bf16.mxu0 0
        %3012 = vmatpush1.bf16.msra.mxu0 0
        %3013 = vmatprep.subr.bf16.mxu0 0
        %3014 = vmatpush1.bf16.msra.mxu0 0
        %3015 = vmatprep.subr.bf16.mxu0 0
        %3016 = vmatpush1.bf16.msra.mxu0 0
        %3017 = vmatprep.subr.bf16.mxu0 0
        %3018 = vmatpush1.bf16.msra.mxu0 0
        %3019 = vmatprep.subr.bf16.mxu0 0
        %3020 = vmatpush1.bf16.msra.mxu0 0
        %3021 = vmatprep.subr.bf16.mxu0 0
        %3022 = vmatpush1.bf16.msra.mxu0 0
        %3023 = vmatprep.mubr.bf16.mxu0 0
        %3024 = vmatmul.mubr.bf16.gmra.mrb[0].mxu0 %v2983
        %v3025 = vpop.f32.mrb[0].mxu0
        %v3026 = vadd.f32 0.0, %v3025
        %v3027 = vpop.f32.mrb[0].mxu0
        %v3028 = vpop.f32.mrb[0].mxu0
        %v3029 = vadd.f32 0.0, %v3028
        %v3030 = vpop.f32.mrb[0].mxu0
        %3031 = vmatprep.mubr.bf16.mxu0 0
        %3032 = vmatmul.mubr.bf16.gmra.mrb[0].mxu0 %v2986
        %v3033 = vpop.f32.mrb[0].mxu0
        %v3034 = vadd.f32 0.0, %v3033
        %v3035 = vpop.f32.mrb[0].mxu0
        %v3036 = vpop.f32.mrb[0].mxu0
        %v3037 = vpop.f32.mrb[0].mxu0
        %3038 = vdwg.mxu0
        %v3039 = vpack.c.bf16 %v3029, %v3026
        %v3040 = vpack.c.bf16 %v3034, %v3034
        %v3042 = vunpack.c.l.b16 %v1270
        %v3043 = vpack.c.b16 %v3042, %v3042
        %v3044 = vrot.slane %v3043, 2
        %v3046 = vsel %vm1281, %v3039, 0
        %v3049 = vsel %vm1281, %v3040, 0
        %v3052 = vsel %vm1622, %v3044, 0
        %3054 = vmatprep.subr.bf16.mxu0 0
        %3055 = vmatpush1.bf16.msra.mxu0 %v3052
        %3056 = vmatprep.subr.bf16.mxu0 0
        %3057 = vmatpush1.bf16.msra.mxu0 0
        %3058 = vmatprep.subr.bf16.mxu0 0
        %3059 = vmatpush1.bf16.msra.mxu0 0
        %3060 = vmatprep.subr.bf16.mxu0 0
        %3061 = vmatpush1.bf16.msra.mxu0 0
        %3062 = vmatprep.subr.bf16.mxu0 0
        %3063 = vmatpush1.bf16.msra.mxu0 0
        %3064 = vmatprep.subr.bf16.mxu0 0
        %3065 = vmatpush1.bf16.msra.mxu0 0
        %3066 = vmatprep.subr.bf16.mxu0 0
        %3067 = vmatpush1.bf16.msra.mxu0 0
        %3068 = vmatprep.subr.bf16.mxu0 0
        %3069 = vmatpush1.bf16.msra.mxu0 0
        %3070 = vmatprep.subr.bf16.mxu0 0
        %3071 = vmatpush1.bf16.msra.mxu0 0
        %3072 = vmatprep.subr.bf16.mxu0 0
        %3073 = vmatpush1.bf16.msra.mxu0 0
        %3074 = vmatprep.subr.bf16.mxu0 0
        %3075 = vmatpush1.bf16.msra.mxu0 0
        %3076 = vmatprep.subr.bf16.mxu0 0
        %3077 = vmatpush1.bf16.msra.mxu0 0
        %3078 = vmatprep.subr.bf16.mxu0 0
        %3079 = vmatpush1.bf16.msra.mxu0 0
        %3080 = vmatprep.subr.bf16.mxu0 0
        %3081 = vmatpush1.bf16.msra.mxu0 0
        %3082 = vmatprep.subr.bf16.mxu0 0
        %3083 = vmatpush1.bf16.msra.mxu0 0
        %3084 = vmatprep.subr.bf16.mxu0 0
        %3085 = vmatpush1.bf16.msra.mxu0 0
        %3086 = vmatprep.mubr.bf16.mxu0 0
        %3087 = vmatmul.mubr.bf16.gmra.mrb[0].mxu0 %v3046
        %v3088 = vpop.f32.mrb[0].mxu0
        %v3089 = vadd.f32 0.0, %v3088
        %v3090 = vpop.f32.mrb[0].mxu0
        %v3091 = vpop.f32.mrb[0].mxu0
        %v3092 = vadd.f32 0.0, %v3091
        %v3093 = vpop.f32.mrb[0].mxu0
        %3094 = vmatprep.mubr.bf16.mxu0 0
        %3095 = vmatmul.mubr.bf16.gmra.mrb[0].mxu0 %v3049
        %v3096 = vpop.f32.mrb[0].mxu0
        %v3097 = vadd.f32 0.0, %v3096
        %v3098 = vpop.f32.mrb[0].mxu0
        %v3099 = vpop.f32.mrb[0].mxu0
        %v3100 = vpop.f32.mrb[0].mxu0
        %3101 = vdwg.mxu0
        %v3102 = vadd.f32 %v2871, %v3089
        %v3103 = vadd.f32 %v2872, %v3092
        %v3104 = vadd.f32 %v2873, %v3097
        %v3105 = vadd.f32 %v1117, %v3102
        %v3106 = vadd.f32 %v1118, %v3103
        %v3107 = vadd.f32 %v1119, %v3104
        %v3108 = vld [vmem:[%s832] sm:$0x1]
        %v3110 = vlaneseq
        %v3111 = vshrl.u32 %v3110, 7
        %v3112 = vsub.s32 0, %v3111
        %v3113 = vrot.slane %v3108, %v3112
        %v3115 = vadd.f32 %v3105, %v3113
        %v3116 = vadd.f32 %v3106, %v3113
        %v3117 = vadd.f32 %v3107, %v3113
        %v3118 = vld [vmem:[%s840] sm:$0x1]
        %v3119 = vld [vmem:[%s970] sm:$0x1]
        %v3120 = vsel %vm1122, %v3115, 0.0
        %3121 = vadd.xlane.f32.xlu0 %v3120
        %v3122 = vpop.xlane.xlu0 %3121
        %v3123 = vsel %vm1122, %v3116, 0.0
        %3124 = vadd.xlane.f32.xlu0 %v3123
        %v3125 = vpop.xlane.xlu0 %3124
        %v3126 = vsel %vm1122, %v3117, 0.0
        %3127 = vadd.xlane.f32.xlu0 %v3126
        %v3128 = vpop.xlane.xlu0 %3127
        %v3129 = vmul.f32 %v3122, %v1132
        %v3130 = vmul.f32 %v3125, %v1132
        %v3131 = vmul.f32 %v3128, %v1132
        %v3132 = vsub.f32 %v3115, %v3129
        %v3133 = vsub.f32 %v3116, %v3130
        %v3134 = vsub.f32 %v3117, %v3131
        %v3135 = vmul.f32 %v3132, %v3132
        %v3136 = vmul.f32 %v3133, %v3133
        %v3137 = vmul.f32 %v3134, %v3134
        %v3138 = vsel %vm1122, %v3135, 0.0
        %3139 = vadd.xlane.f32.xlu0 %v3138
        %v3140 = vpop.xlane.xlu0 %3139
        %v3141 = vsel %vm1122, %v3136, 0.0
        %3142 = vadd.xlane.f32.xlu0 %v3141
        %v3143 = vpop.xlane.xlu0 %3142
        %v3144 = vsel %vm1122, %v3137, 0.0
        %3145 = vadd.xlane.f32.xlu0 %v3144
        %v3146 = vpop.xlane.xlu0 %3145
        %v3147 = vmul.f32 %v3140, %v1132
        %v3148 = vmul.f32 %v3143, %v1132
        %v3149 = vmul.f32 %v3146, %v1132
        %v3150 = vadd.f32 %v3147, 1e-05
        %v3151 = vadd.f32 %v3148, 1e-05
        %v3152 = vadd.f32 %v3149, 1e-05
        %v3153 = vrsqrt.pop %v3150
        %v3154 = vrsqrt.pop %v3151
        %v3155 = vrsqrt.pop %v3152
        %v3156 = vmul.f32 %v3132, %v3153
        %v3157 = vmul.f32 %v3133, %v3154
        %v3158 = vmul.f32 %v3134, %v3155
        %v3160 = vlaneseq
        %v3161 = vshrl.u32 %v3160, 7
        %v3162 = vsub.s32 0, %v3161
        %v3163 = vrot.slane %v3118, %v3162
        %v3165 = vmul.f32 %v3156, %v3163
        %v3166 = vmul.f32 %v3157, %v3163
        %v3167 = vmul.f32 %v3158, %v3163
        %v3169 = vlaneseq
        %v3170 = vshrl.u32 %v3169, 7
        %v3171 = vsub.s32 0, %v3170
        %v3172 = vrot.slane %v3119, %v3171
        %v3174 = vadd.f32 %v3165, %v3172
        %v3175 = vadd.f32 %v3166, %v3172
        %v3176 = vadd.f32 %v3167, %v3172
        %v3177 = vpack.c.bf16 %v3175, %v3174
        %v3178 = vpack.c.bf16 %v3176, %v3176
        %v3179 = vld [vmem:[%s849] sm:$0xf]
        %v3180 = vld [vmem:[%s849 + $0x4] sm:$0xf]
        %v3181 = vld [vmem:[%s849 + $0x8] sm:$0xf]
        %v3182 = vld [vmem:[%s849 + $0xc] sm:$0xf]
        %v3183 = vld [vmem:[%s973] sm:$0x1]
        %v3185 = vlaneseq
        %v3186 = vshrl.u32 %v3185, 7
        %v3187 = vsub.s32 0, %v3186
        %v3188 = vrot.slane %v3183, %v3187
        %v3194 = vunpack.c.l.b16 %v3179
        %v3195 = vunpack.c.l.b16 %v3180
        %v3196 = vunpack.c.l.b16 %v3181
        %v3197 = vunpack.c.l.b16 %v3182
        %v3198 = vpack.c.b16 %v3195, %v3194
        %v3199 = vpack.c.b16 %v3197, %v3196
        %v3203 = vsel %vm1122, %v3177, 0
        %v3206 = vsel %vm1122, %v3178, 0
        %3208 = vmatprep.subr.bf16.mxu0 0
        %3209 = vmatpush1.bf16.msra.mxu0 %v3198
        %3210 = vmatprep.subr.bf16.mxu0 0
        %3211 = vmatpush1.bf16.msra.mxu0 %v3199
        %3212 = vmatprep.subr.bf16.mxu0 0
        %3213 = vmatpush1.bf16.msra.mxu0 0
        %3214 = vmatprep.subr.bf16.mxu0 0
        %3215 = vmatpush1.bf16.msra.mxu0 0
        %3216 = vmatprep.subr.bf16.mxu0 0
        %3217 = vmatpush1.bf16.msra.mxu0 0
        %3218 = vmatprep.subr.bf16.mxu0 0
        %3219 = vmatpush1.bf16.msra.mxu0 0
        %3220 = vmatprep.subr.bf16.mxu0 0
        %3221 = vmatpush1.bf16.msra.mxu0 0
        %3222 = vmatprep.subr.bf16.mxu0 0
        %3223 = vmatpush1.bf16.msra.mxu0 0
        %3224 = vmatprep.subr.bf16.mxu0 0
        %3225 = vmatpush1.bf16.msra.mxu0 0
        %3226 = vmatprep.subr.bf16.mxu0 0
        %3227 = vmatpush1.bf16.msra.mxu0 0
        %3228 = vmatprep.subr.bf16.mxu0 0
        %3229 = vmatpush1.bf16.msra.mxu0 0
        %3230 = vmatprep.subr.bf16.mxu0 0
        %3231 = vmatpush1.bf16.msra.mxu0 0
        %3232 = vmatprep.subr.bf16.mxu0 0
        %3233 = vmatpush1.bf16.msra.mxu0 0
        %3234 = vmatprep.subr.bf16.mxu0 0
        %3235 = vmatpush1.bf16.msra.mxu0 0
        %3236 = vmatprep.subr.bf16.mxu0 0
        %3237 = vmatpush1.bf16.msra.mxu0 0
        %3238 = vmatprep.subr.bf16.mxu0 0
        %3239 = vmatpush1.bf16.msra.mxu0 0
        %3240 = vmatprep.mubr.bf16.mxu0 0
        %3241 = vmatmul.mubr.bf16.gmra.mrb[0].mxu0 %v3203
        %v3242 = vpop.f32.mrb[0].mxu0
        %v3243 = vadd.f32 %v3188, %v3242
        %v3244 = vpop.f32.mrb[0].mxu0
        %v3245 = vpop.f32.mrb[0].mxu0
        %v3246 = vadd.f32 %v3188, %v3245
        %v3247 = vpop.f32.mrb[0].mxu0
        %3248 = vmatprep.mubr.bf16.mxu0 0
        %3249 = vmatmul.mubr.bf16.gmra.mrb[0].mxu0 %v3206
        %v3250 = vpop.f32.mrb[0].mxu0
        %v3251 = vadd.f32 %v3188, %v3250
        %v3252 = vpop.f32.mrb[0].mxu0
        %v3253 = vpop.f32.mrb[0].mxu0
        %v3254 = vpop.f32.mrb[0].mxu0
        %3255 = vdwg.mxu0
        %v3256 = vmax.f32 %v3243, 0.0
        %v3257 = vmax.f32 %v3246, 0.0
        %v3258 = vmax.f32 %v3251, 0.0
        %v3259 = vpack.c.bf16 %v3257, %v3256
        %v3260 = vpack.c.bf16 %v3258, %v3258
        %v3261 = vld [vmem:[%s858] sm:$0xf]
        %v3262 = vld [vmem:[%s858 + $0x4] sm:$0xf]
        %v3263 = vld [vmem:[%s858 + $0x8] sm:$0xf]
        %v3264 = vld [vmem:[%s858 + $0xc] sm:$0xf]
        %v3265 = vld [vmem:[%s976] sm:$0x1]
        %v3267 = vlaneseq
        %v3268 = vshrl.u32 %v3267, 7
        %v3269 = vsub.s32 0, %v3268
        %v3270 = vrot.slane %v3265, %v3269
        %v3276 = vunpack.c.l.b16 %v3261
        %v3277 = vunpack.c.l.b16 %v3262
        %v3278 = vunpack.c.l.b16 %v3263
        %v3279 = vunpack.c.l.b16 %v3264
        %v3280 = vpack.c.b16 %v3277, %v3276
        %v3281 = vpack.c.b16 %v3279, %v3278
        %v3285 = vsel %vm1122, %v3259, 0
        %v3288 = vsel %vm1122, %v3260, 0
        %3290 = vmatprep.subr.bf16.mxu0 0
        %3291 = vmatpush1.bf16.msra.mxu0 %v3280
        %3292 = vmatprep.subr.bf16.mxu0 0
        %3293 = vmatpush1.bf16.msra.mxu0 %v3281
        %3294 = vmatprep.subr.bf16.mxu0 0
        %3295 = vmatpush1.bf16.msra.mxu0 0
        %3296 = vmatprep.subr.bf16.mxu0 0
        %3297 = vmatpush1.bf16.msra.mxu0 0
        %3298 = vmatprep.subr.bf16.mxu0 0
        %3299 = vmatpush1.bf16.msra.mxu0 0
        %3300 = vmatprep.subr.bf16.mxu0 0
        %3301 = vmatpush1.bf16.msra.mxu0 0
        %3302 = vmatprep.subr.bf16.mxu0 0
        %3303 = vmatpush1.bf16.msra.mxu0 0
        %3304 = vmatprep.subr.bf16.mxu0 0
        %3305 = vmatpush1.bf16.msra.mxu0 0
        %3306 = vmatprep.subr.bf16.mxu0 0
        %3307 = vmatpush1.bf16.msra.mxu0 0
        %3308 = vmatprep.subr.bf16.mxu0 0
        %3309 = vmatpush1.bf16.msra.mxu0 0
        %3310 = vmatprep.subr.bf16.mxu0 0
        %3311 = vmatpush1.bf16.msra.mxu0 0
        %3312 = vmatprep.subr.bf16.mxu0 0
        %3313 = vmatpush1.bf16.msra.mxu0 0
        %3314 = vmatprep.subr.bf16.mxu0 0
        %3315 = vmatpush1.bf16.msra.mxu0 0
        %3316 = vmatprep.subr.bf16.mxu0 0
        %3317 = vmatpush1.bf16.msra.mxu0 0
        %3318 = vmatprep.subr.bf16.mxu0 0
        %3319 = vmatpush1.bf16.msra.mxu0 0
        %3320 = vmatprep.subr.bf16.mxu0 0
        %3321 = vmatpush1.bf16.msra.mxu0 0
        %3322 = vmatprep.mubr.bf16.mxu0 0
        %3323 = vmatmul.mubr.bf16.gmra.mrb[0].mxu0 %v3285
        %v3324 = vpop.f32.mrb[0].mxu0
        %v3325 = vadd.f32 %v3270, %v3324
        %v3326 = vpop.f32.mrb[0].mxu0
        %v3327 = vpop.f32.mrb[0].mxu0
        %v3328 = vadd.f32 %v3270, %v3327
        %v3329 = vpop.f32.mrb[0].mxu0
        %3330 = vmatprep.mubr.bf16.mxu0 0
        %3331 = vmatmul.mubr.bf16.gmra.mrb[0].mxu0 %v3288
        %v3332 = vpop.f32.mrb[0].mxu0
        %v3333 = vadd.f32 %v3270, %v3332
        %v3334 = vpop.f32.mrb[0].mxu0
        %v3335 = vpop.f32.mrb[0].mxu0
        %v3336 = vpop.f32.mrb[0].mxu0
        %3337 = vdwg.mxu0
        %v3338 = vadd.f32 %v3115, %v3325
        %v3339 = vadd.f32 %v3116, %v3328
        %v3340 = vadd.f32 %v3117, %v3333
        %3341 = vst.msk [vmem:[#allocation2] sm:$0xff] %vm1122, %v3338
        %3342 = vst.msk [vmem:[#allocation2 + $0x8] sm:$0xff] %vm1122, %v3339
        %3343 = vst.msk [vmem:[#allocation2 + $0x10] sm:$0xff] %vm1122, %v3340
        %p3344 = scmp.eq.s32.totalorder %s42, 5
        // Predicated region
        $region141: #{tpu_custom_call.1} parent=95 // pred_check
          %p3345 = pneg %p3344
        $region142: #{tpu_custom_call.1} parent=95 // pred_check_branch
          %3347 = sbr.rel (%p3345) target = $region144
        $region143: #{tpu_custom_call.1} parent=95 // pred_region
          %v3348 = vld [vmem:[%s16] sm:$0x1]
          %v3349 = vld [vmem:[%s17] sm:$0x1]
          %vm3350 = vcmask 253952
          %v3351 = vsel %vm3350, %v3338, 0.0
          %3352 = vadd.xlane.f32.xlu0 %v3351
          %v3353 = vpop.xlane.xlu0 %3352
          %v3354 = vmul.f32 %v3353, %v1132
          %v3355 = vsub.f32 %v3338, %v3354
          %v3356 = vmul.f32 %v3355, %v3355
          %v3357 = vsel %vm3350, %v3356, 0.0
          %3358 = vadd.xlane.f32.xlu0 %v3357
          %v3359 = vpop.xlane.xlu0 %3358
          %v3360 = vmul.f32 %v3359, %v1132
          %v3361 = vadd.f32 %v3360, 1e-05
          %v3362 = vrsqrt.pop %v3361
          %v3363 = vmul.f32 %v3355, %v3362
          %v3364 = vmul.f32 %v3363, %v3348
          %v3365 = vadd.f32 %v3364, %v3349
          %v3366 = vpack.c.bf16 %v3365, %v3365
          %v3367 = vld [vmem:[%s18] sm:$0xf]
          %v3368 = vld [vmem:[%s18 + $0x4] sm:$0xf]
          %v3369 = vld [vmem:[%s18 + $0x8] sm:$0xf]
          %v3370 = vld [vmem:[%s18 + $0xc] sm:$0xf]
          %v3375 = vunpack.c.l.b16 %v3367
          %v3376 = vunpack.c.l.b16 %v3368
          %v3377 = vunpack.c.l.b16 %v3369
          %v3378 = vunpack.c.l.b16 %v3370
          %v3379 = vpack.c.b16 %v3376, %v3375
          %v3380 = vpack.c.b16 %v3378, %v3377
          %v3384 = vsel %vm1122, %v3366, 0
          %3386 = vmatprep.subr.bf16.mxu0 0
          %3387 = vmatpush1.bf16.msra.mxu0 %v3379
          %3388 = vmatprep.subr.bf16.mxu0 0
          %3389 = vmatpush1.bf16.msra.mxu0 %v3380
          %3390 = vmatprep.subr.bf16.mxu0 0
          %3391 = vmatpush1.bf16.msra.mxu0 0
          %3392 = vmatprep.subr.bf16.mxu0 0
          %3393 = vmatpush1.bf16.msra.mxu0 0
          %3394 = vmatprep.subr.bf16.mxu0 0
          %3395 = vmatpush1.bf16.msra.mxu0 0
          %3396 = vmatprep.subr.bf16.mxu0 0
          %3397 = vmatpush1.bf16.msra.mxu0 0
          %3398 = vmatprep.subr.bf16.mxu0 0
          %3399 = vmatpush1.bf16.msra.mxu0 0
          %3400 = vmatprep.subr.bf16.mxu0 0
          %3401 = vmatpush1.bf16.msra.mxu0 0
          %3402 = vmatprep.subr.bf16.mxu0 0
          %3403 = vmatpush1.bf16.msra.mxu0 0
          %3404 = vmatprep.subr.bf16.mxu0 0
          %3405 = vmatpush1.bf16.msra.mxu0 0
          %3406 = vmatprep.subr.bf16.mxu0 0
          %3407 = vmatpush1.bf16.msra.mxu0 0
          %3408 = vmatprep.subr.bf16.mxu0 0
          %3409 = vmatpush1.bf16.msra.mxu0 0
          %3410 = vmatprep.subr.bf16.mxu0 0
          %3411 = vmatpush1.bf16.msra.mxu0 0
          %3412 = vmatprep.subr.bf16.mxu0 0
          %3413 = vmatpush1.bf16.msra.mxu0 0
          %3414 = vmatprep.subr.bf16.mxu0 0
          %3415 = vmatpush1.bf16.msra.mxu0 0
          %3416 = vmatprep.subr.bf16.mxu0 0
          %3417 = vmatpush1.bf16.msra.mxu0 0
          %3418 = vmatprep.mubr.bf16.mxu0 0
          %3419 = vmatmul.mubr.bf16.gmra.mrb[0].mxu0 %v3384
          %v3420 = vpop.f32.mrb[0].mxu0
          %v3421 = vadd.f32 0.0, %v3420
          %v3422 = vpop.f32.mrb[0].mxu0
          %v3423 = vpop.f32.mrb[0].mxu0
          %v3424 = vpop.f32.mrb[0].mxu0
          %3425 = vdwg.mxu0
          %vm3426 = vcmask 1040384
          %v3427 = vsel %vm3426, %v3421, 0.0
          %3428 = vst [vmem:[%s961] sm:$0xff] %v3427
        $region144: #{tpu_custom_call.1} parent=95 // pred_fallthru
          _
        %s3429 = sand.u32 %s521, 1
        %s3430 = scalar_lea.sflag [#allocation5], %s3429
        %s3431 = sand.u32 %s521, 1
        %s3432 = smul.addr %s3431, 8
        %s3433 = scalar_lea.vmem [#allocation16], %s3432
        // Predicated region
        $region145: #{tpu_custom_call.1} parent=95 // pred_check
          %p3434 = pneg %p531
        $region146: #{tpu_custom_call.1} parent=95 // pred_check_branch
          %3436 = sbr.rel (%p3434) target = $region148
        $region147: #{tpu_custom_call.1} parent=95 // pred_region
          %s3438 = ssub.s32 128, 128
          %3439 = vsyncadd %s3430, %s3438
          %s3440 = smul.addr %s41, 128
          %s3441 = scalar_lea.hbm %s19, %s3440
          %s3443 = sshll.u32 %s3433, 4
          %s3444 = int_to_ptr.vmem [resolvable:$true] %s3443
          %3446 = dma.vmem_to_hbm [thread:$0]  %s3444, 128, %s3441, %s3430
        $region148: #{tpu_custom_call.1} parent=95 // pred_fallthru
          _
      $region96: #{tpu_custom_call.1} parent=5 // pred_fallthru
        _
      %p3447 = scmp.le.s32.totalorder 2, %s32
      // Predicated region
      $region149: #{tpu_custom_call.1} parent=5 // pred_check
        %p3448 = pneg %p3447
      $region150: #{tpu_custom_call.1} parent=5 // pred_check_branch
        %3450 = sbr.rel (%p3448) target = $region152
      $region151: #{tpu_custom_call.1} parent=5 // pred_region
        %s3451 = ssub.s32 %s32, 2
        // Predicated region
        $region153: #{tpu_custom_call.1} parent=151 // pred_check
          %p3452 = pneg %p537
        $region154: #{tpu_custom_call.1} parent=151 // pred_check_branch
          %3454 = sbr.rel (%p3452) target = $region156
        $region155: #{tpu_custom_call.1} parent=151 // pred_region
          %s3455 = sand.u32 %s522, 1
          %s3456 = scalar_lea.sflag [#allocation5], %s3455
          %s3457 = sand.u32 %s522, 1
          %s3458 = smul.addr %s3457, 8
          %s3459 = scalar_lea.vmem [#allocation16], %s3458
          %3460 = dma.done %s3456, 128
        $region156: #{tpu_custom_call.1} parent=151 // pred_fallthru
          _
      $region152: #{tpu_custom_call.1} parent=5 // pred_fallthru
        _
    $region6: #{tpu_custom_call.1} parent=1 // loop_footer
      %s36 = sadd.s32 1, %s32
    $region7: #{tpu_custom_call.1} parent=1 // loop_footer_branch
      %31 = sbr.rel target = $region3
    $region8: #{tpu_custom_call.1} parent=1 // loop_exit
      _
    %3461 = vsyncpa [#allocation4], 1
    %s3462 = scalar_lea.sflag [#allocation4], 1
    %3463 = vsyncpa %s3462, 1
    %3464 = vsyncpa [#allocation7], 1
    %3465 = vsyncpa [#allocation5], 1
    %s3466 = scalar_lea.sflag [#allocation5], 1
    %3467 = vsyncpa %s3466, 1

</llo_original>
